<compile_context>
chip_gen: v7x
topology: tpu7x:2x2x1
jax: 0.10.0
libtpu: 0.0.40
codegen_flags: <defaults>
</compile_context>

<pallas_src>
import math
import functools

import jax
import jax.numpy as jnp
from jax.experimental import pallas as pl
from jax.experimental.pallas import tpu as pltpu

MXU_DTYPE = jnp.bfloat16      # MXU operand dtype (fp32 accumulation kept)
ACT_DTYPE = jnp.bfloat16      # inter-kernel activation storage dtype
LN_EPS = 1e-5
# Scoped VMEM limit: safe on every generation (<= physical on v7x, raises the
# v5e default of 16 MiB).  Re-sweep per generation for large models.
VMEM_LIMIT_BYTES = 32 * 1024 * 1024


def _cparams(*sems):
    return pltpu.CompilerParams(dimension_semantics=tuple(sems),
                                vmem_limit_bytes=VMEM_LIMIT_BYTES)


# ----------------------------- tiling helper --------------------------------

def _pick_tile(dim, target, align):
    """Largest `align`-aligned divisor of `dim` that is <= target (or dim)."""
    if dim <= target:
        return dim
    t = (target // align) * align
    while t >= align:
        if dim % t == 0:
            return t
        t -= align
    # TODO(synk): for ragged dims, pad up to a tile multiple in the wrapper
    # instead of falling back to a whole-dim block.
    return dim


# ------------------------ fused linear Pallas kernel ------------------------

def _fused_linear_kernel(*refs, has_glu, has_pre, has_res, has_post,
                         res_scale, act, eps):
    it = iter(refs)
    x_ref = next(it)
    w_ref = next(it)
    b_ref = next(it)
    gw_ref = next(it) if has_glu else None
    gb_ref = next(it) if has_glu else None
    pg_ref = next(it) if has_pre else None
    pb_ref = next(it) if has_pre else None
    r_ref = next(it) if has_res else None
    qg_ref = next(it) if has_post else None
    qb_ref = next(it) if has_post else None
    o_ref = next(it)

    if has_pre:                                   # pre-LayerNorm prologue
        x = x_ref[...].astype(jnp.float32)
        mu = jnp.mean(x, axis=-1, keepdims=True)
        xc = x - mu
        var = jnp.mean(xc * xc, axis=-1, keepdims=True)
        x = xc * jax.lax.rsqrt(var + eps)
        x = x * pg_ref[...].astype(jnp.float32) + pb_ref[...].astype(jnp.float32)
        xm = x.astype(MXU_DTYPE)
    else:
        xm = x_ref[...].astype(MXU_DTYPE)

    z = jnp.dot(xm, w_ref[...].astype(MXU_DTYPE),
                preferred_element_type=jnp.float32)
    z = z + b_ref[...].astype(jnp.float32)

    if has_glu:                                   # GLU: value * sigmoid(gate)
        g = jnp.dot(xm, gw_ref[...].astype(MXU_DTYPE),
                    preferred_element_type=jnp.float32)
        g = g + gb_ref[...].astype(jnp.float32)
        z = z * jax.nn.sigmoid(g)

    if res_scale != 1.0:
        z = z * res_scale
    if has_res:                                   # residual epilogue
        z = z + r_ref[...].astype(jnp.float32)

    if has_post:                                  # post-LayerNorm epilogue
        mu = jnp.mean(z, axis=-1, keepdims=True)
        zc = z - mu
        var = jnp.mean(zc * zc, axis=-1, keepdims=True)
        z = zc * jax.lax.rsqrt(var + eps)
        z = z * qg_ref[...].astype(jnp.float32) + qb_ref[...].astype(jnp.float32)

    if act == "relu":
        z = jnp.maximum(z, 0.0)
    elif act == "swish":
        z = z * jax.nn.sigmoid(z)

    o_ref[...] = z.astype(o_ref.dtype)


def fused_linear(x2d, w, b, *, glu=None, pre_ln=None, residual=None,
                 res_scale=1.0, post_ln=None, act="none", out_dtype=None,
                 tm_target=512, tn_target=512):
    """out = act(post_LN(residual + res_scale * GLU(pre_LN(x) @ w + b)))."""
    M, K = x2d.shape
    N = w.shape[1]
    out_dtype = ACT_DTYPE if out_dtype is None else out_dtype
    tm = _pick_tile(M, tm_target, 8)
    # Both LayerNorms reduce over the full feature axis, and full-N blocks also
    # avoid recomputing the pre-LN prologue once per output-column tile.
    if pre_ln is not None or post_ln is not None:
        tn = N
    else:
        tn = _pick_tile(N, tn_target, 128)
    grid = (M // tm, N // tn)

    args = [x2d, w, b.reshape(1, N)]
    in_specs = [
        pl.BlockSpec((tm, K), lambda i, j: (i, 0)),
        pl.BlockSpec((K, tn), lambda i, j: (0, j)),
        pl.BlockSpec((1, tn), lambda i, j: (0, j)),
    ]
    has_glu = glu is not None
    if has_glu:
        gw, gb = glu
        args += [gw, gb.reshape(1, N)]
        in_specs += [pl.BlockSpec((K, tn), lambda i, j: (0, j)),
                     pl.BlockSpec((1, tn), lambda i, j: (0, j))]
    has_pre = pre_ln is not None
    if has_pre:
        pg, pb = pre_ln
        args += [pg.reshape(1, K), pb.reshape(1, K)]
        in_specs += [pl.BlockSpec((1, K), lambda i, j: (0, 0)),
                     pl.BlockSpec((1, K), lambda i, j: (0, 0))]
    has_res = residual is not None
    if has_res:
        args += [residual]
        in_specs += [pl.BlockSpec((tm, tn), lambda i, j: (i, j))]
    has_post = post_ln is not None
    if has_post:
        qg, qb = post_ln
        args += [qg.reshape(1, N), qb.reshape(1, N)]
        in_specs += [pl.BlockSpec((1, tn), lambda i, j: (0, j)),
                     pl.BlockSpec((1, tn), lambda i, j: (0, j))]

    kernel = functools.partial(
        _fused_linear_kernel, has_glu=has_glu, has_pre=has_pre,
        has_res=has_res, has_post=has_post, res_scale=res_scale,
        act=act, eps=LN_EPS)

    return pl.pallas_call(
        kernel,
        out_shape=jax.ShapeDtypeStruct((M, N), out_dtype),
        grid=grid,
        in_specs=in_specs,
        out_specs=pl.BlockSpec((tm, tn), lambda i, j: (i, j)),
        compiler_params=_cparams("parallel", "parallel"),
    )(*args)


# ------------------------------ attention -----------------------------------

def _attn_kernel(qkv_ref, o_ref, *, heads, scale):
    # One batch element per grid step; QKV read directly from the fused
    # projection output (no XLA-side head split/merge transposes).
    T = o_ref.shape[1]
    adim = o_ref.shape[2]
    dh = adim // heads
    qkv = qkv_ref[0]                                        # (T, 3*adim)
    outs = []
    for h in range(heads):                                  # static head loop
        qh = (qkv[:, h * dh:(h + 1) * dh].astype(jnp.float32) * scale)
        kh = qkv[:, adim + h * dh: adim + (h + 1) * dh]
        vh = qkv[:, 2 * adim + h * dh: 2 * adim + (h + 1) * dh]
        s = jnp.dot(qh.astype(MXU_DTYPE), kh.astype(MXU_DTYPE).T,
                    preferred_element_type=jnp.float32)     # (T, T)
        s = s - jnp.max(s, axis=-1, keepdims=True)
        p = jnp.exp(s)
        p = p * pl.reciprocal(jnp.sum(p, axis=-1, keepdims=True), approx=True)
        oh = jnp.dot(p.astype(MXU_DTYPE), vh.astype(MXU_DTYPE),
                     preferred_element_type=jnp.float32)    # (T, dh)
        outs.append(oh)
    o_ref[0] = jnp.concatenate(outs, axis=-1).astype(o_ref.dtype)


def attention(qkv, heads):
    """Unmasked MHSA directly on the fused QKV activation (B, T, 3*adim)."""
    # TODO(synk): for long T, block the KV axis (flash-style online softmax)
    # and add a (B, q_tiles) grid so v7x's 64 MiB VMEM / 2 TCs are respected.
    B, T, three_adim = qkv.shape
    adim = three_adim // 3
    dh = adim // heads
    scale = 1.0 / math.sqrt(dh)
    return pl.pallas_call(
        functools.partial(_attn_kernel, heads=heads, scale=scale),
        out_shape=jax.ShapeDtypeStruct((B, T, adim), qkv.dtype),
        grid=(B,),
        in_specs=[pl.BlockSpec((1, T, three_adim), lambda b: (b, 0, 0))],
        out_specs=pl.BlockSpec((1, T, adim), lambda b: (b, 0, 0)),
        compiler_params=_cparams("parallel"),
    )(qkv)


# --------------------------- depthwise time conv ----------------------------

def _dwconv_kernel(x_ref, w_ref, b_ref, o_ref, xp_ref, *, ksize, pad, act):
    T = o_ref.shape[1]
    D = o_ref.shape[2]
    Tp = T + 2 * pad
    # Build the zero-haloed window in a VMEM scratch (no XLA-side pad, no HBM
    # round trip); per-tap reads are ref-level slices (vld path, not per-tap
    # value relayouts).
    xp_ref[...] = jnp.zeros((Tp, D), jnp.float32)
    xp_ref[pl.ds(pad, T), :] = x_ref[0].astype(jnp.float32)
    w = w_ref[...].astype(jnp.float32)                      # (ksize, D)
    acc = jnp.zeros((T, D), jnp.float32) + b_ref[...].astype(jnp.float32)
    for kk in range(ksize):                                 # static taps
        acc = acc + xp_ref[pl.ds(kk, T), :] * w[kk:kk + 1, :]
    if act == "swish":
        acc = acc * jax.nn.sigmoid(acc)
    o_ref[0] = acc.astype(o_ref.dtype)


def depthwise_conv_time(x, w, b, act="none"):
    """'same' depthwise conv over time.  x: (B, T, D), w: (ksize, D), b: (D,)."""
    # TODO(synk): for long T, tile the time axis (grid=(B, T//tt)) with a halo.
    B, T, D = x.shape
    ksize = w.shape[0]
    pad = (ksize - 1) // 2
    return pl.pallas_call(
        functools.partial(_dwconv_kernel, ksize=ksize, pad=pad, act=act),
        out_shape=jax.ShapeDtypeStruct((B, T, D), x.dtype),
        grid=(B,),
        in_specs=[
            pl.BlockSpec((1, T, D), lambda i: (i, 0, 0)),
            pl.BlockSpec((ksize, D), lambda i: (0, 0)),
            pl.BlockSpec((1, D), lambda i: (0, 0)),
        ],
        out_specs=pl.BlockSpec((1, T, D), lambda i: (i, 0, 0)),
        scratch_shapes=[pltpu.VMEM((T + 2 * pad, D), jnp.float32)],
        compiler_params=_cparams("parallel"),
    )(x, w, b.reshape(1, D))


# ----------------------- final Conv2d + LayerNorm + ReLU --------------------

def _out_conv_kernel(x_ref, w0_ref, w1_ref, b_ref, g_ref, be_ref, o_ref,
                     xp_ref, *, eps):
    To = o_ref.shape[1]                                     # T + 1
    T = x_ref.shape[1]
    A = x_ref.shape[2]
    # Zero-haloed (T+2, A) window in VMEM scratch -> two shifted matmuls.
    xp_ref[...] = jnp.zeros((T + 2, A), jnp.float32)
    xp_ref[pl.ds(1, T), :] = x_ref[0].astype(jnp.float32)
    x0 = xp_ref[pl.ds(0, To), :].astype(MXU_DTYPE)          # frame t-1
    x1 = xp_ref[pl.ds(1, To), :].astype(MXU_DTYPE)          # frame t
    z = jnp.dot(x0, w0_ref[...].astype(MXU_DTYPE),
                preferred_element_type=jnp.float32)
    z = z + jnp.dot(x1, w1_ref[...].astype(MXU_DTYPE),
                    preferred_element_type=jnp.float32)
    z = z + b_ref[...].astype(jnp.float32)
    # LayerNorm over adim*n_class, then ReLU.
    mu = jnp.mean(z, axis=-1, keepdims=True)
    zc = z - mu
    var = jnp.mean(zc * zc, axis=-1, keepdims=True)
    z = zc * jax.lax.rsqrt(var + eps)
    z = z * g_ref[...].astype(jnp.float32) + be_ref[...].astype(jnp.float32)
    z = jnp.maximum(z, 0.0)
    o_ref[0] = z.astype(o_ref.dtype)


def output_conv_ln_relu(h, w0, w1, b, gamma, beta):
    """Kernel-2 time conv (two shifted matmuls) + LayerNorm + ReLU fused."""
    B, T, A = h.shape
    N = w0.shape[1]
    To = T + 1
    return pl.pallas_call(
        functools.partial(_out_conv_kernel, eps=LN_EPS),
        out_shape=jax.ShapeDtypeStruct((B, To, N), jnp.float32),
        grid=(B,),
        in_specs=[
            pl.BlockSpec((1, T, A), lambda i: (i, 0, 0)),
            pl.BlockSpec((A, N), lambda i: (0, 0)),
            pl.BlockSpec((A, N), lambda i: (0, 0)),
            pl.BlockSpec((1, N), lambda i: (0, 0)),
            pl.BlockSpec((1, N), lambda i: (0, 0)),
            pl.BlockSpec((1, N), lambda i: (0, 0)),
        ],
        out_specs=pl.BlockSpec((1, To, N), lambda i: (i, 0, 0)),
        scratch_shapes=[pltpu.VMEM((T + 2, A), jnp.float32)],
        compiler_params=_cparams("parallel"),
    )(h, w0, w1, b.reshape(1, N), gamma.reshape(1, N), beta.reshape(1, N))


# ----------------------------- model (glue) ---------------------------------

def sinusoid_pe(T, d):
    pos = jnp.arange(T, dtype=jnp.float32)[:, None]
    div = jnp.exp(jnp.arange(0, d, 2, dtype=jnp.float32) * -(math.log(10000.0) / d))
    pe = jnp.zeros((T, d), jnp.float32)
    pe = pe.at[:, 0::2].set(jnp.sin(pos * div))
    pe = pe.at[:, 1::2].set(jnp.cos(pos * div))
    return pe


def conformer_block(blk, h2, B, T, adim, aheads):
    M = B * T

    # macaron feed-forward 1: [pre-LN + W1 + swish] -> [W2 + 0.5*residual]
    y = fused_linear(h2, blk["ff1_w1"], blk["ff1_b1"],
                     pre_ln=(blk["ff1_ln_g"], blk["ff1_ln_b"]), act="swish")
    h2 = fused_linear(y, blk["ff1_w2"], blk["ff1_b2"],
                      residual=h2, res_scale=0.5)

    # MHSA: [pre-LN + fused QKV] -> attention (reads QKV directly) -> [Wo + residual]
    qkv = fused_linear(h2, blk["wqkv"], blk["bqkv"],
                       pre_ln=(blk["att_ln_g"], blk["att_ln_b"]))
    o = attention(qkv.reshape(B, T, 3 * adim), aheads)       # (B, T, adim)
    h2 = fused_linear(o.reshape(M, adim), blk["wo"], blk["bo"], residual=h2)

    # conv module: [pre-LN + pointwise GLU] -> depthwise(+BN fold)+swish
    #              -> [pointwise + residual]
    y = fused_linear(h2, blk["pw1_wa"], blk["pw1_ba"],
                     glu=(blk["pw1_wb"], blk["pw1_bb"]),
                     pre_ln=(blk["conv_ln_g"], blk["conv_ln_b"]))
    y = depthwise_conv_time(y.reshape(B, T, adim), blk["dw_w"], blk["dw_b"],
                            act="swish")
    h2 = fused_linear(y.reshape(M, adim), blk["pw2_w"], blk["pw2_b"],
                      residual=h2)

    # macaron feed-forward 2 with the block-final LayerNorm fused in
    y = fused_linear(h2, blk["ff2_w1"], blk["ff2_b1"],
                     pre_ln=(blk["ff2_ln_g"], blk["ff2_ln_b"]), act="swish")
    h2 = fused_linear(y, blk["ff2_w2"], blk["ff2_b2"],
                      residual=h2, res_scale=0.5,
                      post_ln=(blk["out_ln_g"], blk["out_ln_b"]))
    return h2


def conformer_separator_forward(params, x, adim, aheads, n_class, mask=None):
    B, T, idim = x.shape

    # input layer: [Linear + LayerNorm + ReLU] fused, then PositionalEncoding.
    h2 = fused_linear(x.reshape(B * T, idim), params["w_in"], params["b_in"],
                      post_ln=(params["ln_in_g"], params["ln_in_b"]), act="relu")
    h = h2.reshape(B, T, adim)
    pe = sinusoid_pe(T, adim)
    h = (h.astype(jnp.float32) * math.sqrt(adim) + pe[None]).astype(ACT_DTYPE)
    h2 = h.reshape(B * T, adim)

    for blk in params["blocks"]:
        h2 = conformer_block(blk, h2, B, T, adim, aheads)

    # final Conv2d(adim, adim*n_class, kernel=2, stride=1, padding=1):
    # realised as a kernel-2 conv over time (T+1 output frames), fused with the
    # following LayerNorm + ReLU.
    y = output_conv_ln_relu(h2.reshape(B, T, adim), params["conv_w0"],
                            params["conv_w1"], params["conv_b"],
                            params["ln_out_g"], params["ln_out_b"])
    To = T + 1
    y = y.reshape(B, To, adim, n_class).transpose(0, 3, 1, 2)  # (B, n_class, T+1, adim)
    return y, mask


def init_params(key, idim, adim, eunits, aheads, ksize, n_class, elayers):
    it = iter(jax.random.split(key, 1024))

    def nrm(shape, dtype=jnp.float32, scale=0.1):
        return (scale * jax.random.normal(next(it), shape, jnp.float32)).astype(dtype)

    W = MXU_DTYPE            # matmul weights stored in bf16 (MXU-native)
    ones = lambda n: jnp.ones((n,), jnp.float32)
    zeros = lambda n: jnp.zeros((n,), jnp.float32)
    # Eval-mode BatchNorm1d folded into the depthwise conv weights (assumes
    # default running stats mean=0, var=1; trained stats would need the actual
    # running_mean/var folded in instead).
    bn_scale = 1.0 / math.sqrt(1.0 + 1e-5)

    p = {
        "w_in": nrm((idim, adim), W), "b_in": nrm((adim,)),
        "ln_in_g": ones(adim), "ln_in_b": zeros(adim),
        # the two time-taps of the 2x1 conv kernel, stored pre-split.
        "conv_w0": nrm((adim, adim * n_class), W),
        "conv_w1": nrm((adim, adim * n_class), W),
        "conv_b": nrm((adim * n_class,)),
        "ln_out_g": ones(adim * n_class), "ln_out_b": zeros(adim * n_class),
    }
    blocks = []
    for _ in range(elayers):
        blocks.append({
            "ff1_ln_g": ones(adim), "ff1_ln_b": zeros(adim),
            "ff1_w1": nrm((adim, eunits), W), "ff1_b1": nrm((eunits,)),
            "ff1_w2": nrm((eunits, adim), W), "ff1_b2": nrm((adim,)),
            "att_ln_g": ones(adim), "att_ln_b": zeros(adim),
            # fused Q/K/V projection weight: columns [Wq | Wk | Wv]
            "wqkv": nrm((adim, 3 * adim), W), "bqkv": nrm((3 * adim,)),
            "wo": nrm((adim, adim), W), "bo": nrm((adim,)),
            "conv_ln_g": ones(adim), "conv_ln_b": zeros(adim),
            # pointwise-1 stored pre-split into GLU value/gate halves
            "pw1_wa": nrm((adim, adim), W), "pw1_ba": nrm((adim,)),
            "pw1_wb": nrm((adim, adim), W), "pw1_bb": nrm((adim,)),
            "dw_w": bn_scale * nrm((ksize, adim)), "dw_b": bn_scale * nrm((adim,)),
            "pw2_w": nrm((adim, adim), W), "pw2_b": nrm((adim,)),
            "ff2_ln_g": ones(adim), "ff2_ln_b": zeros(adim),
            "ff2_w1": nrm((adim, eunits), W), "ff2_b1": nrm((eunits,)),
            "ff2_w2": nrm((eunits, adim), W), "ff2_b2": nrm((adim,)),
            "out_ln_g": ones(adim), "out_ln_b": zeros(adim),
        })
    p["blocks"] = blocks
    return p


if __name__ == "__main__":
    idim, adim, eunits, aheads = 16, 16, 32, 4
    ksize, n_class, elayers = 7, 3, 2
    B, T = 2, 8

    key = jax.random.PRNGKey(0)
    pkey, xkey = jax.random.split(key)
    params = init_params(pkey, idim, adim, eunits, aheads, ksize, n_class, elayers)
    x = jax.random.normal(xkey, (B, T, idim), jnp.float32)

    fwd = jax.jit(functools.partial(conformer_separator_forward,
                                    adim=adim, aheads=aheads, n_class=n_class))
    out, mask = fwd(params, x)
    jax.block_until_ready(out)
    assert out.shape == (B, n_class, T + 1, adim), out.shape
    assert out.dtype == jnp.float32
    print("KERNEL_OK")
</pallas_src>

<mosaic_0001>
module attributes {stable_mosaic.version = 11 : i64} {
  func.func @_fused_linear_kernel(%arg0: i32, %arg1: i32, %arg2: memref<16x16xf32, #tpu.memory_space<vmem>>, %arg3: memref<16x16xbf16, #tpu.memory_space<vmem>>, %arg4: memref<1x16xf32, #tpu.memory_space<vmem>>, %arg5: memref<1x16xf32, #tpu.memory_space<vmem>>, %arg6: memref<1x16xf32, #tpu.memory_space<vmem>>, %arg7: memref<16x16xbf16, #tpu.memory_space<vmem>>) attributes {dimension_semantics = [#tpu.dimension_semantics<parallel>, #tpu.dimension_semantics<parallel>], iteration_bounds = array<i64: 1, 1>, scalar_prefetch = 0 : i64, scratch_operands = 0 : i64, tpu.core_type = #tpu.core_type<tc>, window_params = [{transform_indices = @transform_0, window_bounds = array<i64: 16, 16>}, {transform_indices = @transform_1, window_bounds = array<i64: 16, 16>}, {transform_indices = @transform_2, window_bounds = array<i64: 1, 16>}, {transform_indices = @transform_3, window_bounds = array<i64: 1, 16>}, {transform_indices = @transform_4, window_bounds = array<i64: 1, 16>}, {transform_indices = @transform_5, window_bounds = array<i64: 16, 16>}]} {
    %c0 = arith.constant 0 : index
    %c0_0 = arith.constant 0 : index
    %0 = vector.load %arg2[%c0, %c0_0] : memref<16x16xf32, #tpu.memory_space<vmem>>, vector<16x16xf32>
    %1 = arith.truncf %0 : vector<16x16xf32> to vector<16x16xbf16>
    %c0_1 = arith.constant 0 : index
    %c0_2 = arith.constant 0 : index
    %2 = vector.load %arg3[%c0_1, %c0_2] : memref<16x16xbf16, #tpu.memory_space<vmem>>, vector<16x16xbf16>
    %cst = arith.constant dense<0.000000e+00> : vector<16x16xf32>
    %3 = tpu.matmul %1, %2, %cst {dimension_numbers = #tpu.dot_dimension_numbers<[1], [0], [0], [1], [0, 0, 1, 1], [], []>} : vector<16x16xbf16>, vector<16x16xbf16>, vector<16x16xf32> -> vector<16x16xf32>
    %c0_3 = arith.constant 0 : index
    %c0_4 = arith.constant 0 : index
    %4 = vector.load %arg4[%c0_3, %c0_4] : memref<1x16xf32, #tpu.memory_space<vmem>>, vector<1x16xf32>
    %5 = vector.broadcast %4 : vector<1x16xf32> to vector<16x16xf32>
    %6 = arith.addf %3, %5 : vector<16x16xf32>
    %cst_5 = arith.constant dense<0.000000e+00> : vector<16xf32>
    %7 = vector.multi_reduction <add>, %6, %cst_5 [1] : vector<16x16xf32> to vector<16xf32>
    %8 = vector.shape_cast %7 : vector<16xf32> to vector<16x1xf32>
    %cst_6 = arith.constant 1.600000e+01 : f32
    %9 = vector.broadcast %cst_6 : f32 to vector<16x1xf32>
    %10 = arith.divf %8, %9 : vector<16x1xf32>
    %11 = vector.broadcast %10 : vector<16x1xf32> to vector<16x16xf32>
    %12 = arith.subf %6, %11 : vector<16x16xf32>
    %13 = arith.mulf %12, %12 : vector<16x16xf32>
    %cst_7 = arith.constant dense<0.000000e+00> : vector<16xf32>
    %14 = vector.multi_reduction <add>, %13, %cst_7 [1] : vector<16x16xf32> to vector<16xf32>
    %15 = vector.shape_cast %14 : vector<16xf32> to vector<16x1xf32>
    %cst_8 = arith.constant 1.600000e+01 : f32
    %16 = vector.broadcast %cst_8 : f32 to vector<16x1xf32>
    %17 = arith.divf %15, %16 : vector<16x1xf32>
    %cst_9 = arith.constant 9.99999974E-6 : f32
    %18 = vector.broadcast %cst_9 : f32 to vector<16x1xf32>
    %19 = arith.addf %17, %18 : vector<16x1xf32>
    %20 = math.rsqrt %19 : vector<16x1xf32>
    %21 = vector.broadcast %20 : vector<16x1xf32> to vector<16x16xf32>
    %22 = arith.mulf %12, %21 : vector<16x16xf32>
    %c0_10 = arith.constant 0 : index
    %c0_11 = arith.constant 0 : index
    %23 = vector.load %arg5[%c0_10, %c0_11] : memref<1x16xf32, #tpu.memory_space<vmem>>, vector<1x16xf32>
    %24 = vector.broadcast %23 : vector<1x16xf32> to vector<16x16xf32>
    %25 = arith.mulf %22, %24 : vector<16x16xf32>
    %c0_12 = arith.constant 0 : index
    %c0_13 = arith.constant 0 : index
    %26 = vector.load %arg6[%c0_12, %c0_13] : memref<1x16xf32, #tpu.memory_space<vmem>>, vector<1x16xf32>
    %27 = vector.broadcast %26 : vector<1x16xf32> to vector<16x16xf32>
    %28 = arith.addf %25, %27 : vector<16x16xf32>
    %cst_14 = arith.constant 0.000000e+00 : f32
    %29 = vector.broadcast %cst_14 : f32 to vector<16x16xf32>
    %30 = arith.maximumf %28, %29 : vector<16x16xf32>
    %31 = arith.truncf %30 : vector<16x16xf32> to vector<16x16xbf16>
    %c0_15 = arith.constant 0 : index
    %c0_16 = arith.constant 0 : index
    %32 = vector.load %arg7[%c0_15, %c0_16] : memref<16x16xbf16, #tpu.memory_space<vmem>>, vector<16x16xbf16>
    tpu.vector_store %arg7[%c0_15, %c0_16], %31 {strides = array<i32>} : memref<16x16xbf16, #tpu.memory_space<vmem>>, vector<16x16xbf16>,
    return
  }
  func.func @transform_0(%arg0: i32, %arg1: i32) -> (i32, i32) {
    %c0_i32 = arith.constant 0 : i32
    %c0_i32_0 = arith.constant 0 : i32
    return %arg0, %c0_i32 : i32, i32
  }
  func.func @transform_1(%arg0: i32, %arg1: i32) -> (i32, i32) {
    %c0_i32 = arith.constant 0 : i32
    %c0_i32_0 = arith.constant 0 : i32
    return %c0_i32, %arg1 : i32, i32
  }
  func.func @transform_2(%arg0: i32, %arg1: i32) -> (i32, i32) {
    %c0_i32 = arith.constant 0 : i32
    %c0_i32_0 = arith.constant 0 : i32
    return %c0_i32, %arg1 : i32, i32
  }
  func.func @transform_3(%arg0: i32, %arg1: i32) -> (i32, i32) {
    %c0_i32 = arith.constant 0 : i32
    %c0_i32_0 = arith.constant 0 : i32
    return %c0_i32, %arg1 : i32, i32
  }
  func.func @transform_4(%arg0: i32, %arg1: i32) -> (i32, i32) {
    %c0_i32 = arith.constant 0 : i32
    %c0_i32_0 = arith.constant 0 : i32
    return %c0_i32, %arg1 : i32, i32
  }
  func.func @transform_5(%arg0: i32, %arg1: i32) -> (i32, i32) {
    %c0_i32 = arith.constant 0 : i32
    return %arg0, %arg1 : i32, i32
  }
}

module attributes {stable_mosaic.version = 11 : i64} {
  func.func @_fused_linear_kernel(%arg0: i32, %arg1: i32, %arg2: memref<16x16xbf16, #tpu.memory_space<vmem>>, %arg3: memref<16x32xbf16, #tpu.memory_space<vmem>>, %arg4: memref<1x32xf32, #tpu.memory_space<vmem>>, %arg5: memref<1x16xf32, #tpu.memory_space<vmem>>, %arg6: memref<1x16xf32, #tpu.memory_space<vmem>>, %arg7: memref<16x32xbf16, #tpu.memory_space<vmem>>) attributes {dimension_semantics = [#tpu.dimension_semantics<parallel>, #tpu.dimension_semantics<parallel>], iteration_bounds = array<i64: 1, 1>, scalar_prefetch = 0 : i64, scratch_operands = 0 : i64, tpu.core_type = #tpu.core_type<tc>, window_params = [{transform_indices = @transform_0, window_bounds = array<i64: 16, 16>}, {transform_indices = @transform_1, window_bounds = array<i64: 16, 32>}, {transform_indices = @transform_2, window_bounds = array<i64: 1, 32>}, {pipeline_mode = #tpu.pipeline_mode<synchronous>, transform_indices = @transform_3, window_bounds = array<i64: 1, 16>}, {pipeline_mode = #tpu.pipeline_mode<synchronous>, transform_indices = @transform_4, window_bounds = array<i64: 1, 16>}, {transform_indices = @transform_5, window_bounds = array<i64: 16, 32>}]} {
    %c0 = arith.constant 0 : index
    %c0_0 = arith.constant 0 : index
    %0 = vector.load %arg2[%c0, %c0_0] : memref<16x16xbf16, #tpu.memory_space<vmem>>, vector<16x16xbf16>
    %1 = arith.extf %0 : vector<16x16xbf16> to vector<16x16xf32>
    %cst = arith.constant dense<0.000000e+00> : vector<16xf32>
    %2 = vector.multi_reduction <add>, %1, %cst [1] : vector<16x16xf32> to vector<16xf32>
    %3 = vector.shape_cast %2 : vector<16xf32> to vector<16x1xf32>
    %cst_1 = arith.constant 1.600000e+01 : f32
    %4 = vector.broadcast %cst_1 : f32 to vector<16x1xf32>
    %5 = arith.divf %3, %4 : vector<16x1xf32>
    %6 = vector.broadcast %5 : vector<16x1xf32> to vector<16x16xf32>
    %7 = arith.subf %1, %6 : vector<16x16xf32>
    %8 = arith.mulf %7, %7 : vector<16x16xf32>
    %cst_2 = arith.constant dense<0.000000e+00> : vector<16xf32>
    %9 = vector.multi_reduction <add>, %8, %cst_2 [1] : vector<16x16xf32> to vector<16xf32>
    %10 = vector.shape_cast %9 : vector<16xf32> to vector<16x1xf32>
    %cst_3 = arith.constant 1.600000e+01 : f32
    %11 = vector.broadcast %cst_3 : f32 to vector<16x1xf32>
    %12 = arith.divf %10, %11 : vector<16x1xf32>
    %cst_4 = arith.constant 9.99999974E-6 : f32
    %13 = vector.broadcast %cst_4 : f32 to vector<16x1xf32>
    %14 = arith.addf %12, %13 : vector<16x1xf32>
    %15 = math.rsqrt %14 : vector<16x1xf32>
    %16 = vector.broadcast %15 : vector<16x1xf32> to vector<16x16xf32>
    %17 = arith.mulf %7, %16 : vector<16x16xf32>
    %c0_5 = arith.constant 0 : index
    %c0_6 = arith.constant 0 : index
    %18 = vector.load %arg5[%c0_5, %c0_6] : memref<1x16xf32, #tpu.memory_space<vmem>>, vector<1x16xf32>
    %19 = vector.broadcast %18 : vector<1x16xf32> to vector<16x16xf32>
    %20 = arith.mulf %17, %19 : vector<16x16xf32>
    %c0_7 = arith.constant 0 : index
    %c0_8 = arith.constant 0 : index
    %21 = vector.load %arg6[%c0_7, %c0_8] : memref<1x16xf32, #tpu.memory_space<vmem>>, vector<1x16xf32>
    %22 = vector.broadcast %21 : vector<1x16xf32> to vector<16x16xf32>
    %23 = arith.addf %20, %22 : vector<16x16xf32>
    %24 = arith.truncf %23 : vector<16x16xf32> to vector<16x16xbf16>
    %c0_9 = arith.constant 0 : index
    %c0_10 = arith.constant 0 : index
    %25 = vector.load %arg3[%c0_9, %c0_10] : memref<16x32xbf16, #tpu.memory_space<vmem>>, vector<16x32xbf16>
    %cst_11 = arith.constant dense<0.000000e+00> : vector<16x32xf32>
    %26 = tpu.matmul %24, %25, %cst_11 {dimension_numbers = #tpu.dot_dimension_numbers<[1], [0], [0], [1], [0, 0, 1, 1], [], []>} : vector<16x16xbf16>, vector<16x32xbf16>, vector<16x32xf32> -> vector<16x32xf32>
    %c0_12 = arith.constant 0 : index
    %c0_13 = arith.constant 0 : index
    %27 = vector.load %arg4[%c0_12, %c0_13] : memref<1x32xf32, #tpu.memory_space<vmem>>, vector<1x32xf32>
    %28 = vector.broadcast %27 : vector<1x32xf32> to vector<16x32xf32>
    %29 = arith.addf %26, %28 : vector<16x32xf32>
    %30 = arith.negf %29 : vector<16x32xf32>
    %31 = math.exp %30 : vector<16x32xf32>
    %cst_14 = arith.constant 1.000000e+00 : f32
    %32 = vector.broadcast %cst_14 : f32 to vector<16x32xf32>
    %33 = arith.addf %32, %31 : vector<16x32xf32>
    %34 = arith.divf %32, %33 : vector<16x32xf32>
    %35 = arith.mulf %29, %34 : vector<16x32xf32>
    %36 = arith.truncf %35 : vector<16x32xf32> to vector<16x32xbf16>
    %c0_15 = arith.constant 0 : index
    %c0_16 = arith.constant 0 : index
    %37 = vector.load %arg7[%c0_15, %c0_16] : memref<16x32xbf16, #tpu.memory_space<vmem>>, vector<16x32xbf16>
    tpu.vector_store %arg7[%c0_15, %c0_16], %36 {strides = array<i32>} : memref<16x32xbf16, #tpu.memory_space<vmem>>, vector<16x32xbf16>,
    return
  }
  func.func @transform_0(%arg0: i32, %arg1: i32) -> (i32, i32) {
    %c0_i32 = arith.constant 0 : i32
    %c0_i32_0 = arith.constant 0 : i32
    return %arg0, %c0_i32 : i32, i32
  }
  func.func @transform_1(%arg0: i32, %arg1: i32) -> (i32, i32) {
    %c0_i32 = arith.constant 0 : i32
    %c0_i32_0 = arith.constant 0 : i32
    return %c0_i32, %arg1 : i32, i32
  }
  func.func @transform_2(%arg0: i32, %arg1: i32) -> (i32, i32) {
    %c0_i32 = arith.constant 0 : i32
    %c0_i32_0 = arith.constant 0 : i32
    return %c0_i32, %arg1 : i32, i32
  }
  func.func @transform_3(%arg0: i32, %arg1: i32) -> (i32, i32) {
    %c0_i32 = arith.constant 0 : i32
    %c0_i32_0 = arith.constant 0 : i32
    %c0_i32_1 = arith.constant 0 : i32
    return %c0_i32, %c0_i32_0 : i32, i32
  }
  func.func @transform_4(%arg0: i32, %arg1: i32) -> (i32, i32) {
    %c0_i32 = arith.constant 0 : i32
    %c0_i32_0 = arith.constant 0 : i32
    %c0_i32_1 = arith.constant 0 : i32
    return %c0_i32, %c0_i32_0 : i32, i32
  }
  func.func @transform_5(%arg0: i32, %arg1: i32) -> (i32, i32) {
    %c0_i32 = arith.constant 0 : i32
    return %arg0, %arg1 : i32, i32
  }
}

module attributes {stable_mosaic.version = 11 : i64} {
  func.func @_fused_linear_kernel(%arg0: i32, %arg1: i32, %arg2: memref<16x32xbf16, #tpu.memory_space<vmem>>, %arg3: memref<32x16xbf16, #tpu.memory_space<vmem>>, %arg4: memref<1x16xf32, #tpu.memory_space<vmem>>, %arg5: memref<16x16xbf16, #tpu.memory_space<vmem>>, %arg6: memref<16x16xbf16, #tpu.memory_space<vmem>>) attributes {dimension_semantics = [#tpu.dimension_semantics<parallel>, #tpu.dimension_semantics<parallel>], iteration_bounds = array<i64: 1, 1>, scalar_prefetch = 0 : i64, scratch_operands = 0 : i64, tpu.core_type = #tpu.core_type<tc>, window_params = [{transform_indices = @transform_0, window_bounds = array<i64: 16, 32>}, {transform_indices = @transform_1, window_bounds = array<i64: 32, 16>}, {transform_indices = @transform_2, window_bounds = array<i64: 1, 16>}, {transform_indices = @transform_3, window_bounds = array<i64: 16, 16>}, {transform_indices = @transform_4, window_bounds = array<i64: 16, 16>}]} {
    %c0 = arith.constant 0 : index
    %c0_0 = arith.constant 0 : index
    %0 = vector.load %arg2[%c0, %c0_0] : memref<16x32xbf16, #tpu.memory_space<vmem>>, vector<16x32xbf16>
    %c0_1 = arith.constant 0 : index
    %c0_2 = arith.constant 0 : index
    %1 = vector.load %arg3[%c0_1, %c0_2] : memref<32x16xbf16, #tpu.memory_space<vmem>>, vector<32x16xbf16>
    %cst = arith.constant dense<0.000000e+00> : vector<16x16xf32>
    %2 = tpu.matmul %0, %1, %cst {dimension_numbers = #tpu.dot_dimension_numbers<[1], [0], [0], [1], [0, 0, 1, 1], [], []>} : vector<16x32xbf16>, vector<32x16xbf16>, vector<16x16xf32> -> vector<16x16xf32>
    %c0_3 = arith.constant 0 : index
    %c0_4 = arith.constant 0 : index
    %3 = vector.load %arg4[%c0_3, %c0_4] : memref<1x16xf32, #tpu.memory_space<vmem>>, vector<1x16xf32>
    %4 = vector.broadcast %3 : vector<1x16xf32> to vector<16x16xf32>
    %5 = arith.addf %2, %4 : vector<16x16xf32>
    %cst_5 = arith.constant 5.000000e-01 : f32
    %6 = vector.broadcast %cst_5 : f32 to vector<16x16xf32>
    %7 = arith.mulf %5, %6 : vector<16x16xf32>
    %c0_6 = arith.constant 0 : index
    %c0_7 = arith.constant 0 : index
    %8 = vector.load %arg5[%c0_6, %c0_7] : memref<16x16xbf16, #tpu.memory_space<vmem>>, vector<16x16xbf16>
    %9 = arith.extf %8 : vector<16x16xbf16> to vector<16x16xf32>
    %10 = arith.addf %7, %9 : vector<16x16xf32>
    %11 = arith.truncf %10 : vector<16x16xf32> to vector<16x16xbf16>
    %c0_8 = arith.constant 0 : index
    %c0_9 = arith.constant 0 : index
    %12 = vector.load %arg6[%c0_8, %c0_9] : memref<16x16xbf16, #tpu.memory_space<vmem>>, vector<16x16xbf16>
    tpu.vector_store %arg6[%c0_8, %c0_9], %11 {strides = array<i32>} : memref<16x16xbf16, #tpu.memory_space<vmem>>, vector<16x16xbf16>,
    return
  }
  func.func @transform_0(%arg0: i32, %arg1: i32) -> (i32, i32) {
    %c0_i32 = arith.constant 0 : i32
    %c0_i32_0 = arith.constant 0 : i32
    return %arg0, %c0_i32 : i32, i32
  }
  func.func @transform_1(%arg0: i32, %arg1: i32) -> (i32, i32) {
    %c0_i32 = arith.constant 0 : i32
    %c0_i32_0 = arith.constant 0 : i32
    return %c0_i32, %arg1 : i32, i32
  }
  func.func @transform_2(%arg0: i32, %arg1: i32) -> (i32, i32) {
    %c0_i32 = arith.constant 0 : i32
    %c0_i32_0 = arith.constant 0 : i32
    return %c0_i32, %arg1 : i32, i32
  }
  func.func @transform_3(%arg0: i32, %arg1: i32) -> (i32, i32) {
    %c0_i32 = arith.constant 0 : i32
    return %arg0, %arg1 : i32, i32
  }
  func.func @transform_4(%arg0: i32, %arg1: i32) -> (i32, i32) {
    %c0_i32 = arith.constant 0 : i32
    return %arg0, %arg1 : i32, i32
  }
}

module attributes {stable_mosaic.version = 11 : i64} {
  func.func @_fused_linear_kernel(%arg0: i32, %arg1: i32, %arg2: memref<16x16xbf16, #tpu.memory_space<vmem>>, %arg3: memref<16x48xbf16, #tpu.memory_space<vmem>>, %arg4: memref<1x48xf32, #tpu.memory_space<vmem>>, %arg5: memref<1x16xf32, #tpu.memory_space<vmem>>, %arg6: memref<1x16xf32, #tpu.memory_space<vmem>>, %arg7: memref<16x48xbf16, #tpu.memory_space<vmem>>) attributes {dimension_semantics = [#tpu.dimension_semantics<parallel>, #tpu.dimension_semantics<parallel>], iteration_bounds = array<i64: 1, 1>, scalar_prefetch = 0 : i64, scratch_operands = 0 : i64, tpu.core_type = #tpu.core_type<tc>, window_params = [{transform_indices = @transform_0, window_bounds = array<i64: 16, 16>}, {transform_indices = @transform_1, window_bounds = array<i64: 16, 48>}, {transform_indices = @transform_2, window_bounds = array<i64: 1, 48>}, {pipeline_mode = #tpu.pipeline_mode<synchronous>, transform_indices = @transform_3, window_bounds = array<i64: 1, 16>}, {pipeline_mode = #tpu.pipeline_mode<synchronous>, transform_indices = @transform_4, window_bounds = array<i64: 1, 16>}, {transform_indices = @transform_5, window_bounds = array<i64: 16, 48>}]} {
    %c0 = arith.constant 0 : index
    %c0_0 = arith.constant 0 : index
    %0 = vector.load %arg2[%c0, %c0_0] : memref<16x16xbf16, #tpu.memory_space<vmem>>, vector<16x16xbf16>
    %1 = arith.extf %0 : vector<16x16xbf16> to vector<16x16xf32>
    %cst = arith.constant dense<0.000000e+00> : vector<16xf32>
    %2 = vector.multi_reduction <add>, %1, %cst [1] : vector<16x16xf32> to vector<16xf32>
    %3 = vector.shape_cast %2 : vector<16xf32> to vector<16x1xf32>
    %cst_1 = arith.constant 1.600000e+01 : f32
    %4 = vector.broadcast %cst_1 : f32 to vector<16x1xf32>
    %5 = arith.divf %3, %4 : vector<16x1xf32>
    %6 = vector.broadcast %5 : vector<16x1xf32> to vector<16x16xf32>
    %7 = arith.subf %1, %6 : vector<16x16xf32>
    %8 = arith.mulf %7, %7 : vector<16x16xf32>
    %cst_2 = arith.constant dense<0.000000e+00> : vector<16xf32>
    %9 = vector.multi_reduction <add>, %8, %cst_2 [1] : vector<16x16xf32> to vector<16xf32>
    %10 = vector.shape_cast %9 : vector<16xf32> to vector<16x1xf32>
    %cst_3 = arith.constant 1.600000e+01 : f32
    %11 = vector.broadcast %cst_3 : f32 to vector<16x1xf32>
    %12 = arith.divf %10, %11 : vector<16x1xf32>
    %cst_4 = arith.constant 9.99999974E-6 : f32
    %13 = vector.broadcast %cst_4 : f32 to vector<16x1xf32>
    %14 = arith.addf %12, %13 : vector<16x1xf32>
    %15 = math.rsqrt %14 : vector<16x1xf32>
    %16 = vector.broadcast %15 : vector<16x1xf32> to vector<16x16xf32>
    %17 = arith.mulf %7, %16 : vector<16x16xf32>
    %c0_5 = arith.constant 0 : index
    %c0_6 = arith.constant 0 : index
    %18 = vector.load %arg5[%c0_5, %c0_6] : memref<1x16xf32, #tpu.memory_space<vmem>>, vector<1x16xf32>
    %19 = vector.broadcast %18 : vector<1x16xf32> to vector<16x16xf32>
    %20 = arith.mulf %17, %19 : vector<16x16xf32>
    %c0_7 = arith.constant 0 : index
    %c0_8 = arith.constant 0 : index
    %21 = vector.load %arg6[%c0_7, %c0_8] : memref<1x16xf32, #tpu.memory_space<vmem>>, vector<1x16xf32>
    %22 = vector.broadcast %21 : vector<1x16xf32> to vector<16x16xf32>
    %23 = arith.addf %20, %22 : vector<16x16xf32>
    %24 = arith.truncf %23 : vector<16x16xf32> to vector<16x16xbf16>
    %c0_9 = arith.constant 0 : index
    %c0_10 = arith.constant 0 : index
    %25 = vector.load %arg3[%c0_9, %c0_10] : memref<16x48xbf16, #tpu.memory_space<vmem>>, vector<16x48xbf16>
    %cst_11 = arith.constant dense<0.000000e+00> : vector<16x48xf32>
    %26 = tpu.matmul %24, %25, %cst_11 {dimension_numbers = #tpu.dot_dimension_numbers<[1], [0], [0], [1], [0, 0, 1, 1], [], []>} : vector<16x16xbf16>, vector<16x48xbf16>, vector<16x48xf32> -> vector<16x48xf32>
    %c0_12 = arith.constant 0 : index
    %c0_13 = arith.constant 0 : index
    %27 = vector.load %arg4[%c0_12, %c0_13] : memref<1x48xf32, #tpu.memory_space<vmem>>, vector<1x48xf32>
    %28 = vector.broadcast %27 : vector<1x48xf32> to vector<16x48xf32>
    %29 = arith.addf %26, %28 : vector<16x48xf32>
    %30 = arith.truncf %29 : vector<16x48xf32> to vector<16x48xbf16>
    %c0_14 = arith.constant 0 : index
    %c0_15 = arith.constant 0 : index
    %31 = vector.load %arg7[%c0_14, %c0_15] : memref<16x48xbf16, #tpu.memory_space<vmem>>, vector<16x48xbf16>
    tpu.vector_store %arg7[%c0_14, %c0_15], %30 {strides = array<i32>} : memref<16x48xbf16, #tpu.memory_space<vmem>>, vector<16x48xbf16>,
    return
  }
  func.func @transform_0(%arg0: i32, %arg1: i32) -> (i32, i32) {
    %c0_i32 = arith.constant 0 : i32
    %c0_i32_0 = arith.constant 0 : i32
    return %arg0, %c0_i32 : i32, i32
  }
  func.func @transform_1(%arg0: i32, %arg1: i32) -> (i32, i32) {
    %c0_i32 = arith.constant 0 : i32
    %c0_i32_0 = arith.constant 0 : i32
    return %c0_i32, %arg1 : i32, i32
  }
  func.func @transform_2(%arg0: i32, %arg1: i32) -> (i32, i32) {
    %c0_i32 = arith.constant 0 : i32
    %c0_i32_0 = arith.constant 0 : i32
    return %c0_i32, %arg1 : i32, i32
  }
  func.func @transform_3(%arg0: i32, %arg1: i32) -> (i32, i32) {
    %c0_i32 = arith.constant 0 : i32
    %c0_i32_0 = arith.constant 0 : i32
    %c0_i32_1 = arith.constant 0 : i32
    return %c0_i32, %c0_i32_0 : i32, i32
  }
  func.func @transform_4(%arg0: i32, %arg1: i32) -> (i32, i32) {
    %c0_i32 = arith.constant 0 : i32
    %c0_i32_0 = arith.constant 0 : i32
    %c0_i32_1 = arith.constant 0 : i32
    return %c0_i32, %c0_i32_0 : i32, i32
  }
  func.func @transform_5(%arg0: i32, %arg1: i32) -> (i32, i32) {
    %c0_i32 = arith.constant 0 : i32
    return %arg0, %arg1 : i32, i32
  }
}

module attributes {stable_mosaic.version = 11 : i64} {
  func.func @_fused_linear_kernel(%arg0: i32, %arg1: i32, %arg2: memref<16x16xbf16, #tpu.memory_space<vmem>>, %arg3: memref<16x16xbf16, #tpu.memory_space<vmem>>, %arg4: memref<1x16xf32, #tpu.memory_space<vmem>>, %arg5: memref<16x16xbf16, #tpu.memory_space<vmem>>, %arg6: memref<16x16xbf16, #tpu.memory_space<vmem>>) attributes {dimension_semantics = [#tpu.dimension_semantics<parallel>, #tpu.dimension_semantics<parallel>], iteration_bounds = array<i64: 1, 1>, scalar_prefetch = 0 : i64, scratch_operands = 0 : i64, tpu.core_type = #tpu.core_type<tc>, window_params = [{transform_indices = @transform_0, window_bounds = array<i64: 16, 16>}, {transform_indices = @transform_1, window_bounds = array<i64: 16, 16>}, {transform_indices = @transform_2, window_bounds = array<i64: 1, 16>}, {transform_indices = @transform_3, window_bounds = array<i64: 16, 16>}, {transform_indices = @transform_4, window_bounds = array<i64: 16, 16>}]} {
    %c0 = arith.constant 0 : index
    %c0_0 = arith.constant 0 : index
    %0 = vector.load %arg2[%c0, %c0_0] : memref<16x16xbf16, #tpu.memory_space<vmem>>, vector<16x16xbf16>
    %c0_1 = arith.constant 0 : index
    %c0_2 = arith.constant 0 : index
    %1 = vector.load %arg3[%c0_1, %c0_2] : memref<16x16xbf16, #tpu.memory_space<vmem>>, vector<16x16xbf16>
    %cst = arith.constant dense<0.000000e+00> : vector<16x16xf32>
    %2 = tpu.matmul %0, %1, %cst {dimension_numbers = #tpu.dot_dimension_numbers<[1], [0], [0], [1], [0, 0, 1, 1], [], []>} : vector<16x16xbf16>, vector<16x16xbf16>, vector<16x16xf32> -> vector<16x16xf32>
    %c0_3 = arith.constant 0 : index
    %c0_4 = arith.constant 0 : index
    %3 = vector.load %arg4[%c0_3, %c0_4] : memref<1x16xf32, #tpu.memory_space<vmem>>, vector<1x16xf32>
    %4 = vector.broadcast %3 : vector<1x16xf32> to vector<16x16xf32>
    %5 = arith.addf %2, %4 : vector<16x16xf32>
    %c0_5 = arith.constant 0 : index
    %c0_6 = arith.constant 0 : index
    %6 = vector.load %arg5[%c0_5, %c0_6] : memref<16x16xbf16, #tpu.memory_space<vmem>>, vector<16x16xbf16>
    %7 = arith.extf %6 : vector<16x16xbf16> to vector<16x16xf32>
    %8 = arith.addf %5, %7 : vector<16x16xf32>
    %9 = arith.truncf %8 : vector<16x16xf32> to vector<16x16xbf16>
    %c0_7 = arith.constant 0 : index
    %c0_8 = arith.constant 0 : index
    %10 = vector.load %arg6[%c0_7, %c0_8] : memref<16x16xbf16, #tpu.memory_space<vmem>>, vector<16x16xbf16>
    tpu.vector_store %arg6[%c0_7, %c0_8], %9 {strides = array<i32>} : memref<16x16xbf16, #tpu.memory_space<vmem>>, vector<16x16xbf16>,
    return
  }
  func.func @transform_0(%arg0: i32, %arg1: i32) -> (i32, i32) {
    %c0_i32 = arith.constant 0 : i32
    %c0_i32_0 = arith.constant 0 : i32
    return %arg0, %c0_i32 : i32, i32
  }
  func.func @transform_1(%arg0: i32, %arg1: i32) -> (i32, i32) {
    %c0_i32 = arith.constant 0 : i32
    %c0_i32_0 = arith.constant 0 : i32
    return %c0_i32, %arg1 : i32, i32
  }
  func.func @transform_2(%arg0: i32, %arg1: i32) -> (i32, i32) {
    %c0_i32 = arith.constant 0 : i32
    %c0_i32_0 = arith.constant 0 : i32
    return %c0_i32, %arg1 : i32, i32
  }
  func.func @transform_3(%arg0: i32, %arg1: i32) -> (i32, i32) {
    %c0_i32 = arith.constant 0 : i32
    return %arg0, %arg1 : i32, i32
  }
  func.func @transform_4(%arg0: i32, %arg1: i32) -> (i32, i32) {
    %c0_i32 = arith.constant 0 : i32
    return %arg0, %arg1 : i32, i32
  }
}

module attributes {stable_mosaic.version = 11 : i64} {
  func.func @_attn_kernel(%arg0: i32, %arg1: memref<1x8x48xbf16, #tpu.memory_space<vmem>>, %arg2: memref<1x8x16xbf16, #tpu.memory_space<vmem>>) attributes {dimension_semantics = [#tpu.dimension_semantics<parallel>], iteration_bounds = array<i64: 2>, scalar_prefetch = 0 : i64, scratch_operands = 0 : i64, tpu.core_type = #tpu.core_type<tc>, window_params = [{transform_indices = @transform_0, window_bounds = array<i64: 1, 8, 48>}, {transform_indices = @transform_1, window_bounds = array<i64: 1, 8, 16>}]} {
    %c0 = arith.constant 0 : index
    %c0_0 = arith.constant 0 : index
    %c0_1 = arith.constant 0 : index
    %0 = vector.load %arg1[%c0, %c0_0, %c0_1] : memref<1x8x48xbf16, #tpu.memory_space<vmem>>, vector<1x8x48xbf16>
    %1 = vector.shape_cast %0 : vector<1x8x48xbf16> to vector<8x48xbf16>
    %2 = vector.extract_strided_slice %1 {offsets = [0, 0], sizes = [8, 4], strides = [1, 1]} : vector<8x48xbf16> to vector<8x4xbf16>
    %3 = arith.extf %2 : vector<8x4xbf16> to vector<8x4xf32>
    %cst = arith.constant 5.000000e-01 : f32
    %4 = vector.broadcast %cst : f32 to vector<8x4xf32>
    %5 = arith.mulf %3, %4 : vector<8x4xf32>
    %6 = vector.extract_strided_slice %1 {offsets = [0, 16], sizes = [8, 4], strides = [1, 1]} : vector<8x48xbf16> to vector<8x4xbf16>
    %7 = vector.extract_strided_slice %1 {offsets = [0, 32], sizes = [8, 4], strides = [1, 1]} : vector<8x48xbf16> to vector<8x4xbf16>
    %8 = arith.truncf %5 : vector<8x4xf32> to vector<8x4xbf16>
    %9 = tpu.transpose %6, [1, 0] : vector<8x4xbf16> -> vector<4x8xbf16>
    %cst_2 = arith.constant dense<0.000000e+00> : vector<8x8xf32>
    %10 = tpu.matmul %8, %9, %cst_2 {dimension_numbers = #tpu.dot_dimension_numbers<[1], [0], [0], [1], [0, 0, 1, 1], [], []>} : vector<8x4xbf16>, vector<4x8xbf16>, vector<8x8xf32> -> vector<8x8xf32>
    %cst_3 = arith.constant dense<0xFF800000> : vector<8xf32>
    %11 = vector.multi_reduction <maximumf>, %10, %cst_3 [1] : vector<8x8xf32> to vector<8xf32>
    %12 = vector.shape_cast %11 : vector<8xf32> to vector<8x1xf32>
    %13 = vector.broadcast %12 : vector<8x1xf32> to vector<8x8xf32>
    %14 = arith.subf %10, %13 : vector<8x8xf32>
    %15 = math.exp %14 : vector<8x8xf32>
    %cst_4 = arith.constant dense<0.000000e+00> : vector<8xf32>
    %16 = vector.multi_reduction <add>, %15, %cst_4 [1] : vector<8x8xf32> to vector<8xf32>
    %17 = vector.shape_cast %16 : vector<8xf32> to vector<8x1xf32>
    %18 = tpu.reciprocal %17 {approx = true} : vector<8x1xf32> -> vector<8x1xf32>
    %19 = vector.broadcast %18 : vector<8x1xf32> to vector<8x8xf32>
    %20 = arith.mulf %15, %19 : vector<8x8xf32>
    %21 = arith.truncf %20 : vector<8x8xf32> to vector<8x8xbf16>
    %cst_5 = arith.constant dense<0.000000e+00> : vector<8x4xf32>
    %22 = tpu.matmul %21, %7, %cst_5 {dimension_numbers = #tpu.dot_dimension_numbers<[1], [0], [0], [1], [0, 0, 1, 1], [], []>} : vector<8x8xbf16>, vector<8x4xbf16>, vector<8x4xf32> -> vector<8x4xf32>
    %23 = vector.extract_strided_slice %1 {offsets = [0, 4], sizes = [8, 4], strides = [1, 1]} : vector<8x48xbf16> to vector<8x4xbf16>
    %24 = arith.extf %23 : vector<8x4xbf16> to vector<8x4xf32>
    %cst_6 = arith.constant 5.000000e-01 : f32
    %25 = vector.broadcast %cst_6 : f32 to vector<8x4xf32>
    %26 = arith.mulf %24, %25 : vector<8x4xf32>
    %27 = vector.extract_strided_slice %1 {offsets = [0, 20], sizes = [8, 4], strides = [1, 1]} : vector<8x48xbf16> to vector<8x4xbf16>
    %28 = vector.extract_strided_slice %1 {offsets = [0, 36], sizes = [8, 4], strides = [1, 1]} : vector<8x48xbf16> to vector<8x4xbf16>
    %29 = arith.truncf %26 : vector<8x4xf32> to vector<8x4xbf16>
    %30 = tpu.transpose %27, [1, 0] : vector<8x4xbf16> -> vector<4x8xbf16>
    %cst_7 = arith.constant dense<0.000000e+00> : vector<8x8xf32>
    %31 = tpu.matmul %29, %30, %cst_7 {dimension_numbers = #tpu.dot_dimension_numbers<[1], [0], [0], [1], [0, 0, 1, 1], [], []>} : vector<8x4xbf16>, vector<4x8xbf16>, vector<8x8xf32> -> vector<8x8xf32>
    %cst_8 = arith.constant dense<0xFF800000> : vector<8xf32>
    %32 = vector.multi_reduction <maximumf>, %31, %cst_8 [1] : vector<8x8xf32> to vector<8xf32>
    %33 = vector.shape_cast %32 : vector<8xf32> to vector<8x1xf32>
    %34 = vector.broadcast %33 : vector<8x1xf32> to vector<8x8xf32>
    %35 = arith.subf %31, %34 : vector<8x8xf32>
    %36 = math.exp %35 : vector<8x8xf32>
    %cst_9 = arith.constant dense<0.000000e+00> : vector<8xf32>
    %37 = vector.multi_reduction <add>, %36, %cst_9 [1] : vector<8x8xf32> to vector<8xf32>
    %38 = vector.shape_cast %37 : vector<8xf32> to vector<8x1xf32>
    %39 = tpu.reciprocal %38 {approx = true} : vector<8x1xf32> -> vector<8x1xf32>
    %40 = vector.broadcast %39 : vector<8x1xf32> to vector<8x8xf32>
    %41 = arith.mulf %36, %40 : vector<8x8xf32>
    %42 = arith.truncf %41 : vector<8x8xf32> to vector<8x8xbf16>
    %cst_10 = arith.constant dense<0.000000e+00> : vector<8x4xf32>
    %43 = tpu.matmul %42, %28, %cst_10 {dimension_numbers = #tpu.dot_dimension_numbers<[1], [0], [0], [1], [0, 0, 1, 1], [], []>} : vector<8x8xbf16>, vector<8x4xbf16>, vector<8x4xf32> -> vector<8x4xf32>
    %44 = vector.extract_strided_slice %1 {offsets = [0, 8], sizes = [8, 4], strides = [1, 1]} : vector<8x48xbf16> to vector<8x4xbf16>
    %45 = arith.extf %44 : vector<8x4xbf16> to vector<8x4xf32>
    %cst_11 = arith.constant 5.000000e-01 : f32
    %46 = vector.broadcast %cst_11 : f32 to vector<8x4xf32>
    %47 = arith.mulf %45, %46 : vector<8x4xf32>
    %48 = vector.extract_strided_slice %1 {offsets = [0, 24], sizes = [8, 4], strides = [1, 1]} : vector<8x48xbf16> to vector<8x4xbf16>
    %49 = vector.extract_strided_slice %1 {offsets = [0, 40], sizes = [8, 4], strides = [1, 1]} : vector<8x48xbf16> to vector<8x4xbf16>
    %50 = arith.truncf %47 : vector<8x4xf32> to vector<8x4xbf16>
    %51 = tpu.transpose %48, [1, 0] : vector<8x4xbf16> -> vector<4x8xbf16>
    %cst_12 = arith.constant dense<0.000000e+00> : vector<8x8xf32>
    %52 = tpu.matmul %50, %51, %cst_12 {dimension_numbers = #tpu.dot_dimension_numbers<[1], [0], [0], [1], [0, 0, 1, 1], [], []>} : vector<8x4xbf16>, vector<4x8xbf16>, vector<8x8xf32> -> vector<8x8xf32>
    %cst_13 = arith.constant dense<0xFF800000> : vector<8xf32>
    %53 = vector.multi_reduction <maximumf>, %52, %cst_13 [1] : vector<8x8xf32> to vector<8xf32>
    %54 = vector.shape_cast %53 : vector<8xf32> to vector<8x1xf32>
    %55 = vector.broadcast %54 : vector<8x1xf32> to vector<8x8xf32>
    %56 = arith.subf %52, %55 : vector<8x8xf32>
    %57 = math.exp %56 : vector<8x8xf32>
    %cst_14 = arith.constant dense<0.000000e+00> : vector<8xf32>
    %58 = vector.multi_reduction <add>, %57, %cst_14 [1] : vector<8x8xf32> to vector<8xf32>
    %59 = vector.shape_cast %58 : vector<8xf32> to vector<8x1xf32>
    %60 = tpu.reciprocal %59 {approx = true} : vector<8x1xf32> -> vector<8x1xf32>
    %61 = vector.broadcast %60 : vector<8x1xf32> to vector<8x8xf32>
    %62 = arith.mulf %57, %61 : vector<8x8xf32>
    %63 = arith.truncf %62 : vector<8x8xf32> to vector<8x8xbf16>
    %cst_15 = arith.constant dense<0.000000e+00> : vector<8x4xf32>
    %64 = tpu.matmul %63, %49, %cst_15 {dimension_numbers = #tpu.dot_dimension_numbers<[1], [0], [0], [1], [0, 0, 1, 1], [], []>} : vector<8x8xbf16>, vector<8x4xbf16>, vector<8x4xf32> -> vector<8x4xf32>
    %65 = vector.extract_strided_slice %1 {offsets = [0, 12], sizes = [8, 4], strides = [1, 1]} : vector<8x48xbf16> to vector<8x4xbf16>
    %66 = arith.extf %65 : vector<8x4xbf16> to vector<8x4xf32>
    %cst_16 = arith.constant 5.000000e-01 : f32
    %67 = vector.broadcast %cst_16 : f32 to vector<8x4xf32>
    %68 = arith.mulf %66, %67 : vector<8x4xf32>
    %69 = vector.extract_strided_slice %1 {offsets = [0, 28], sizes = [8, 4], strides = [1, 1]} : vector<8x48xbf16> to vector<8x4xbf16>
    %70 = vector.extract_strided_slice %1 {offsets = [0, 44], sizes = [8, 4], strides = [1, 1]} : vector<8x48xbf16> to vector<8x4xbf16>
    %71 = arith.truncf %68 : vector<8x4xf32> to vector<8x4xbf16>
    %72 = tpu.transpose %69, [1, 0] : vector<8x4xbf16> -> vector<4x8xbf16>
    %cst_17 = arith.constant dense<0.000000e+00> : vector<8x8xf32>
    %73 = tpu.matmul %71, %72, %cst_17 {dimension_numbers = #tpu.dot_dimension_numbers<[1], [0], [0], [1], [0, 0, 1, 1], [], []>} : vector<8x4xbf16>, vector<4x8xbf16>, vector<8x8xf32> -> vector<8x8xf32>
    %cst_18 = arith.constant dense<0xFF800000> : vector<8xf32>
    %74 = vector.multi_reduction <maximumf>, %73, %cst_18 [1] : vector<8x8xf32> to vector<8xf32>
    %75 = vector.shape_cast %74 : vector<8xf32> to vector<8x1xf32>
    %76 = vector.broadcast %75 : vector<8x1xf32> to vector<8x8xf32>
    %77 = arith.subf %73, %76 : vector<8x8xf32>
    %78 = math.exp %77 : vector<8x8xf32>
    %cst_19 = arith.constant dense<0.000000e+00> : vector<8xf32>
    %79 = vector.multi_reduction <add>, %78, %cst_19 [1] : vector<8x8xf32> to vector<8xf32>
    %80 = vector.shape_cast %79 : vector<8xf32> to vector<8x1xf32>
    %81 = tpu.reciprocal %80 {approx = true} : vector<8x1xf32> -> vector<8x1xf32>
    %82 = vector.broadcast %81 : vector<8x1xf32> to vector<8x8xf32>
    %83 = arith.mulf %78, %82 : vector<8x8xf32>
    %84 = arith.truncf %83 : vector<8x8xf32> to vector<8x8xbf16>
    %cst_20 = arith.constant dense<0.000000e+00> : vector<8x4xf32>
    %85 = tpu.matmul %84, %70, %cst_20 {dimension_numbers = #tpu.dot_dimension_numbers<[1], [0], [0], [1], [0, 0, 1, 1], [], []>} : vector<8x8xbf16>, vector<8x4xbf16>, vector<8x4xf32> -> vector<8x4xf32>
    %86 = tpu.concatenate %22, %43, %64, %85 in 1 : vector<8x4xf32>, vector<8x4xf32>, vector<8x4xf32>, vector<8x4xf32> -> vector<8x16xf32>
    %87 = arith.truncf %86 : vector<8x16xf32> to vector<8x16xbf16>
    %c0_21 = arith.constant 0 : index
    %c0_22 = arith.constant 0 : index
    %c0_23 = arith.constant 0 : index
    %88 = vector.load %arg2[%c0_21, %c0_22, %c0_23] : memref<1x8x16xbf16, #tpu.memory_space<vmem>>, vector<1x8x16xbf16>
    %89 = vector.shape_cast %88 : vector<1x8x16xbf16> to vector<8x16xbf16>
    %90 = vector.shape_cast %87 : vector<8x16xbf16> to vector<1x8x16xbf16>
    tpu.vector_store %arg2[%c0_21, %c0_22, %c0_23], %90 {strides = array<i32>} : memref<1x8x16xbf16, #tpu.memory_space<vmem>>, vector<1x8x16xbf16>,
    return
  }
  func.func @transform_0(%arg0: i32) -> (i32, i32, i32) {
    %c0_i32 = arith.constant 0 : i32
    %c0_i32_0 = arith.constant 0 : i32
    %c0_i32_1 = arith.constant 0 : i32
    return %arg0, %c0_i32, %c0_i32_0 : i32, i32, i32
  }
  func.func @transform_1(%arg0: i32) -> (i32, i32, i32) {
    %c0_i32 = arith.constant 0 : i32
    %c0_i32_0 = arith.constant 0 : i32
    %c0_i32_1 = arith.constant 0 : i32
    return %arg0, %c0_i32, %c0_i32_0 : i32, i32, i32
  }
}

module attributes {stable_mosaic.version = 11 : i64} {
  func.func @_fused_linear_kernel(%arg0: i32, %arg1: i32, %arg2: memref<16x16xbf16, #tpu.memory_space<vmem>>, %arg3: memref<16x16xbf16, #tpu.memory_space<vmem>>, %arg4: memref<1x16xf32, #tpu.memory_space<vmem>>, %arg5: memref<16x16xbf16, #tpu.memory_space<vmem>>, %arg6: memref<1x16xf32, #tpu.memory_space<vmem>>, %arg7: memref<1x16xf32, #tpu.memory_space<vmem>>, %arg8: memref<1x16xf32, #tpu.memory_space<vmem>>, %arg9: memref<16x16xbf16, #tpu.memory_space<vmem>>) attributes {dimension_semantics = [#tpu.dimension_semantics<parallel>, #tpu.dimension_semantics<parallel>], iteration_bounds = array<i64: 1, 1>, scalar_prefetch = 0 : i64, scratch_operands = 0 : i64, tpu.core_type = #tpu.core_type<tc>, window_params = [{transform_indices = @transform_0, window_bounds = array<i64: 16, 16>}, {transform_indices = @transform_1, window_bounds = array<i64: 16, 16>}, {transform_indices = @transform_2, window_bounds = array<i64: 1, 16>}, {transform_indices = @transform_3, window_bounds = array<i64: 16, 16>}, {transform_indices = @transform_4, window_bounds = array<i64: 1, 16>}, {pipeline_mode = #tpu.pipeline_mode<synchronous>, transform_indices = @transform_5, window_bounds = array<i64: 1, 16>}, {pipeline_mode = #tpu.pipeline_mode<synchronous>, transform_indices = @transform_6, window_bounds = array<i64: 1, 16>}, {transform_indices = @transform_7, window_bounds = array<i64: 16, 16>}]} {
    %c0 = arith.constant 0 : index
    %c0_0 = arith.constant 0 : index
    %0 = vector.load %arg2[%c0, %c0_0] : memref<16x16xbf16, #tpu.memory_space<vmem>>, vector<16x16xbf16>
    %1 = arith.extf %0 : vector<16x16xbf16> to vector<16x16xf32>
    %cst = arith.constant dense<0.000000e+00> : vector<16xf32>
    %2 = vector.multi_reduction <add>, %1, %cst [1] : vector<16x16xf32> to vector<16xf32>
    %3 = vector.shape_cast %2 : vector<16xf32> to vector<16x1xf32>
    %cst_1 = arith.constant 1.600000e+01 : f32
    %4 = vector.broadcast %cst_1 : f32 to vector<16x1xf32>
    %5 = arith.divf %3, %4 : vector<16x1xf32>
    %6 = vector.broadcast %5 : vector<16x1xf32> to vector<16x16xf32>
    %7 = arith.subf %1, %6 : vector<16x16xf32>
    %8 = arith.mulf %7, %7 : vector<16x16xf32>
    %cst_2 = arith.constant dense<0.000000e+00> : vector<16xf32>
    %9 = vector.multi_reduction <add>, %8, %cst_2 [1] : vector<16x16xf32> to vector<16xf32>
    %10 = vector.shape_cast %9 : vector<16xf32> to vector<16x1xf32>
    %cst_3 = arith.constant 1.600000e+01 : f32
    %11 = vector.broadcast %cst_3 : f32 to vector<16x1xf32>
    %12 = arith.divf %10, %11 : vector<16x1xf32>
    %cst_4 = arith.constant 9.99999974E-6 : f32
    %13 = vector.broadcast %cst_4 : f32 to vector<16x1xf32>
    %14 = arith.addf %12, %13 : vector<16x1xf32>
    %15 = math.rsqrt %14 : vector<16x1xf32>
    %16 = vector.broadcast %15 : vector<16x1xf32> to vector<16x16xf32>
    %17 = arith.mulf %7, %16 : vector<16x16xf32>
    %c0_5 = arith.constant 0 : index
    %c0_6 = arith.constant 0 : index
    %18 = vector.load %arg7[%c0_5, %c0_6] : memref<1x16xf32, #tpu.memory_space<vmem>>, vector<1x16xf32>
    %19 = vector.broadcast %18 : vector<1x16xf32> to vector<16x16xf32>
    %20 = arith.mulf %17, %19 : vector<16x16xf32>
    %c0_7 = arith.constant 0 : index
    %c0_8 = arith.constant 0 : index
    %21 = vector.load %arg8[%c0_7, %c0_8] : memref<1x16xf32, #tpu.memory_space<vmem>>, vector<1x16xf32>
    %22 = vector.broadcast %21 : vector<1x16xf32> to vector<16x16xf32>
    %23 = arith.addf %20, %22 : vector<16x16xf32>
    %24 = arith.truncf %23 : vector<16x16xf32> to vector<16x16xbf16>
    %c0_9 = arith.constant 0 : index
    %c0_10 = arith.constant 0 : index
    %25 = vector.load %arg3[%c0_9, %c0_10] : memref<16x16xbf16, #tpu.memory_space<vmem>>, vector<16x16xbf16>
    %cst_11 = arith.constant dense<0.000000e+00> : vector<16x16xf32>
    %26 = tpu.matmul %24, %25, %cst_11 {dimension_numbers = #tpu.dot_dimension_numbers<[1], [0], [0], [1], [0, 0, 1, 1], [], []>} : vector<16x16xbf16>, vector<16x16xbf16>, vector<16x16xf32> -> vector<16x16xf32>
    %c0_12 = arith.constant 0 : index
    %c0_13 = arith.constant 0 : index
    %27 = vector.load %arg4[%c0_12, %c0_13] : memref<1x16xf32, #tpu.memory_space<vmem>>, vector<1x16xf32>
    %28 = vector.broadcast %27 : vector<1x16xf32> to vector<16x16xf32>
    %29 = arith.addf %26, %28 : vector<16x16xf32>
    %c0_14 = arith.constant 0 : index
    %c0_15 = arith.constant 0 : index
    %30 = vector.load %arg5[%c0_14, %c0_15] : memref<16x16xbf16, #tpu.memory_space<vmem>>, vector<16x16xbf16>
    %cst_16 = arith.constant dense<0.000000e+00> : vector<16x16xf32>
    %31 = tpu.matmul %24, %30, %cst_16 {dimension_numbers = #tpu.dot_dimension_numbers<[1], [0], [0], [1], [0, 0, 1, 1], [], []>} : vector<16x16xbf16>, vector<16x16xbf16>, vector<16x16xf32> -> vector<16x16xf32>
    %c0_17 = arith.constant 0 : index
    %c0_18 = arith.constant 0 : index
    %32 = vector.load %arg6[%c0_17, %c0_18] : memref<1x16xf32, #tpu.memory_space<vmem>>, vector<1x16xf32>
    %33 = vector.broadcast %32 : vector<1x16xf32> to vector<16x16xf32>
    %34 = arith.addf %31, %33 : vector<16x16xf32>
    %35 = arith.negf %34 : vector<16x16xf32>
    %36 = math.exp %35 : vector<16x16xf32>
    %cst_19 = arith.constant 1.000000e+00 : f32
    %37 = vector.broadcast %cst_19 : f32 to vector<16x16xf32>
    %38 = arith.addf %37, %36 : vector<16x16xf32>
    %39 = arith.divf %37, %38 : vector<16x16xf32>
    %40 = arith.mulf %29, %39 : vector<16x16xf32>
    %41 = arith.truncf %40 : vector<16x16xf32> to vector<16x16xbf16>
    %c0_20 = arith.constant 0 : index
    %c0_21 = arith.constant 0 : index
    %42 = vector.load %arg9[%c0_20, %c0_21] : memref<16x16xbf16, #tpu.memory_space<vmem>>, vector<16x16xbf16>
    tpu.vector_store %arg9[%c0_20, %c0_21], %41 {strides = array<i32>} : memref<16x16xbf16, #tpu.memory_space<vmem>>, vector<16x16xbf16>,
    return
  }
  func.func @transform_0(%arg0: i32, %arg1: i32) -> (i32, i32) {
    %c0_i32 = arith.constant 0 : i32
    %c0_i32_0 = arith.constant 0 : i32
    return %arg0, %c0_i32 : i32, i32
  }
  func.func @transform_1(%arg0: i32, %arg1: i32) -> (i32, i32) {
    %c0_i32 = arith.constant 0 : i32
    %c0_i32_0 = arith.constant 0 : i32
    return %c0_i32, %arg1 : i32, i32
  }
  func.func @transform_2(%arg0: i32, %arg1: i32) -> (i32, i32) {
    %c0_i32 = arith.constant 0 : i32
    %c0_i32_0 = arith.constant 0 : i32
    return %c0_i32, %arg1 : i32, i32
  }
  func.func @transform_3(%arg0: i32, %arg1: i32) -> (i32, i32) {
    %c0_i32 = arith.constant 0 : i32
    %c0_i32_0 = arith.constant 0 : i32
    return %c0_i32, %arg1 : i32, i32
  }
  func.func @transform_4(%arg0: i32, %arg1: i32) -> (i32, i32) {
    %c0_i32 = arith.constant 0 : i32
    %c0_i32_0 = arith.constant 0 : i32
    return %c0_i32, %arg1 : i32, i32
  }
  func.func @transform_5(%arg0: i32, %arg1: i32) -> (i32, i32) {
    %c0_i32 = arith.constant 0 : i32
    %c0_i32_0 = arith.constant 0 : i32
    %c0_i32_1 = arith.constant 0 : i32
    return %c0_i32, %c0_i32_0 : i32, i32
  }
  func.func @transform_6(%arg0: i32, %arg1: i32) -> (i32, i32) {
    %c0_i32 = arith.constant 0 : i32
    %c0_i32_0 = arith.constant 0 : i32
    %c0_i32_1 = arith.constant 0 : i32
    return %c0_i32, %c0_i32_0 : i32, i32
  }
  func.func @transform_7(%arg0: i32, %arg1: i32) -> (i32, i32) {
    %c0_i32 = arith.constant 0 : i32
    return %arg0, %arg1 : i32, i32
  }
}

module attributes {stable_mosaic.version = 11 : i64} {
  func.func @_dwconv_kernel(%arg0: i32, %arg1: memref<1x8x16xbf16, #tpu.memory_space<vmem>>, %arg2: memref<7x16xf32, #tpu.memory_space<vmem>>, %arg3: memref<1x16xf32, #tpu.memory_space<vmem>>, %arg4: memref<1x8x16xbf16, #tpu.memory_space<vmem>>, %arg5: memref<14x16xf32, #tpu.memory_space<vmem>>) attributes {dimension_semantics = [#tpu.dimension_semantics<parallel>], iteration_bounds = array<i64: 2>, scalar_prefetch = 0 : i64, scratch_operands = 1 : i64, tpu.core_type = #tpu.core_type<tc>, window_params = [{transform_indices = @transform_0, window_bounds = array<i64: 1, 8, 16>}, {pipeline_mode = #tpu.pipeline_mode<synchronous>, transform_indices = @transform_1, window_bounds = array<i64: 7, 16>}, {pipeline_mode = #tpu.pipeline_mode<synchronous>, transform_indices = @transform_2, window_bounds = array<i64: 1, 16>}, {transform_indices = @transform_3, window_bounds = array<i64: 1, 8, 16>}]} {
    %cst = arith.constant 0.000000e+00 : f32
    %0 = vector.broadcast %cst : f32 to vector<14x16xf32>
    %c0 = arith.constant 0 : index
    %c0_0 = arith.constant 0 : index
    %1 = vector.load %arg5[%c0, %c0_0] : memref<14x16xf32, #tpu.memory_space<vmem>>, vector<14x16xf32>
    tpu.vector_store %arg5[%c0, %c0_0], %0 {strides = array<i32>} : memref<14x16xf32, #tpu.memory_space<vmem>>, vector<14x16xf32>,
    %c0_1 = arith.constant 0 : index
    %c0_2 = arith.constant 0 : index
    %c0_3 = arith.constant 0 : index
    %2 = vector.load %arg1[%c0_1, %c0_2, %c0_3] : memref<1x8x16xbf16, #tpu.memory_space<vmem>>, vector<1x8x16xbf16>
    %3 = vector.shape_cast %2 : vector<1x8x16xbf16> to vector<8x16xbf16>
    %4 = arith.extf %3 : vector<8x16xbf16> to vector<8x16xf32>
    %c3 = arith.constant 3 : index
    %c0_4 = arith.constant 0 : index
    %5 = vector.load %arg5[%c3, %c0_4] : memref<14x16xf32, #tpu.memory_space<vmem>>, vector<8x16xf32>
    tpu.vector_store %arg5[%c3, %c0_4], %4 {strides = array<i32>} : memref<14x16xf32, #tpu.memory_space<vmem>>, vector<8x16xf32>,
    %c0_5 = arith.constant 0 : index
    %c0_6 = arith.constant 0 : index
    %6 = vector.load %arg2[%c0_5, %c0_6] : memref<7x16xf32, #tpu.memory_space<vmem>>, vector<7x16xf32>
    %cst_7 = arith.constant 0.000000e+00 : f32
    %7 = vector.broadcast %cst_7 : f32 to vector<8x16xf32>
    %c0_8 = arith.constant 0 : index
    %c0_9 = arith.constant 0 : index
    %8 = vector.load %arg3[%c0_8, %c0_9] : memref<1x16xf32, #tpu.memory_space<vmem>>, vector<1x16xf32>
    %9 = vector.broadcast %8 : vector<1x16xf32> to vector<8x16xf32>
    %10 = arith.addf %7, %9 : vector<8x16xf32>
    %c0_10 = arith.constant 0 : index
    %c0_11 = arith.constant 0 : index
    %11 = vector.load %arg5[%c0_10, %c0_11] : memref<14x16xf32, #tpu.memory_space<vmem>>, vector<8x16xf32>
    %12 = vector.extract_strided_slice %6 {offsets = [0, 0], sizes = [1, 16], strides = [1, 1]} : vector<7x16xf32> to vector<1x16xf32>
    %13 = vector.broadcast %12 : vector<1x16xf32> to vector<8x16xf32>
    %14 = arith.mulf %11, %13 : vector<8x16xf32>
    %15 = arith.addf %10, %14 : vector<8x16xf32>
    %c1 = arith.constant 1 : index
    %c0_12 = arith.constant 0 : index
    %16 = vector.load %arg5[%c1, %c0_12] : memref<14x16xf32, #tpu.memory_space<vmem>>, vector<8x16xf32>
    %17 = vector.extract_strided_slice %6 {offsets = [1, 0], sizes = [1, 16], strides = [1, 1]} : vector<7x16xf32> to vector<1x16xf32>
    %18 = vector.broadcast %17 : vector<1x16xf32> to vector<8x16xf32>
    %19 = arith.mulf %16, %18 : vector<8x16xf32>
    %20 = arith.addf %15, %19 : vector<8x16xf32>
    %c2 = arith.constant 2 : index
    %c0_13 = arith.constant 0 : index
    %21 = vector.load %arg5[%c2, %c0_13] : memref<14x16xf32, #tpu.memory_space<vmem>>, vector<8x16xf32>
    %22 = vector.extract_strided_slice %6 {offsets = [2, 0], sizes = [1, 16], strides = [1, 1]} : vector<7x16xf32> to vector<1x16xf32>
    %23 = vector.broadcast %22 : vector<1x16xf32> to vector<8x16xf32>
    %24 = arith.mulf %21, %23 : vector<8x16xf32>
    %25 = arith.addf %20, %24 : vector<8x16xf32>
    %c3_14 = arith.constant 3 : index
    %c0_15 = arith.constant 0 : index
    %26 = vector.load %arg5[%c3_14, %c0_15] : memref<14x16xf32, #tpu.memory_space<vmem>>, vector<8x16xf32>
    %27 = vector.extract_strided_slice %6 {offsets = [3, 0], sizes = [1, 16], strides = [1, 1]} : vector<7x16xf32> to vector<1x16xf32>
    %28 = vector.broadcast %27 : vector<1x16xf32> to vector<8x16xf32>
    %29 = arith.mulf %26, %28 : vector<8x16xf32>
    %30 = arith.addf %25, %29 : vector<8x16xf32>
    %c4 = arith.constant 4 : index
    %c0_16 = arith.constant 0 : index
    %31 = vector.load %arg5[%c4, %c0_16] : memref<14x16xf32, #tpu.memory_space<vmem>>, vector<8x16xf32>
    %32 = vector.extract_strided_slice %6 {offsets = [4, 0], sizes = [1, 16], strides = [1, 1]} : vector<7x16xf32> to vector<1x16xf32>
    %33 = vector.broadcast %32 : vector<1x16xf32> to vector<8x16xf32>
    %34 = arith.mulf %31, %33 : vector<8x16xf32>
    %35 = arith.addf %30, %34 : vector<8x16xf32>
    %c5 = arith.constant 5 : index
    %c0_17 = arith.constant 0 : index
    %36 = vector.load %arg5[%c5, %c0_17] : memref<14x16xf32, #tpu.memory_space<vmem>>, vector<8x16xf32>
    %37 = vector.extract_strided_slice %6 {offsets = [5, 0], sizes = [1, 16], strides = [1, 1]} : vector<7x16xf32> to vector<1x16xf32>
    %38 = vector.broadcast %37 : vector<1x16xf32> to vector<8x16xf32>
    %39 = arith.mulf %36, %38 : vector<8x16xf32>
    %40 = arith.addf %35, %39 : vector<8x16xf32>
    %c6 = arith.constant 6 : index
    %c0_18 = arith.constant 0 : index
    %41 = vector.load %arg5[%c6, %c0_18] : memref<14x16xf32, #tpu.memory_space<vmem>>, vector<8x16xf32>
    %42 = vector.extract_strided_slice %6 {offsets = [6, 0], sizes = [1, 16], strides = [1, 1]} : vector<7x16xf32> to vector<1x16xf32>
    %43 = vector.broadcast %42 : vector<1x16xf32> to vector<8x16xf32>
    %44 = arith.mulf %41, %43 : vector<8x16xf32>
    %45 = arith.addf %40, %44 : vector<8x16xf32>
    %46 = arith.negf %45 : vector<8x16xf32>
    %47 = math.exp %46 : vector<8x16xf32>
    %cst_19 = arith.constant 1.000000e+00 : f32
    %48 = vector.broadcast %cst_19 : f32 to vector<8x16xf32>
    %49 = arith.addf %48, %47 : vector<8x16xf32>
    %50 = arith.divf %48, %49 : vector<8x16xf32>
    %51 = arith.mulf %45, %50 : vector<8x16xf32>
    %52 = arith.truncf %51 : vector<8x16xf32> to vector<8x16xbf16>
    %c0_20 = arith.constant 0 : index
    %c0_21 = arith.constant 0 : index
    %c0_22 = arith.constant 0 : index
    %53 = vector.load %arg4[%c0_20, %c0_21, %c0_22] : memref<1x8x16xbf16, #tpu.memory_space<vmem>>, vector<1x8x16xbf16>
    %54 = vector.shape_cast %53 : vector<1x8x16xbf16> to vector<8x16xbf16>
    %55 = vector.shape_cast %52 : vector<8x16xbf16> to vector<1x8x16xbf16>
    tpu.vector_store %arg4[%c0_20, %c0_21, %c0_22], %55 {strides = array<i32>} : memref<1x8x16xbf16, #tpu.memory_space<vmem>>, vector<1x8x16xbf16>,
    return
  }
  func.func @transform_0(%arg0: i32) -> (i32, i32, i32) {
    %c0_i32 = arith.constant 0 : i32
    %c0_i32_0 = arith.constant 0 : i32
    %c0_i32_1 = arith.constant 0 : i32
    return %arg0, %c0_i32, %c0_i32_0 : i32, i32, i32
  }
  func.func @transform_1(%arg0: i32) -> (i32, i32) {
    %c0_i32 = arith.constant 0 : i32
    %c0_i32_0 = arith.constant 0 : i32
    %c0_i32_1 = arith.constant 0 : i32
    return %c0_i32, %c0_i32_0 : i32, i32
  }
  func.func @transform_2(%arg0: i32) -> (i32, i32) {
    %c0_i32 = arith.constant 0 : i32
    %c0_i32_0 = arith.constant 0 : i32
    %c0_i32_1 = arith.constant 0 : i32
    return %c0_i32, %c0_i32_0 : i32, i32
  }
  func.func @transform_3(%arg0: i32) -> (i32, i32, i32) {
    %c0_i32 = arith.constant 0 : i32
    %c0_i32_0 = arith.constant 0 : i32
    %c0_i32_1 = arith.constant 0 : i32
    return %arg0, %c0_i32, %c0_i32_0 : i32, i32, i32
  }
}

module attributes {stable_mosaic.version = 11 : i64} {
  func.func @_out_conv_kernel(%arg0: i32, %arg1: memref<1x8x16xbf16, #tpu.memory_space<vmem>>, %arg2: memref<16x48xbf16, #tpu.memory_space<vmem>>, %arg3: memref<16x48xbf16, #tpu.memory_space<vmem>>, %arg4: memref<1x48xf32, #tpu.memory_space<vmem>>, %arg5: memref<1x48xf32, #tpu.memory_space<vmem>>, %arg6: memref<1x48xf32, #tpu.memory_space<vmem>>, %arg7: memref<1x9x48xf32, #tpu.memory_space<vmem>>, %arg8: memref<10x16xf32, #tpu.memory_space<vmem>>) attributes {dimension_semantics = [#tpu.dimension_semantics<parallel>], iteration_bounds = array<i64: 2>, scalar_prefetch = 0 : i64, scratch_operands = 1 : i64, tpu.core_type = #tpu.core_type<tc>, window_params = [{transform_indices = @transform_0, window_bounds = array<i64: 1, 8, 16>}, {pipeline_mode = #tpu.pipeline_mode<synchronous>, transform_indices = @transform_1, window_bounds = array<i64: 16, 48>}, {pipeline_mode = #tpu.pipeline_mode<synchronous>, transform_indices = @transform_2, window_bounds = array<i64: 16, 48>}, {pipeline_mode = #tpu.pipeline_mode<synchronous>, transform_indices = @transform_3, window_bounds = array<i64: 1, 48>}, {pipeline_mode = #tpu.pipeline_mode<synchronous>, transform_indices = @transform_4, window_bounds = array<i64: 1, 48>}, {pipeline_mode = #tpu.pipeline_mode<synchronous>, transform_indices = @transform_5, window_bounds = array<i64: 1, 48>}, {transform_indices = @transform_6, window_bounds = array<i64: 1, 9, 48>}]} {
    %cst = arith.constant 0.000000e+00 : f32
    %0 = vector.broadcast %cst : f32 to vector<10x16xf32>
    %c0 = arith.constant 0 : index
    %c0_0 = arith.constant 0 : index
    %1 = vector.load %arg8[%c0, %c0_0] : memref<10x16xf32, #tpu.memory_space<vmem>>, vector<10x16xf32>
    tpu.vector_store %arg8[%c0, %c0_0], %0 {strides = array<i32>} : memref<10x16xf32, #tpu.memory_space<vmem>>, vector<10x16xf32>,
    %c0_1 = arith.constant 0 : index
    %c0_2 = arith.constant 0 : index
    %c0_3 = arith.constant 0 : index
    %2 = vector.load %arg1[%c0_1, %c0_2, %c0_3] : memref<1x8x16xbf16, #tpu.memory_space<vmem>>, vector<1x8x16xbf16>
    %3 = vector.shape_cast %2 : vector<1x8x16xbf16> to vector<8x16xbf16>
    %4 = arith.extf %3 : vector<8x16xbf16> to vector<8x16xf32>
    %c1 = arith.constant 1 : index
    %c0_4 = arith.constant 0 : index
    %5 = vector.load %arg8[%c1, %c0_4] : memref<10x16xf32, #tpu.memory_space<vmem>>, vector<8x16xf32>
    tpu.vector_store %arg8[%c1, %c0_4], %4 {strides = array<i32>} : memref<10x16xf32, #tpu.memory_space<vmem>>, vector<8x16xf32>,
    %c0_5 = arith.constant 0 : index
    %c0_6 = arith.constant 0 : index
    %6 = vector.load %arg8[%c0_5, %c0_6] : memref<10x16xf32, #tpu.memory_space<vmem>>, vector<9x16xf32>
    %7 = arith.truncf %6 : vector<9x16xf32> to vector<9x16xbf16>
    %c1_7 = arith.constant 1 : index
    %c0_8 = arith.constant 0 : index
    %8 = vector.load %arg8[%c1_7, %c0_8] : memref<10x16xf32, #tpu.memory_space<vmem>>, vector<9x16xf32>
    %9 = arith.truncf %8 : vector<9x16xf32> to vector<9x16xbf16>
    %c0_9 = arith.constant 0 : index
    %c0_10 = arith.constant 0 : index
    %10 = vector.load %arg2[%c0_9, %c0_10] : memref<16x48xbf16, #tpu.memory_space<vmem>>, vector<16x48xbf16>
    %cst_11 = arith.constant dense<0.000000e+00> : vector<9x48xf32>
    %11 = tpu.matmul %7, %10, %cst_11 {dimension_numbers = #tpu.dot_dimension_numbers<[1], [0], [0], [1], [0, 0, 1, 1], [], []>} : vector<9x16xbf16>, vector<16x48xbf16>, vector<9x48xf32> -> vector<9x48xf32>
    %c0_12 = arith.constant 0 : index
    %c0_13 = arith.constant 0 : index
    %12 = vector.load %arg3[%c0_12, %c0_13] : memref<16x48xbf16, #tpu.memory_space<vmem>>, vector<16x48xbf16>
    %cst_14 = arith.constant dense<0.000000e+00> : vector<9x48xf32>
    %13 = tpu.matmul %9, %12, %cst_14 {dimension_numbers = #tpu.dot_dimension_numbers<[1], [0], [0], [1], [0, 0, 1, 1], [], []>} : vector<9x16xbf16>, vector<16x48xbf16>, vector<9x48xf32> -> vector<9x48xf32>
    %14 = arith.addf %11, %13 : vector<9x48xf32>
    %c0_15 = arith.constant 0 : index
    %c0_16 = arith.constant 0 : index
    %15 = vector.load %arg4[%c0_15, %c0_16] : memref<1x48xf32, #tpu.memory_space<vmem>>, vector<1x48xf32>
    %16 = vector.broadcast %15 : vector<1x48xf32> to vector<9x48xf32>
    %17 = arith.addf %14, %16 : vector<9x48xf32>
    %cst_17 = arith.constant dense<0.000000e+00> : vector<9xf32>
    %18 = vector.multi_reduction <add>, %17, %cst_17 [1] : vector<9x48xf32> to vector<9xf32>
    %19 = vector.shape_cast %18 : vector<9xf32> to vector<9x1xf32>
    %cst_18 = arith.constant 4.800000e+01 : f32
    %20 = vector.broadcast %cst_18 : f32 to vector<9x1xf32>
    %21 = arith.divf %19, %20 : vector<9x1xf32>
    %22 = vector.broadcast %21 : vector<9x1xf32> to vector<9x48xf32>
    %23 = arith.subf %17, %22 : vector<9x48xf32>
    %24 = arith.mulf %23, %23 : vector<9x48xf32>
    %cst_19 = arith.constant dense<0.000000e+00> : vector<9xf32>
    %25 = vector.multi_reduction <add>, %24, %cst_19 [1] : vector<9x48xf32> to vector<9xf32>
    %26 = vector.shape_cast %25 : vector<9xf32> to vector<9x1xf32>
    %cst_20 = arith.constant 4.800000e+01 : f32
    %27 = vector.broadcast %cst_20 : f32 to vector<9x1xf32>
    %28 = arith.divf %26, %27 : vector<9x1xf32>
    %cst_21 = arith.constant 9.99999974E-6 : f32
    %29 = vector.broadcast %cst_21 : f32 to vector<9x1xf32>
    %30 = arith.addf %28, %29 : vector<9x1xf32>
    %31 = math.rsqrt %30 : vector<9x1xf32>
    %32 = vector.broadcast %31 : vector<9x1xf32> to vector<9x48xf32>
    %33 = arith.mulf %23, %32 : vector<9x48xf32>
    %c0_22 = arith.constant 0 : index
    %c0_23 = arith.constant 0 : index
    %34 = vector.load %arg5[%c0_22, %c0_23] : memref<1x48xf32, #tpu.memory_space<vmem>>, vector<1x48xf32>
    %35 = vector.broadcast %34 : vector<1x48xf32> to vector<9x48xf32>
    %36 = arith.mulf %33, %35 : vector<9x48xf32>
    %c0_24 = arith.constant 0 : index
    %c0_25 = arith.constant 0 : index
    %37 = vector.load %arg6[%c0_24, %c0_25] : memref<1x48xf32, #tpu.memory_space<vmem>>, vector<1x48xf32>
    %38 = vector.broadcast %37 : vector<1x48xf32> to vector<9x48xf32>
    %39 = arith.addf %36, %38 : vector<9x48xf32>
    %cst_26 = arith.constant 0.000000e+00 : f32
    %40 = vector.broadcast %cst_26 : f32 to vector<9x48xf32>
    %41 = arith.maximumf %39, %40 : vector<9x48xf32>
    %c0_27 = arith.constant 0 : index
    %c0_28 = arith.constant 0 : index
    %c0_29 = arith.constant 0 : index
    %42 = vector.load %arg7[%c0_27, %c0_28, %c0_29] : memref<1x9x48xf32, #tpu.memory_space<vmem>>, vector<1x9x48xf32>
    %43 = vector.shape_cast %42 : vector<1x9x48xf32> to vector<9x48xf32>
    %44 = vector.shape_cast %41 : vector<9x48xf32> to vector<1x9x48xf32>
    tpu.vector_store %arg7[%c0_27, %c0_28, %c0_29], %44 {strides = array<i32>} : memref<1x9x48xf32, #tpu.memory_space<vmem>>, vector<1x9x48xf32>,
    return
  }
  func.func @transform_0(%arg0: i32) -> (i32, i32, i32) {
    %c0_i32 = arith.constant 0 : i32
    %c0_i32_0 = arith.constant 0 : i32
    %c0_i32_1 = arith.constant 0 : i32
    return %arg0, %c0_i32, %c0_i32_0 : i32, i32, i32
  }
  func.func @transform_1(%arg0: i32) -> (i32, i32) {
    %c0_i32 = arith.constant 0 : i32
    %c0_i32_0 = arith.constant 0 : i32
    %c0_i32_1 = arith.constant 0 : i32
    return %c0_i32, %c0_i32_0 : i32, i32
  }
  func.func @transform_2(%arg0: i32) -> (i32, i32) {
    %c0_i32 = arith.constant 0 : i32
    %c0_i32_0 = arith.constant 0 : i32
    %c0_i32_1 = arith.constant 0 : i32
    return %c0_i32, %c0_i32_0 : i32, i32
  }
  func.func @transform_3(%arg0: i32) -> (i32, i32) {
    %c0_i32 = arith.constant 0 : i32
    %c0_i32_0 = arith.constant 0 : i32
    %c0_i32_1 = arith.constant 0 : i32
    return %c0_i32, %c0_i32_0 : i32, i32
  }
  func.func @transform_4(%arg0: i32) -> (i32, i32) {
    %c0_i32 = arith.constant 0 : i32
    %c0_i32_0 = arith.constant 0 : i32
    %c0_i32_1 = arith.constant 0 : i32
    return %c0_i32, %c0_i32_0 : i32, i32
  }
  func.func @transform_5(%arg0: i32) -> (i32, i32) {
    %c0_i32 = arith.constant 0 : i32
    %c0_i32_0 = arith.constant 0 : i32
    %c0_i32_1 = arith.constant 0 : i32
    return %c0_i32, %c0_i32_0 : i32, i32
  }
  func.func @transform_6(%arg0: i32) -> (i32, i32, i32) {
    %c0_i32 = arith.constant 0 : i32
    %c0_i32_0 = arith.constant 0 : i32
    %c0_i32_1 = arith.constant 0 : i32
    return %arg0, %c0_i32, %c0_i32_0 : i32, i32, i32
  }
}

module attributes {stable_mosaic.version = 11 : i64} {
  func.func @_fused_linear_kernel(%arg0: i32, %arg1: i32, %arg2: memref<16x32xbf16, #tpu.memory_space<vmem>>, %arg3: memref<32x16xbf16, #tpu.memory_space<vmem>>, %arg4: memref<1x16xf32, #tpu.memory_space<vmem>>, %arg5: memref<16x16xbf16, #tpu.memory_space<vmem>>, %arg6: memref<1x16xf32, #tpu.memory_space<vmem>>, %arg7: memref<1x16xf32, #tpu.memory_space<vmem>>, %arg8: memref<16x16xbf16, #tpu.memory_space<vmem>>) attributes {dimension_semantics = [#tpu.dimension_semantics<parallel>, #tpu.dimension_semantics<parallel>], iteration_bounds = array<i64: 1, 1>, scalar_prefetch = 0 : i64, scratch_operands = 0 : i64, tpu.core_type = #tpu.core_type<tc>, window_params = [{transform_indices = @transform_0, window_bounds = array<i64: 16, 32>}, {transform_indices = @transform_1, window_bounds = array<i64: 32, 16>}, {transform_indices = @transform_2, window_bounds = array<i64: 1, 16>}, {transform_indices = @transform_3, window_bounds = array<i64: 16, 16>}, {transform_indices = @transform_4, window_bounds = array<i64: 1, 16>}, {transform_indices = @transform_5, window_bounds = array<i64: 1, 16>}, {transform_indices = @transform_6, window_bounds = array<i64: 16, 16>}]} {
    %c0 = arith.constant 0 : index
    %c0_0 = arith.constant 0 : index
    %0 = vector.load %arg2[%c0, %c0_0] : memref<16x32xbf16, #tpu.memory_space<vmem>>, vector<16x32xbf16>
    %c0_1 = arith.constant 0 : index
    %c0_2 = arith.constant 0 : index
    %1 = vector.load %arg3[%c0_1, %c0_2] : memref<32x16xbf16, #tpu.memory_space<vmem>>, vector<32x16xbf16>
    %cst = arith.constant dense<0.000000e+00> : vector<16x16xf32>
    %2 = tpu.matmul %0, %1, %cst {dimension_numbers = #tpu.dot_dimension_numbers<[1], [0], [0], [1], [0, 0, 1, 1], [], []>} : vector<16x32xbf16>, vector<32x16xbf16>, vector<16x16xf32> -> vector<16x16xf32>
    %c0_3 = arith.constant 0 : index
    %c0_4 = arith.constant 0 : index
    %3 = vector.load %arg4[%c0_3, %c0_4] : memref<1x16xf32, #tpu.memory_space<vmem>>, vector<1x16xf32>
    %4 = vector.broadcast %3 : vector<1x16xf32> to vector<16x16xf32>
    %5 = arith.addf %2, %4 : vector<16x16xf32>
    %cst_5 = arith.constant 5.000000e-01 : f32
    %6 = vector.broadcast %cst_5 : f32 to vector<16x16xf32>
    %7 = arith.mulf %5, %6 : vector<16x16xf32>
    %c0_6 = arith.constant 0 : index
    %c0_7 = arith.constant 0 : index
    %8 = vector.load %arg5[%c0_6, %c0_7] : memref<16x16xbf16, #tpu.memory_space<vmem>>, vector<16x16xbf16>
    %9 = arith.extf %8 : vector<16x16xbf16> to vector<16x16xf32>
    %10 = arith.addf %7, %9 : vector<16x16xf32>
    %cst_8 = arith.constant dense<0.000000e+00> : vector<16xf32>
    %11 = vector.multi_reduction <add>, %10, %cst_8 [1] : vector<16x16xf32> to vector<16xf32>
    %12 = vector.shape_cast %11 : vector<16xf32> to vector<16x1xf32>
    %cst_9 = arith.constant 1.600000e+01 : f32
    %13 = vector.broadcast %cst_9 : f32 to vector<16x1xf32>
    %14 = arith.divf %12, %13 : vector<16x1xf32>
    %15 = vector.broadcast %14 : vector<16x1xf32> to vector<16x16xf32>
    %16 = arith.subf %10, %15 : vector<16x16xf32>
    %17 = arith.mulf %16, %16 : vector<16x16xf32>
    %cst_10 = arith.constant dense<0.000000e+00> : vector<16xf32>
    %18 = vector.multi_reduction <add>, %17, %cst_10 [1] : vector<16x16xf32> to vector<16xf32>
    %19 = vector.shape_cast %18 : vector<16xf32> to vector<16x1xf32>
    %cst_11 = arith.constant 1.600000e+01 : f32
    %20 = vector.broadcast %cst_11 : f32 to vector<16x1xf32>
    %21 = arith.divf %19, %20 : vector<16x1xf32>
    %cst_12 = arith.constant 9.99999974E-6 : f32
    %22 = vector.broadcast %cst_12 : f32 to vector<16x1xf32>
    %23 = arith.addf %21, %22 : vector<16x1xf32>
    %24 = math.rsqrt %23 : vector<16x1xf32>
    %25 = vector.broadcast %24 : vector<16x1xf32> to vector<16x16xf32>
    %26 = arith.mulf %16, %25 : vector<16x16xf32>
    %c0_13 = arith.constant 0 : index
    %c0_14 = arith.constant 0 : index
    %27 = vector.load %arg6[%c0_13, %c0_14] : memref<1x16xf32, #tpu.memory_space<vmem>>, vector<1x16xf32>
    %28 = vector.broadcast %27 : vector<1x16xf32> to vector<16x16xf32>
    %29 = arith.mulf %26, %28 : vector<16x16xf32>
    %c0_15 = arith.constant 0 : index
    %c0_16 = arith.constant 0 : index
    %30 = vector.load %arg7[%c0_15, %c0_16] : memref<1x16xf32, #tpu.memory_space<vmem>>, vector<1x16xf32>
    %31 = vector.broadcast %30 : vector<1x16xf32> to vector<16x16xf32>
    %32 = arith.addf %29, %31 : vector<16x16xf32>
    %33 = arith.truncf %32 : vector<16x16xf32> to vector<16x16xbf16>
    %c0_17 = arith.constant 0 : index
    %c0_18 = arith.constant 0 : index
    %34 = vector.load %arg8[%c0_17, %c0_18] : memref<16x16xbf16, #tpu.memory_space<vmem>>, vector<16x16xbf16>
    tpu.vector_store %arg8[%c0_17, %c0_18], %33 {strides = array<i32>} : memref<16x16xbf16, #tpu.memory_space<vmem>>, vector<16x16xbf16>,
    return
  }
  func.func @transform_0(%arg0: i32, %arg1: i32) -> (i32, i32) {
    %c0_i32 = arith.constant 0 : i32
    %c0_i32_0 = arith.constant 0 : i32
    return %arg0, %c0_i32 : i32, i32
  }
  func.func @transform_1(%arg0: i32, %arg1: i32) -> (i32, i32) {
    %c0_i32 = arith.constant 0 : i32
    %c0_i32_0 = arith.constant 0 : i32
    return %c0_i32, %arg1 : i32, i32
  }
  func.func @transform_2(%arg0: i32, %arg1: i32) -> (i32, i32) {
    %c0_i32 = arith.constant 0 : i32
    %c0_i32_0 = arith.constant 0 : i32
    return %c0_i32, %arg1 : i32, i32
  }
  func.func @transform_3(%arg0: i32, %arg1: i32) -> (i32, i32) {
    %c0_i32 = arith.constant 0 : i32
    return %arg0, %arg1 : i32, i32
  }
  func.func @transform_4(%arg0: i32, %arg1: i32) -> (i32, i32) {
    %c0_i32 = arith.constant 0 : i32
    %c0_i32_0 = arith.constant 0 : i32
    return %c0_i32, %arg1 : i32, i32
  }
  func.func @transform_5(%arg0: i32, %arg1: i32) -> (i32, i32) {
    %c0_i32 = arith.constant 0 : i32
    %c0_i32_0 = arith.constant 0 : i32
    return %c0_i32, %arg1 : i32, i32
  }
  func.func @transform_6(%arg0: i32, %arg1: i32) -> (i32, i32) {
    %c0_i32 = arith.constant 0 : i32
    return %arg0, %arg1 : i32, i32
  }
}

</mosaic_0001>

<llo_original>
// kernel: conformer_separator_forward.22
$region0: #{conformer_separator_forward.22}
  #allocation0 [shape = 'u32[]', space=smem, size = 0x4, offset = 0x4, fixed_abs, tag = 'smem constant byte address 0x4 - core index']
  #allocation1 [shape = 'u32[144,128]{1,0:T(1,128)}', space=vmem, size = 0x12000, scoped, tag = 'internal scratch']
  %s0 = inlined_call_operand.vmem [shape: f32[16,16], index: 0, kind: input, shape index: {}]
  %s1 = inlined_call_operand.vmem [shape: bf16[16,16], index: 1, kind: input, shape index: {}]
  %s2 = inlined_call_operand.vmem [shape: f32[1,16], index: 2, kind: input, shape index: {}]
  %s3 = inlined_call_operand.vmem [shape: f32[1,16], index: 3, kind: input, shape index: {}]
  %s4 = inlined_call_operand.vmem [shape: f32[1,16], index: 4, kind: input, shape index: {}]
  %s5 = inlined_call_operand.vmem [shape: bf16[16,16], index: 5, kind: output, shape index: {}]
  %s6 = sld [smem:[#allocation0]]
  $region30: #{conformer_separator_forward.22} parent=0
    _
  %s8 = ssub.s32 1, %s6
  %s9 = scalar_select 0, %s8, %s6
  // Predicated region
  $region2: #{conformer_separator_forward.22} parent=0 // pred_check
    _
  $region3: #{conformer_separator_forward.22} parent=0 // pred_check_branch
    %11 = sbr.rel (0) target = $region5
  $region4: #{conformer_separator_forward.22} parent=0 // pred_region
    _
  $region5: #{conformer_separator_forward.22} parent=0 // pred_fallthru
    _
  // Predicated region
  $region6: #{conformer_separator_forward.22} parent=0 // pred_check
    _
  $region7: #{conformer_separator_forward.22} parent=0 // pred_check_branch
    %13 = sbr.rel (0) target = $region9
  $region8: #{conformer_separator_forward.22} parent=0 // pred_region
    _
  $region9: #{conformer_separator_forward.22} parent=0 // pred_fallthru
    _
  // Predicated region
  $region10: #{conformer_separator_forward.22} parent=0 // pred_check
    _
  $region11: #{conformer_separator_forward.22} parent=0 // pred_check_branch
    %15 = sbr.rel (0) target = $region13
  $region12: #{conformer_separator_forward.22} parent=0 // pred_region
    _
  $region13: #{conformer_separator_forward.22} parent=0 // pred_fallthru
    _
  // Predicated region
  $region14: #{conformer_separator_forward.22} parent=0 // pred_check
    _
  $region15: #{conformer_separator_forward.22} parent=0 // pred_check_branch
    %17 = sbr.rel (0) target = $region17
  $region16: #{conformer_separator_forward.22} parent=0 // pred_region
    _
  $region17: #{conformer_separator_forward.22} parent=0 // pred_fallthru
    _
  // Predicated region
  $region18: #{conformer_separator_forward.22} parent=0 // pred_check
    _
  $region19: #{conformer_separator_forward.22} parent=0 // pred_check_branch
    %19 = sbr.rel (0) target = $region21
  $region20: #{conformer_separator_forward.22} parent=0 // pred_region
    _
  $region21: #{conformer_separator_forward.22} parent=0 // pred_fallthru
    _
  %v21 = vld [vmem:[%s0] sm:$0xff]
  %v22 = vld [vmem:[%s0 + $0x8] sm:$0xff]
  %v23 = vpack.c.bf16 %v22, %v21
  %v24 = vld [vmem:[%s1] sm:$0xf]
  %v25 = vld [vmem:[%s1 + $0x4] sm:$0xf]
  %v26 = vld [vmem:[%s2] sm:$0x1]
  %v28 = vlaneseq
  %v29 = vshrl.u32 %v28, 7
  %v30 = vsub.s32 0, %v29
  %v31 = vrot.slane %v26, %v30
  %v35 = vunpack.c.l.b16 %v24
  %v36 = vunpack.c.l.b16 %v25
  %v37 = vpack.c.b16 %v36, %v35
  %vm39 = vcmask 130048
  %v41 = vsel %vm39, %v23, 0
  %43 = vmatprep.subr.bf16.mxu0 0
  %44 = vmatpush1.bf16.msra.mxu0 %v37
  %45 = vmatprep.subr.bf16.mxu0 0
  %46 = vmatpush1.bf16.msra.mxu0 0
  %47 = vmatprep.subr.bf16.mxu0 0
  %48 = vmatpush1.bf16.msra.mxu0 0
  %49 = vmatprep.subr.bf16.mxu0 0
  %50 = vmatpush1.bf16.msra.mxu0 0
  %51 = vmatprep.subr.bf16.mxu0 0
  %52 = vmatpush1.bf16.msra.mxu0 0
  %53 = vmatprep.subr.bf16.mxu0 0
  %54 = vmatpush1.bf16.msra.mxu0 0
  %55 = vmatprep.subr.bf16.mxu0 0
  %56 = vmatpush1.bf16.msra.mxu0 0
  %57 = vmatprep.subr.bf16.mxu0 0
  %58 = vmatpush1.bf16.msra.mxu0 0
  %59 = vmatprep.subr.bf16.mxu0 0
  %60 = vmatpush1.bf16.msra.mxu0 0
  %61 = vmatprep.subr.bf16.mxu0 0
  %62 = vmatpush1.bf16.msra.mxu0 0
  %63 = vmatprep.subr.bf16.mxu0 0
  %64 = vmatpush1.bf16.msra.mxu0 0
  %65 = vmatprep.subr.bf16.mxu0 0
  %66 = vmatpush1.bf16.msra.mxu0 0
  %67 = vmatprep.subr.bf16.mxu0 0
  %68 = vmatpush1.bf16.msra.mxu0 0
  %69 = vmatprep.subr.bf16.mxu0 0
  %70 = vmatpush1.bf16.msra.mxu0 0
  %71 = vmatprep.subr.bf16.mxu0 0
  %72 = vmatpush1.bf16.msra.mxu0 0
  %73 = vmatprep.subr.bf16.mxu0 0
  %74 = vmatpush1.bf16.msra.mxu0 0
  %75 = vmatprep.mubr.bf16.mxu0 0
  %76 = vmatmul.mubr.bf16.gmra.mrb[0].mxu0 %v41
  %v77 = vpop.f32.mrb[0].mxu0
  %v78 = vadd.f32 %v31, %v77
  %v79 = vpop.f32.mrb[0].mxu0
  %v80 = vpop.f32.mrb[0].mxu0
  %v81 = vadd.f32 %v31, %v80
  %v82 = vpop.f32.mrb[0].mxu0
  %83 = vdwg.mxu0
  %v84 = vsel %vm39, %v78, 0.0
  %85 = vadd.xlane.f32.xlu0 %v84
  %v86 = vpop.xlane.xlu0 %85
  %v87 = vsel %vm39, %v81, 0.0
  %88 = vadd.xlane.f32.xlu0 %v87
  %v89 = vpop.xlane.xlu0 %88
  %v90 = vrcp.pop 16.0
  %v91 = vmul.f32 %v86, %v90
  %v92 = vmul.f32 %v89, %v90
  %v93 = vsub.f32 %v78, %v91
  %v94 = vsub.f32 %v81, %v92
  %v95 = vmul.f32 %v93, %v93
  %v96 = vmul.f32 %v94, %v94
  %v97 = vsel %vm39, %v95, 0.0
  %98 = vadd.xlane.f32.xlu0 %v97
  %v99 = vpop.xlane.xlu0 %98
  %v100 = vsel %vm39, %v96, 0.0
  %101 = vadd.xlane.f32.xlu0 %v100
  %v102 = vpop.xlane.xlu0 %101
  %v103 = vmul.f32 %v99, %v90
  %v104 = vmul.f32 %v102, %v90
  %v105 = vadd.f32 %v103, 1e-05
  %v106 = vadd.f32 %v104, 1e-05
  %v107 = vrsqrt.pop %v105
  %v108 = vrsqrt.pop %v106
  %v109 = vmul.f32 %v93, %v107
  %v110 = vmul.f32 %v94, %v108
  %v111 = vld [vmem:[%s3] sm:$0x1]
  %v113 = vlaneseq
  %v114 = vshrl.u32 %v113, 7
  %v115 = vsub.s32 0, %v114
  %v116 = vrot.slane %v111, %v115
  %v118 = vmul.f32 %v109, %v116
  %v119 = vmul.f32 %v110, %v116
  %v120 = vld [vmem:[%s4] sm:$0x1]
  %v122 = vlaneseq
  %v123 = vshrl.u32 %v122, 7
  %v124 = vsub.s32 0, %v123
  %v125 = vrot.slane %v120, %v124
  %v127 = vadd.f32 %v118, %v125
  %v128 = vadd.f32 %v119, %v125
  %v129 = vmax.f32 %v127, 0.0
  %v130 = vmax.f32 %v128, 0.0
  %v131 = vpack.c.bf16 %v130, %v129
  %v133 = vunpack.c.l.b16 %v131
  %v134 = vunpack.c.h.b16 %v131
  %v135 = vpack.c.b16 %v133, %v133
  %v136 = vpack.c.b16 %v134, %v134
  %vm139 = vcmask 125952
  %140 = vst.msk [vmem:[%s5] sm:$0xf] %vm139, %v135
  %141 = vst.msk [vmem:[%s5 + $0x4] sm:$0xf] %vm139, %v136
  // Predicated region
  $region22: #{conformer_separator_forward.22} parent=0 // pred_check
    _
  $region23: #{conformer_separator_forward.22} parent=0 // pred_check_branch
    %143 = sbr.rel (0) target = $region25
  $region24: #{conformer_separator_forward.22} parent=0 // pred_region
    _
  $region25: #{conformer_separator_forward.22} parent=0 // pred_fallthru
    _
  // Predicated region
  $region26: #{conformer_separator_forward.22} parent=0 // pred_check
    _
  $region27: #{conformer_separator_forward.22} parent=0 // pred_check_branch
    %145 = sbr.rel (0) target = $region29
  $region28: #{conformer_separator_forward.22} parent=0 // pred_region
    _
  $region29: #{conformer_separator_forward.22} parent=0 // pred_fallthru
    _

// kernel: conformer_separator_forward.23
$region0: #{conformer_separator_forward.23}
  #allocation0 [shape = 'u32[]', space=smem, size = 0x4, offset = 0x4, fixed_abs, tag = 'smem constant byte address 0x4 - core index']
  #allocation1 [shape = 'u32[144,128]{1,0:T(1,128)}', space=vmem, size = 0x12000, scoped, tag = 'internal scratch']
  %s0 = inlined_call_operand.vmem [shape: bf16[16,16], index: 0, kind: input, shape index: {}]
  %s1 = inlined_call_operand.vmem [shape: bf16[16,32], index: 1, kind: input, shape index: {}]
  %s2 = inlined_call_operand.vmem [shape: f32[1,32], index: 2, kind: input, shape index: {}]
  %s3 = inlined_call_operand.vmem [shape: f32[1,16], index: 3, kind: input, shape index: {}]
  %s4 = inlined_call_operand.vmem [shape: f32[1,16], index: 4, kind: input, shape index: {}]
  %s5 = inlined_call_operand.vmem [shape: bf16[16,32], index: 5, kind: output, shape index: {}]
  %s6 = sld [smem:[#allocation0]]
  $region30: #{conformer_separator_forward.23} parent=0
    _
  %s8 = ssub.s32 1, %s6
  %s9 = scalar_select 0, %s8, %s6
  // Predicated region
  $region2: #{conformer_separator_forward.23} parent=0 // pred_check
    _
  $region3: #{conformer_separator_forward.23} parent=0 // pred_check_branch
    %11 = sbr.rel (0) target = $region5
  $region4: #{conformer_separator_forward.23} parent=0 // pred_region
    _
  $region5: #{conformer_separator_forward.23} parent=0 // pred_fallthru
    _
  // Predicated region
  $region6: #{conformer_separator_forward.23} parent=0 // pred_check
    _
  $region7: #{conformer_separator_forward.23} parent=0 // pred_check_branch
    %13 = sbr.rel (0) target = $region9
  $region8: #{conformer_separator_forward.23} parent=0 // pred_region
    _
  $region9: #{conformer_separator_forward.23} parent=0 // pred_fallthru
    _
  // Predicated region
  $region10: #{conformer_separator_forward.23} parent=0 // pred_check
    _
  $region11: #{conformer_separator_forward.23} parent=0 // pred_check_branch
    %15 = sbr.rel (0) target = $region13
  $region12: #{conformer_separator_forward.23} parent=0 // pred_region
    _
  $region13: #{conformer_separator_forward.23} parent=0 // pred_fallthru
    _
  // Predicated region
  $region14: #{conformer_separator_forward.23} parent=0 // pred_check
    _
  $region15: #{conformer_separator_forward.23} parent=0 // pred_check_branch
    %17 = sbr.rel (0) target = $region17
  $region16: #{conformer_separator_forward.23} parent=0 // pred_region
    _
  $region17: #{conformer_separator_forward.23} parent=0 // pred_fallthru
    _
  // Predicated region
  $region18: #{conformer_separator_forward.23} parent=0 // pred_check
    _
  $region19: #{conformer_separator_forward.23} parent=0 // pred_check_branch
    %19 = sbr.rel (0) target = $region21
  $region20: #{conformer_separator_forward.23} parent=0 // pred_region
    _
  $region21: #{conformer_separator_forward.23} parent=0 // pred_fallthru
    _
  %v21 = vld [vmem:[%s0] sm:$0xf]
  %v22 = vld [vmem:[%s0 + $0x4] sm:$0xf]
  %v23 = vunpack.c.l.bf16 %v21
  %v24 = vunpack.c.l.bf16 %v22
  %vm25 = vcmask 130048
  %v26 = vsel %vm25, %v23, 0.0
  %27 = vadd.xlane.f32.xlu0 %v26
  %v28 = vpop.xlane.xlu0 %27
  %v29 = vsel %vm25, %v24, 0.0
  %30 = vadd.xlane.f32.xlu0 %v29
  %v31 = vpop.xlane.xlu0 %30
  %v32 = vrcp.pop 16.0
  %v33 = vmul.f32 %v28, %v32
  %v34 = vmul.f32 %v31, %v32
  %v35 = vsub.f32 %v23, %v33
  %v36 = vsub.f32 %v24, %v34
  %v37 = vmul.f32 %v35, %v35
  %v38 = vmul.f32 %v36, %v36
  %v39 = vsel %vm25, %v37, 0.0
  %40 = vadd.xlane.f32.xlu0 %v39
  %v41 = vpop.xlane.xlu0 %40
  %v42 = vsel %vm25, %v38, 0.0
  %43 = vadd.xlane.f32.xlu0 %v42
  %v44 = vpop.xlane.xlu0 %43
  %v45 = vmul.f32 %v41, %v32
  %v46 = vmul.f32 %v44, %v32
  %v47 = vadd.f32 %v45, 1e-05
  %v48 = vadd.f32 %v46, 1e-05
  %v49 = vrsqrt.pop %v47
  %v50 = vrsqrt.pop %v48
  %v51 = vmul.f32 %v35, %v49
  %v52 = vmul.f32 %v36, %v50
  %v53 = vld [vmem:[%s3] sm:$0x1]
  %v55 = vlaneseq
  %v56 = vshrl.u32 %v55, 7
  %v57 = vsub.s32 0, %v56
  %v58 = vrot.slane %v53, %v57
  %v60 = vmul.f32 %v51, %v58
  %v61 = vmul.f32 %v52, %v58
  %v62 = vld [vmem:[%s4] sm:$0x1]
  %v64 = vlaneseq
  %v65 = vshrl.u32 %v64, 7
  %v66 = vsub.s32 0, %v65
  %v67 = vrot.slane %v62, %v66
  %v69 = vadd.f32 %v60, %v67
  %v70 = vadd.f32 %v61, %v67
  %v71 = vpack.c.bf16 %v70, %v69
  %v72 = vld [vmem:[%s1] sm:$0xf]
  %v73 = vld [vmem:[%s1 + $0x4] sm:$0xf]
  %v74 = vld [vmem:[%s2] sm:$0x1]
  %v76 = vlaneseq
  %v77 = vshrl.u32 %v76, 7
  %v78 = vsub.s32 0, %v77
  %v79 = vrot.slane %v74, %v78
  %v83 = vunpack.c.l.b16 %v72
  %v84 = vunpack.c.l.b16 %v73
  %v85 = vpack.c.b16 %v84, %v83
  %v88 = vsel %vm25, %v71, 0
  %90 = vmatprep.subr.bf16.mxu0 0
  %91 = vmatpush1.bf16.msra.mxu0 %v85
  %92 = vmatprep.subr.bf16.mxu0 0
  %93 = vmatpush1.bf16.msra.mxu0 0
  %94 = vmatprep.subr.bf16.mxu0 0
  %95 = vmatpush1.bf16.msra.mxu0 0
  %96 = vmatprep.subr.bf16.mxu0 0
  %97 = vmatpush1.bf16.msra.mxu0 0
  %98 = vmatprep.subr.bf16.mxu0 0
  %99 = vmatpush1.bf16.msra.mxu0 0
  %100 = vmatprep.subr.bf16.mxu0 0
  %101 = vmatpush1.bf16.msra.mxu0 0
  %102 = vmatprep.subr.bf16.mxu0 0
  %103 = vmatpush1.bf16.msra.mxu0 0
  %104 = vmatprep.subr.bf16.mxu0 0
  %105 = vmatpush1.bf16.msra.mxu0 0
  %106 = vmatprep.subr.bf16.mxu0 0
  %107 = vmatpush1.bf16.msra.mxu0 0
  %108 = vmatprep.subr.bf16.mxu0 0
  %109 = vmatpush1.bf16.msra.mxu0 0
  %110 = vmatprep.subr.bf16.mxu0 0
  %111 = vmatpush1.bf16.msra.mxu0 0
  %112 = vmatprep.subr.bf16.mxu0 0
  %113 = vmatpush1.bf16.msra.mxu0 0
  %114 = vmatprep.subr.bf16.mxu0 0
  %115 = vmatpush1.bf16.msra.mxu0 0
  %116 = vmatprep.subr.bf16.mxu0 0
  %117 = vmatpush1.bf16.msra.mxu0 0
  %118 = vmatprep.subr.bf16.mxu0 0
  %119 = vmatpush1.bf16.msra.mxu0 0
  %120 = vmatprep.subr.bf16.mxu0 0
  %121 = vmatpush1.bf16.msra.mxu0 0
  %122 = vmatprep.mubr.bf16.mxu0 0
  %123 = vmatmul.mubr.bf16.gmra.mrb[0].mxu0 %v88
  %v124 = vpop.f32.mrb[0].mxu0
  %v125 = vadd.f32 %v79, %v124
  %v126 = vpop.f32.mrb[0].mxu0
  %v127 = vpop.f32.mrb[0].mxu0
  %v128 = vadd.f32 %v79, %v127
  %v129 = vpop.f32.mrb[0].mxu0
  %130 = vdwg.mxu0
  %v131 = vxor.u32 %v125, 2147483648
  %v132 = vxor.u32 %v128, 2147483648
  %v133 = vmul.f32 %v131, 1.442695
  %v134 = vpow.pop %v133
  %v135 = vmul.f32 %v132, 1.442695
  %v136 = vpow.pop %v135
  %v137 = vadd.f32 %v134, 1.0
  %v138 = vadd.f32 %v136, 1.0
  %v139 = vrcp.pop %v137
  %v140 = vmul.f32 1.0, %v139
  %v141 = vrcp.pop %v138
  %v142 = vmul.f32 1.0, %v141
  %v143 = vmul.f32 %v125, %v140
  %v144 = vmul.f32 %v128, %v142
  %v145 = vpack.c.bf16 %v144, %v143
  %v147 = vunpack.c.l.b16 %v145
  %v148 = vunpack.c.h.b16 %v145
  %v149 = vpack.c.b16 %v147, %v147
  %v150 = vpack.c.b16 %v148, %v148
  %vm153 = vcmask 257024
  %154 = vst.msk [vmem:[%s5] sm:$0xf] %vm153, %v149
  %155 = vst.msk [vmem:[%s5 + $0x4] sm:$0xf] %vm153, %v150
  // Predicated region
  $region22: #{conformer_separator_forward.23} parent=0 // pred_check
    _
  $region23: #{conformer_separator_forward.23} parent=0 // pred_check_branch
    %157 = sbr.rel (0) target = $region25
  $region24: #{conformer_separator_forward.23} parent=0 // pred_region
    _
  $region25: #{conformer_separator_forward.23} parent=0 // pred_fallthru
    _
  // Predicated region
  $region26: #{conformer_separator_forward.23} parent=0 // pred_check
    _
  $region27: #{conformer_separator_forward.23} parent=0 // pred_check_branch
    %159 = sbr.rel (0) target = $region29
  $region28: #{conformer_separator_forward.23} parent=0 // pred_region
    _
  $region29: #{conformer_separator_forward.23} parent=0 // pred_fallthru
    _

// kernel: conformer_separator_forward.24
$region0: #{conformer_separator_forward.24}
  #allocation0 [shape = 'u32[]', space=smem, size = 0x4, offset = 0x4, fixed_abs, tag = 'smem constant byte address 0x4 - core index']
  #allocation1 [shape = 'u32[144,128]{1,0:T(1,128)}', space=vmem, size = 0x12000, scoped, tag = 'internal scratch']
  %s0 = inlined_call_operand.vmem [shape: bf16[16,32], index: 0, kind: input, shape index: {}]
  %s1 = inlined_call_operand.vmem [shape: bf16[32,16], index: 1, kind: input, shape index: {}]
  %s2 = inlined_call_operand.vmem [shape: f32[1,16], index: 2, kind: input, shape index: {}]
  %s3 = inlined_call_operand.vmem [shape: bf16[16,16], index: 3, kind: input, shape index: {}]
  %s4 = inlined_call_operand.vmem [shape: bf16[16,16], index: 4, kind: output, shape index: {}]
  %s5 = sld [smem:[#allocation0]]
  $region26: #{conformer_separator_forward.24} parent=0
    _
  %s7 = ssub.s32 1, %s5
  %s8 = scalar_select 0, %s7, %s5
  // Predicated region
  $region2: #{conformer_separator_forward.24} parent=0 // pred_check
    _
  $region3: #{conformer_separator_forward.24} parent=0 // pred_check_branch
    %10 = sbr.rel (0) target = $region5
  $region4: #{conformer_separator_forward.24} parent=0 // pred_region
    _
  $region5: #{conformer_separator_forward.24} parent=0 // pred_fallthru
    _
  // Predicated region
  $region6: #{conformer_separator_forward.24} parent=0 // pred_check
    _
  $region7: #{conformer_separator_forward.24} parent=0 // pred_check_branch
    %12 = sbr.rel (0) target = $region9
  $region8: #{conformer_separator_forward.24} parent=0 // pred_region
    _
  $region9: #{conformer_separator_forward.24} parent=0 // pred_fallthru
    _
  // Predicated region
  $region10: #{conformer_separator_forward.24} parent=0 // pred_check
    _
  $region11: #{conformer_separator_forward.24} parent=0 // pred_check_branch
    %14 = sbr.rel (0) target = $region13
  $region12: #{conformer_separator_forward.24} parent=0 // pred_region
    _
  $region13: #{conformer_separator_forward.24} parent=0 // pred_fallthru
    _
  // Predicated region
  $region14: #{conformer_separator_forward.24} parent=0 // pred_check
    _
  $region15: #{conformer_separator_forward.24} parent=0 // pred_check_branch
    %16 = sbr.rel (0) target = $region17
  $region16: #{conformer_separator_forward.24} parent=0 // pred_region
    _
  $region17: #{conformer_separator_forward.24} parent=0 // pred_fallthru
    _
  %v18 = vld [vmem:[%s0] sm:$0xf]
  %v19 = vld [vmem:[%s0 + $0x4] sm:$0xf]
  %v20 = vld [vmem:[%s1] sm:$0xf]
  %v21 = vld [vmem:[%s1 + $0x4] sm:$0xf]
  %v22 = vld [vmem:[%s1 + $0x8] sm:$0xf]
  %v23 = vld [vmem:[%s1 + $0xc] sm:$0xf]
  %v24 = vld [vmem:[%s2] sm:$0x1]
  %v26 = vlaneseq
  %v27 = vshrl.u32 %v26, 7
  %v28 = vsub.s32 0, %v27
  %v29 = vrot.slane %v24, %v28
  %v33 = vunpack.c.l.b16 %v18
  %v34 = vunpack.c.l.b16 %v19
  %v35 = vpack.c.b16 %v34, %v33
  %v40 = vunpack.c.l.b16 %v20
  %v41 = vunpack.c.l.b16 %v21
  %v42 = vunpack.c.l.b16 %v22
  %v43 = vunpack.c.l.b16 %v23
  %v44 = vpack.c.b16 %v41, %v40
  %v45 = vpack.c.b16 %v43, %v42
  %vm48 = vcmask 261120
  %v50 = vsel %vm48, %v35, 0
  %52 = vmatprep.subr.bf16.mxu0 0
  %53 = vmatpush1.bf16.msra.mxu0 %v44
  %54 = vmatprep.subr.bf16.mxu0 0
  %55 = vmatpush1.bf16.msra.mxu0 %v45
  %56 = vmatprep.subr.bf16.mxu0 0
  %57 = vmatpush1.bf16.msra.mxu0 0
  %58 = vmatprep.subr.bf16.mxu0 0
  %59 = vmatpush1.bf16.msra.mxu0 0
  %60 = vmatprep.subr.bf16.mxu0 0
  %61 = vmatpush1.bf16.msra.mxu0 0
  %62 = vmatprep.subr.bf16.mxu0 0
  %63 = vmatpush1.bf16.msra.mxu0 0
  %64 = vmatprep.subr.bf16.mxu0 0
  %65 = vmatpush1.bf16.msra.mxu0 0
  %66 = vmatprep.subr.bf16.mxu0 0
  %67 = vmatpush1.bf16.msra.mxu0 0
  %68 = vmatprep.subr.bf16.mxu0 0
  %69 = vmatpush1.bf16.msra.mxu0 0
  %70 = vmatprep.subr.bf16.mxu0 0
  %71 = vmatpush1.bf16.msra.mxu0 0
  %72 = vmatprep.subr.bf16.mxu0 0
  %73 = vmatpush1.bf16.msra.mxu0 0
  %74 = vmatprep.subr.bf16.mxu0 0
  %75 = vmatpush1.bf16.msra.mxu0 0
  %76 = vmatprep.subr.bf16.mxu0 0
  %77 = vmatpush1.bf16.msra.mxu0 0
  %78 = vmatprep.subr.bf16.mxu0 0
  %79 = vmatpush1.bf16.msra.mxu0 0
  %80 = vmatprep.subr.bf16.mxu0 0
  %81 = vmatpush1.bf16.msra.mxu0 0
  %82 = vmatprep.subr.bf16.mxu0 0
  %83 = vmatpush1.bf16.msra.mxu0 0
  %84 = vmatprep.mubr.bf16.mxu0 0
  %85 = vmatmul.mubr.bf16.gmra.mrb[0].mxu0 %v50
  %v86 = vpop.f32.mrb[0].mxu0
  %v87 = vadd.f32 %v29, %v86
  %v88 = vpop.f32.mrb[0].mxu0
  %v89 = vpop.f32.mrb[0].mxu0
  %v90 = vadd.f32 %v29, %v89
  %v91 = vpop.f32.mrb[0].mxu0
  %92 = vdwg.mxu0
  %v93 = vmul.f32 %v87, 0.5
  %v94 = vmul.f32 %v90, 0.5
  %v95 = vld [vmem:[%s3] sm:$0xf]
  %v96 = vld [vmem:[%s3 + $0x4] sm:$0xf]
  %v97 = vunpack.c.l.bf16 %v95
  %v98 = vunpack.c.l.bf16 %v96
  %v99 = vadd.f32 %v93, %v97
  %v100 = vadd.f32 %v94, %v98
  %v101 = vpack.c.bf16 %v100, %v99
  %v103 = vunpack.c.l.b16 %v101
  %v104 = vunpack.c.h.b16 %v101
  %v105 = vpack.c.b16 %v103, %v103
  %v106 = vpack.c.b16 %v104, %v104
  %vm109 = vcmask 125952
  %110 = vst.msk [vmem:[%s4] sm:$0xf] %vm109, %v105
  %111 = vst.msk [vmem:[%s4 + $0x4] sm:$0xf] %vm109, %v106
  // Predicated region
  $region18: #{conformer_separator_forward.24} parent=0 // pred_check
    _
  $region19: #{conformer_separator_forward.24} parent=0 // pred_check_branch
    %113 = sbr.rel (0) target = $region21
  $region20: #{conformer_separator_forward.24} parent=0 // pred_region
    _
  $region21: #{conformer_separator_forward.24} parent=0 // pred_fallthru
    _
  // Predicated region
  $region22: #{conformer_separator_forward.24} parent=0 // pred_check
    _
  $region23: #{conformer_separator_forward.24} parent=0 // pred_check_branch
    %115 = sbr.rel (0) target = $region25
  $region24: #{conformer_separator_forward.24} parent=0 // pred_region
    _
  $region25: #{conformer_separator_forward.24} parent=0 // pred_fallthru
    _

// kernel: conformer_separator_forward.25
$region0: #{conformer_separator_forward.25}
  #allocation0 [shape = 'u32[]', space=smem, size = 0x4, offset = 0x4, fixed_abs, tag = 'smem constant byte address 0x4 - core index']
  #allocation1 [shape = 'u32[144,128]{1,0:T(1,128)}', space=vmem, size = 0x12000, scoped, tag = 'internal scratch']
  %s0 = inlined_call_operand.vmem [shape: bf16[16,16], index: 0, kind: input, shape index: {}]
  %s1 = inlined_call_operand.vmem [shape: bf16[16,48], index: 1, kind: input, shape index: {}]
  %s2 = inlined_call_operand.vmem [shape: f32[1,48], index: 2, kind: input, shape index: {}]
  %s3 = inlined_call_operand.vmem [shape: f32[1,16], index: 3, kind: input, shape index: {}]
  %s4 = inlined_call_operand.vmem [shape: f32[1,16], index: 4, kind: input, shape index: {}]
  %s5 = inlined_call_operand.vmem [shape: bf16[16,48], index: 5, kind: output, shape index: {}]
  %s6 = sld [smem:[#allocation0]]
  $region30: #{conformer_separator_forward.25} parent=0
    _
  %s8 = ssub.s32 1, %s6
  %s9 = scalar_select 0, %s8, %s6
  // Predicated region
  $region2: #{conformer_separator_forward.25} parent=0 // pred_check
    _
  $region3: #{conformer_separator_forward.25} parent=0 // pred_check_branch
    %11 = sbr.rel (0) target = $region5
  $region4: #{conformer_separator_forward.25} parent=0 // pred_region
    _
  $region5: #{conformer_separator_forward.25} parent=0 // pred_fallthru
    _
  // Predicated region
  $region6: #{conformer_separator_forward.25} parent=0 // pred_check
    _
  $region7: #{conformer_separator_forward.25} parent=0 // pred_check_branch
    %13 = sbr.rel (0) target = $region9
  $region8: #{conformer_separator_forward.25} parent=0 // pred_region
    _
  $region9: #{conformer_separator_forward.25} parent=0 // pred_fallthru
    _
  // Predicated region
  $region10: #{conformer_separator_forward.25} parent=0 // pred_check
    _
  $region11: #{conformer_separator_forward.25} parent=0 // pred_check_branch
    %15 = sbr.rel (0) target = $region13
  $region12: #{conformer_separator_forward.25} parent=0 // pred_region
    _
  $region13: #{conformer_separator_forward.25} parent=0 // pred_fallthru
    _
  // Predicated region
  $region14: #{conformer_separator_forward.25} parent=0 // pred_check
    _
  $region15: #{conformer_separator_forward.25} parent=0 // pred_check_branch
    %17 = sbr.rel (0) target = $region17
  $region16: #{conformer_separator_forward.25} parent=0 // pred_region
    _
  $region17: #{conformer_separator_forward.25} parent=0 // pred_fallthru
    _
  // Predicated region
  $region18: #{conformer_separator_forward.25} parent=0 // pred_check
    _
  $region19: #{conformer_separator_forward.25} parent=0 // pred_check_branch
    %19 = sbr.rel (0) target = $region21
  $region20: #{conformer_separator_forward.25} parent=0 // pred_region
    _
  $region21: #{conformer_separator_forward.25} parent=0 // pred_fallthru
    _
  %v21 = vld [vmem:[%s0] sm:$0xf]
  %v22 = vld [vmem:[%s0 + $0x4] sm:$0xf]
  %v23 = vunpack.c.l.bf16 %v21
  %v24 = vunpack.c.l.bf16 %v22
  %vm25 = vcmask 130048
  %v26 = vsel %vm25, %v23, 0.0
  %27 = vadd.xlane.f32.xlu0 %v26
  %v28 = vpop.xlane.xlu0 %27
  %v29 = vsel %vm25, %v24, 0.0
  %30 = vadd.xlane.f32.xlu0 %v29
  %v31 = vpop.xlane.xlu0 %30
  %v32 = vrcp.pop 16.0
  %v33 = vmul.f32 %v28, %v32
  %v34 = vmul.f32 %v31, %v32
  %v35 = vsub.f32 %v23, %v33
  %v36 = vsub.f32 %v24, %v34
  %v37 = vmul.f32 %v35, %v35
  %v38 = vmul.f32 %v36, %v36
  %v39 = vsel %vm25, %v37, 0.0
  %40 = vadd.xlane.f32.xlu0 %v39
  %v41 = vpop.xlane.xlu0 %40
  %v42 = vsel %vm25, %v38, 0.0
  %43 = vadd.xlane.f32.xlu0 %v42
  %v44 = vpop.xlane.xlu0 %43
  %v45 = vmul.f32 %v41, %v32
  %v46 = vmul.f32 %v44, %v32
  %v47 = vadd.f32 %v45, 1e-05
  %v48 = vadd.f32 %v46, 1e-05
  %v49 = vrsqrt.pop %v47
  %v50 = vrsqrt.pop %v48
  %v51 = vmul.f32 %v35, %v49
  %v52 = vmul.f32 %v36, %v50
  %v53 = vld [vmem:[%s3] sm:$0x1]
  %v55 = vlaneseq
  %v56 = vshrl.u32 %v55, 7
  %v57 = vsub.s32 0, %v56
  %v58 = vrot.slane %v53, %v57
  %v60 = vmul.f32 %v51, %v58
  %v61 = vmul.f32 %v52, %v58
  %v62 = vld [vmem:[%s4] sm:$0x1]
  %v64 = vlaneseq
  %v65 = vshrl.u32 %v64, 7
  %v66 = vsub.s32 0, %v65
  %v67 = vrot.slane %v62, %v66
  %v69 = vadd.f32 %v60, %v67
  %v70 = vadd.f32 %v61, %v67
  %v71 = vpack.c.bf16 %v70, %v69
  %v72 = vld [vmem:[%s1] sm:$0xf]
  %v73 = vld [vmem:[%s1 + $0x4] sm:$0xf]
  %v74 = vld [vmem:[%s2] sm:$0x1]
  %v76 = vlaneseq
  %v77 = vshrl.u32 %v76, 7
  %v78 = vsub.s32 0, %v77
  %v79 = vrot.slane %v74, %v78
  %v83 = vunpack.c.l.b16 %v72
  %v84 = vunpack.c.l.b16 %v73
  %v85 = vpack.c.b16 %v84, %v83
  %v88 = vsel %vm25, %v71, 0
  %90 = vmatprep.subr.bf16.mxu0 0
  %91 = vmatpush1.bf16.msra.mxu0 %v85
  %92 = vmatprep.subr.bf16.mxu0 0
  %93 = vmatpush1.bf16.msra.mxu0 0
  %94 = vmatprep.subr.bf16.mxu0 0
  %95 = vmatpush1.bf16.msra.mxu0 0
  %96 = vmatprep.subr.bf16.mxu0 0
  %97 = vmatpush1.bf16.msra.mxu0 0
  %98 = vmatprep.subr.bf16.mxu0 0
  %99 = vmatpush1.bf16.msra.mxu0 0
  %100 = vmatprep.subr.bf16.mxu0 0
  %101 = vmatpush1.bf16.msra.mxu0 0
  %102 = vmatprep.subr.bf16.mxu0 0
  %103 = vmatpush1.bf16.msra.mxu0 0
  %104 = vmatprep.subr.bf16.mxu0 0
  %105 = vmatpush1.bf16.msra.mxu0 0
  %106 = vmatprep.subr.bf16.mxu0 0
  %107 = vmatpush1.bf16.msra.mxu0 0
  %108 = vmatprep.subr.bf16.mxu0 0
  %109 = vmatpush1.bf16.msra.mxu0 0
  %110 = vmatprep.subr.bf16.mxu0 0
  %111 = vmatpush1.bf16.msra.mxu0 0
  %112 = vmatprep.subr.bf16.mxu0 0
  %113 = vmatpush1.bf16.msra.mxu0 0
  %114 = vmatprep.subr.bf16.mxu0 0
  %115 = vmatpush1.bf16.msra.mxu0 0
  %116 = vmatprep.subr.bf16.mxu0 0
  %117 = vmatpush1.bf16.msra.mxu0 0
  %118 = vmatprep.subr.bf16.mxu0 0
  %119 = vmatpush1.bf16.msra.mxu0 0
  %120 = vmatprep.subr.bf16.mxu0 0
  %121 = vmatpush1.bf16.msra.mxu0 0
  %122 = vmatprep.mubr.bf16.mxu0 0
  %123 = vmatmul.mubr.bf16.gmra.mrb[0].mxu0 %v88
  %v124 = vpop.f32.mrb[0].mxu0
  %v125 = vadd.f32 %v79, %v124
  %v126 = vpop.f32.mrb[0].mxu0
  %v127 = vpop.f32.mrb[0].mxu0
  %v128 = vadd.f32 %v79, %v127
  %v129 = vpop.f32.mrb[0].mxu0
  %130 = vdwg.mxu0
  %v131 = vpack.c.bf16 %v128, %v125
  %v133 = vunpack.c.l.b16 %v131
  %v134 = vunpack.c.h.b16 %v131
  %v135 = vpack.c.b16 %v133, %v133
  %v136 = vpack.c.b16 %v134, %v134
  %vm139 = vcmask 388096
  %140 = vst.msk [vmem:[%s5] sm:$0xf] %vm139, %v135
  %141 = vst.msk [vmem:[%s5 + $0x4] sm:$0xf] %vm139, %v136
  // Predicated region
  $region22: #{conformer_separator_forward.25} parent=0 // pred_check
    _
  $region23: #{conformer_separator_forward.25} parent=0 // pred_check_branch
    %143 = sbr.rel (0) target = $region25
  $region24: #{conformer_separator_forward.25} parent=0 // pred_region
    _
  $region25: #{conformer_separator_forward.25} parent=0 // pred_fallthru
    _
  // Predicated region
  $region26: #{conformer_separator_forward.25} parent=0 // pred_check
    _
  $region27: #{conformer_separator_forward.25} parent=0 // pred_check_branch
    %145 = sbr.rel (0) target = $region29
  $region28: #{conformer_separator_forward.25} parent=0 // pred_region
    _
  $region29: #{conformer_separator_forward.25} parent=0 // pred_fallthru
    _

// kernel: conformer_separator_forward.27
$region0: #{conformer_separator_forward.27}
  #allocation0 [shape = 'u32[]', space=smem, size = 0x4, offset = 0x4, fixed_abs, tag = 'smem constant byte address 0x4 - core index']
  #allocation1 [shape = 'u32[144,128]{1,0:T(1,128)}', space=vmem, size = 0x12000, scoped, tag = 'internal scratch']
  %s0 = inlined_call_operand.vmem [shape: bf16[16,16], index: 0, kind: input, shape index: {}]
  %s1 = inlined_call_operand.vmem [shape: bf16[16,16], index: 1, kind: input, shape index: {}]
  %s2 = inlined_call_operand.vmem [shape: f32[1,16], index: 2, kind: input, shape index: {}]
  %s3 = inlined_call_operand.vmem [shape: bf16[16,16], index: 3, kind: input, shape index: {}]
  %s4 = inlined_call_operand.vmem [shape: bf16[16,16], index: 4, kind: output, shape index: {}]
  %s5 = sld [smem:[#allocation0]]
  $region26: #{conformer_separator_forward.27} parent=0
    _
  %s7 = ssub.s32 1, %s5
  %s8 = scalar_select 0, %s7, %s5
  // Predicated region
  $region2: #{conformer_separator_forward.27} parent=0 // pred_check
    _
  $region3: #{conformer_separator_forward.27} parent=0 // pred_check_branch
    %10 = sbr.rel (0) target = $region5
  $region4: #{conformer_separator_forward.27} parent=0 // pred_region
    _
  $region5: #{conformer_separator_forward.27} parent=0 // pred_fallthru
    _
  // Predicated region
  $region6: #{conformer_separator_forward.27} parent=0 // pred_check
    _
  $region7: #{conformer_separator_forward.27} parent=0 // pred_check_branch
    %12 = sbr.rel (0) target = $region9
  $region8: #{conformer_separator_forward.27} parent=0 // pred_region
    _
  $region9: #{conformer_separator_forward.27} parent=0 // pred_fallthru
    _
  // Predicated region
  $region10: #{conformer_separator_forward.27} parent=0 // pred_check
    _
  $region11: #{conformer_separator_forward.27} parent=0 // pred_check_branch
    %14 = sbr.rel (0) target = $region13
  $region12: #{conformer_separator_forward.27} parent=0 // pred_region
    _
  $region13: #{conformer_separator_forward.27} parent=0 // pred_fallthru
    _
  // Predicated region
  $region14: #{conformer_separator_forward.27} parent=0 // pred_check
    _
  $region15: #{conformer_separator_forward.27} parent=0 // pred_check_branch
    %16 = sbr.rel (0) target = $region17
  $region16: #{conformer_separator_forward.27} parent=0 // pred_region
    _
  $region17: #{conformer_separator_forward.27} parent=0 // pred_fallthru
    _
  %v18 = vld [vmem:[%s0] sm:$0xf]
  %v19 = vld [vmem:[%s0 + $0x4] sm:$0xf]
  %v20 = vld [vmem:[%s1] sm:$0xf]
  %v21 = vld [vmem:[%s1 + $0x4] sm:$0xf]
  %v22 = vld [vmem:[%s2] sm:$0x1]
  %v24 = vlaneseq
  %v25 = vshrl.u32 %v24, 7
  %v26 = vsub.s32 0, %v25
  %v27 = vrot.slane %v22, %v26
  %v31 = vunpack.c.l.b16 %v18
  %v32 = vunpack.c.l.b16 %v19
  %v33 = vpack.c.b16 %v32, %v31
  %v36 = vunpack.c.l.b16 %v20
  %v37 = vunpack.c.l.b16 %v21
  %v38 = vpack.c.b16 %v37, %v36
  %vm40 = vcmask 130048
  %v42 = vsel %vm40, %v33, 0
  %44 = vmatprep.subr.bf16.mxu0 0
  %45 = vmatpush1.bf16.msra.mxu0 %v38
  %46 = vmatprep.subr.bf16.mxu0 0
  %47 = vmatpush1.bf16.msra.mxu0 0
  %48 = vmatprep.subr.bf16.mxu0 0
  %49 = vmatpush1.bf16.msra.mxu0 0
  %50 = vmatprep.subr.bf16.mxu0 0
  %51 = vmatpush1.bf16.msra.mxu0 0
  %52 = vmatprep.subr.bf16.mxu0 0
  %53 = vmatpush1.bf16.msra.mxu0 0
  %54 = vmatprep.subr.bf16.mxu0 0
  %55 = vmatpush1.bf16.msra.mxu0 0
  %56 = vmatprep.subr.bf16.mxu0 0
  %57 = vmatpush1.bf16.msra.mxu0 0
  %58 = vmatprep.subr.bf16.mxu0 0
  %59 = vmatpush1.bf16.msra.mxu0 0
  %60 = vmatprep.subr.bf16.mxu0 0
  %61 = vmatpush1.bf16.msra.mxu0 0
  %62 = vmatprep.subr.bf16.mxu0 0
  %63 = vmatpush1.bf16.msra.mxu0 0
  %64 = vmatprep.subr.bf16.mxu0 0
  %65 = vmatpush1.bf16.msra.mxu0 0
  %66 = vmatprep.subr.bf16.mxu0 0
  %67 = vmatpush1.bf16.msra.mxu0 0
  %68 = vmatprep.subr.bf16.mxu0 0
  %69 = vmatpush1.bf16.msra.mxu0 0
  %70 = vmatprep.subr.bf16.mxu0 0
  %71 = vmatpush1.bf16.msra.mxu0 0
  %72 = vmatprep.subr.bf16.mxu0 0
  %73 = vmatpush1.bf16.msra.mxu0 0
  %74 = vmatprep.subr.bf16.mxu0 0
  %75 = vmatpush1.bf16.msra.mxu0 0
  %76 = vmatprep.mubr.bf16.mxu0 0
  %77 = vmatmul.mubr.bf16.gmra.mrb[0].mxu0 %v42
  %v78 = vpop.f32.mrb[0].mxu0
  %v79 = vadd.f32 %v27, %v78
  %v80 = vpop.f32.mrb[0].mxu0
  %v81 = vpop.f32.mrb[0].mxu0
  %v82 = vadd.f32 %v27, %v81
  %v83 = vpop.f32.mrb[0].mxu0
  %84 = vdwg.mxu0
  %v85 = vld [vmem:[%s3] sm:$0xf]
  %v86 = vld [vmem:[%s3 + $0x4] sm:$0xf]
  %v87 = vunpack.c.l.bf16 %v85
  %v88 = vunpack.c.l.bf16 %v86
  %v89 = vadd.f32 %v79, %v87
  %v90 = vadd.f32 %v82, %v88
  %v91 = vpack.c.bf16 %v90, %v89
  %v93 = vunpack.c.l.b16 %v91
  %v94 = vunpack.c.h.b16 %v91
  %v95 = vpack.c.b16 %v93, %v93
  %v96 = vpack.c.b16 %v94, %v94
  %vm99 = vcmask 125952
  %100 = vst.msk [vmem:[%s4] sm:$0xf] %vm99, %v95
  %101 = vst.msk [vmem:[%s4 + $0x4] sm:$0xf] %vm99, %v96
  // Predicated region
  $region18: #{conformer_separator_forward.27} parent=0 // pred_check
    _
  $region19: #{conformer_separator_forward.27} parent=0 // pred_check_branch
    %103 = sbr.rel (0) target = $region21
  $region20: #{conformer_separator_forward.27} parent=0 // pred_region
    _
  $region21: #{conformer_separator_forward.27} parent=0 // pred_fallthru
    _
  // Predicated region
  $region22: #{conformer_separator_forward.27} parent=0 // pred_check
    _
  $region23: #{conformer_separator_forward.27} parent=0 // pred_check_branch
    %105 = sbr.rel (0) target = $region25
  $region24: #{conformer_separator_forward.27} parent=0 // pred_region
    _
  $region25: #{conformer_separator_forward.27} parent=0 // pred_fallthru
    _

// kernel: conformer_separator_forward.26
$region0: #{conformer_separator_forward.26}
  #allocation0 [shape = 'u32[]', space=smem, size = 0x4, offset = 0x4, fixed_abs, tag = 'smem constant byte address 0x4 - core index']
  #allocation1 [shape = 'u32[144,128]{1,0:T(1,128)}', space=vmem, size = 0x12000, scoped, tag = 'internal scratch']
  %s0 = inlined_call_operand.vmem [shape: bf16[2,8,48], index: 0, kind: input, shape index: {}]
  %s1 = inlined_call_operand.vmem [shape: bf16[2,8,16], index: 1, kind: output, shape index: {}]
  %s2 = sld [smem:[#allocation0]]
  $region37: #{conformer_separator_forward.26} parent=0
    _
  %s4 = ssub.s32 1, %s2
  %s5 = scalar_select 0, %s4, %s2
  loop: start=0, step=1, limit=4
  $region2: #{conformer_separator_forward.26} parent=0 // loop_pre_header
    _
  $region3: #{conformer_separator_forward.26} parent=0 // loop_header
    %s7 = sphi 0, %s11
    %p8 = scmp.ge.s32.totalorder %s7, 4
    %s17 = sphi 0, %s19
    %s20 = sphi 0, %s17
    %s21 = sphi 0, %s20
    %s37 = sphi 0, %s21
    %s43 = sphi 0, %s45
    %s46 = sphi 0, %s43
    %s47 = sphi 0, %s46
    %s63 = sphi 0, %s47
  $region4: #{conformer_separator_forward.26} parent=0 // loop_header_branch
    %10 = sbr.rel (%p8) target = $region8
  $region5: #{conformer_separator_forward.26} parent=0 // loop_body
    %s12 = ssub.s32 %s7, 1
    %s13 = ssub.s32 %s7, 2
    %s14 = sadd.s32 %s7, 1
    %s15 = ssub.s32 %s7, %s14
    %p16 = scmp.eq.s32.totalorder %s15, 0
    %s18 = sadd.s32 %s17, 1
    %s19 = scalar_select %p16, %s17, %s18
    %p22 = pneg %p16
    %p23 = scmp.eq.s32.totalorder %s7, 1
    %p24 = por %p22, %p23
    %p25 = scmp.ne.s32.totalorder %s17, %s20
    %p26 = scmp.eq.s32.totalorder %s7, 0
    %p27 = por %p25, %p26
    %p28 = scmp.ne.s32.totalorder %s17, %s20
    %p29 = scmp.eq.s32.totalorder %s12, 1
    %p30 = por %p28, %p29
    %p31 = scmp.ne.s32.totalorder %s20, %s21
    %p32 = scmp.eq.s32.totalorder %s12, 0
    %p33 = por %p31, %p32
    %p34 = scmp.ne.s32.totalorder %s20, %s21
    %p35 = scmp.eq.s32.totalorder %s13, 1
    %p36 = por %p34, %p35
    %p38 = scmp.ne.s32.totalorder %s21, %s37
    %p39 = scmp.eq.s32.totalorder %s13, 0
    %p40 = por %p38, %p39
    %s41 = ssub.s32 %s7, %s14
    %p42 = scmp.eq.s32.totalorder %s41, 0
    %s44 = sadd.s32 %s43, 1
    %s45 = scalar_select %p42, %s43, %s44
    %p48 = pneg %p42
    %p49 = scmp.eq.s32.totalorder %s7, 1
    %p50 = por %p48, %p49
    %p51 = scmp.ne.s32.totalorder %s43, %s46
    %p52 = scmp.eq.s32.totalorder %s7, 0
    %p53 = por %p51, %p52
    %p54 = scmp.ne.s32.totalorder %s43, %s46
    %p55 = scmp.eq.s32.totalorder %s12, 1
    %p56 = por %p54, %p55
    %p57 = scmp.ne.s32.totalorder %s46, %s47
    %p58 = scmp.eq.s32.totalorder %s12, 0
    %p59 = por %p57, %p58
    %p60 = scmp.ne.s32.totalorder %s46, %s47
    %p61 = scmp.eq.s32.totalorder %s13, 1
    %p62 = por %p60, %p61
    %p64 = scmp.ne.s32.totalorder %s47, %s63
    %p65 = scmp.eq.s32.totalorder %s13, 0
    %p66 = por %p64, %p65
    %p67 = scmp.le.s32.totalorder 1, %s7
    %p68 = scmp.lt.s32.totalorder %s7, 3
    %p69 = pnand %p67, %p68
    %p70 = pneg %p69
    // Predicated region
    $region9: #{conformer_separator_forward.26} parent=5 // pred_check
      _
    $region10: #{conformer_separator_forward.26} parent=5 // pred_check_branch
      %72 = sbr.rel (%p69) target = $region12
    $region11: #{conformer_separator_forward.26} parent=5 // pred_region
      %s73 = ssub.s32 %s7, 1
    $region12: #{conformer_separator_forward.26} parent=5 // pred_fallthru
      _
    %p74 = scmp.lt.s32.totalorder %s7, 2
    // Predicated region
    $region13: #{conformer_separator_forward.26} parent=5 // pred_check
      %p75 = pneg %p74
    $region14: #{conformer_separator_forward.26} parent=5 // pred_check_branch
      %77 = sbr.rel (%p75) target = $region16
    $region15: #{conformer_separator_forward.26} parent=5 // pred_region
      // Predicated region
      $region17: #{conformer_separator_forward.26} parent=15 // pred_check
        %p78 = pneg %p27
      $region18: #{conformer_separator_forward.26} parent=15 // pred_check_branch
        %80 = sbr.rel (%p78) target = $region20
      $region19: #{conformer_separator_forward.26} parent=15 // pred_region
        %p81 = scmp.lt.s32.totalorder %s7, 1
        %s82 = scalar_select %p81, %s7, 1
        %s83 = smul.addr %s82, 4
        %s84 = scalar_lea.vmem %s0, %s83
      $region20: #{conformer_separator_forward.26} parent=15 // pred_fallthru
        _
    $region16: #{conformer_separator_forward.26} parent=5 // pred_fallthru
      _
    %p85 = scmp.le.s32.totalorder 1, %s7
    %p86 = scmp.lt.s32.totalorder %s7, 3
    %p87 = pnand %p85, %p86
    %p88 = pneg %p87
    // Predicated region
    $region21: #{conformer_separator_forward.26} parent=5 // pred_check
      _
    $region22: #{conformer_separator_forward.26} parent=5 // pred_check_branch
      %90 = sbr.rel (%p87) target = $region24
    $region23: #{conformer_separator_forward.26} parent=5 // pred_region
      %s91 = ssub.s32 %s7, 1
      %p92 = scmp.lt.s32.totalorder %s12, 1
      %s93 = scalar_select %p92, %s12, 1
      %s94 = smul.addr %s93, 4
      %s95 = scalar_lea.vmem %s0, %s94
      %p96 = pneg %p33
      %p97 = pneg %p30
      %p98 = pneg %p59
      %p99 = pneg %p56
      %p100 = scmp.lt.s32.totalorder %s12, 1
      %s101 = scalar_select %p100, %s12, 1
      %s102 = smul.addr %s101, 4
      %s103 = scalar_lea.vmem %s1, %s102
      %p104 = scmp.lt.s32.totalorder %s12, 1
      %s105 = scalar_select %p104, %s12, 1
      %s106 = smul.addr %s105, 4
      %s107 = scalar_lea.vmem %s0, %s106
      %p108 = scmp.lt.s32.totalorder %s12, 1
      %s109 = scalar_select %p108, %s12, 1
      %s110 = smul.addr %s109, 4
      %s111 = scalar_lea.vmem %s1, %s110
      %v113 = vld [vmem:[%s107] sm:$0xf]
      %v114 = vunpack.c.l.bf16 %v113
      %v115 = vmul.f32 %v114, 0.5
      %v116 = vpack.c.bf16 %v115, %v115
      %v118 = vunpack.c.l.b16 %v113
      %v119 = vpack.c.b16 %v118, %v118
      %120 = vrot.lane.b32.xlu0 %v119, 112
      %v121 = vpop.permute.xlu0 %120
      %vm122 = vcmask 31744
      %v124 = vsel %vm122, %v116, 0
      %v127 = vsel %vm122, %v121, 0
      %129 = vmatprep.subr.bf16.mxu0 0
      %130 = vmatpush1.bf16.xpose.msra.mxu0 %v127
      %131 = vmatprep.subr.bf16.mxu0 0
      %132 = vmatpush1.bf16.xpose.msra.mxu0 0
      %133 = vmatprep.subr.bf16.mxu0 0
      %134 = vmatpush1.bf16.xpose.msra.mxu0 0
      %135 = vmatprep.subr.bf16.mxu0 0
      %136 = vmatpush1.bf16.xpose.msra.mxu0 0
      %137 = vmatprep.subr.bf16.mxu0 0
      %138 = vmatpush1.bf16.xpose.msra.mxu0 0
      %139 = vmatprep.subr.bf16.mxu0 0
      %140 = vmatpush1.bf16.xpose.msra.mxu0 0
      %141 = vmatprep.subr.bf16.mxu0 0
      %142 = vmatpush1.bf16.xpose.msra.mxu0 0
      %143 = vmatprep.subr.bf16.mxu0 0
      %144 = vmatpush1.bf16.xpose.msra.mxu0 0
      %145 = vmatprep.subr.bf16.mxu0 0
      %146 = vmatpush1.bf16.xpose.msra.mxu0 0
      %147 = vmatprep.subr.bf16.mxu0 0
      %148 = vmatpush1.bf16.xpose.msra.mxu0 0
      %149 = vmatprep.subr.bf16.mxu0 0
      %150 = vmatpush1.bf16.xpose.msra.mxu0 0
      %151 = vmatprep.subr.bf16.mxu0 0
      %152 = vmatpush1.bf16.xpose.msra.mxu0 0
      %153 = vmatprep.subr.bf16.mxu0 0
      %154 = vmatpush1.bf16.xpose.msra.mxu0 0
      %155 = vmatprep.subr.bf16.mxu0 0
      %156 = vmatpush1.bf16.xpose.msra.mxu0 0
      %157 = vmatprep.subr.bf16.mxu0 0
      %158 = vmatpush1.bf16.xpose.msra.mxu0 0
      %159 = vmatprep.subr.bf16.mxu0 0
      %160 = vmatpush1.bf16.xpose.msra.mxu0 0
      %161 = vmatprep.mubr.bf16.mxu0 0
      %162 = vmatmul.mubr.bf16.gmra.mrb[0].mxu0 %v124
      %v163 = vpop.f32.mrb[0].mxu0
      %v164 = vadd.f32 0.0, %v163
      %v165 = vpop.f32.mrb[0].mxu0
      %v166 = vpop.f32.mrb[0].mxu0
      %v167 = vpop.f32.mrb[0].mxu0
      %168 = vdwg.mxu0
      %vm169 = vcmask 64512
      %v170 = vsel %vm169, %v164, -inf
      %171 = vmax.xlane.f32.xlu0 %v170
      %v172 = vpop.xlane.xlu0 %171
      %v173 = vsub.f32 %v164, %v172
      %v174 = vmul.f32 %v173, 1.442695
      %v175 = vpow.pop %v174
      %v176 = vsel %vm169, %v175, 0.0
      %177 = vadd.xlane.f32.xlu0 %v176
      %v178 = vpop.xlane.xlu0 %177
      %v179 = vrcp.pop %v178
      %v180 = vmul.f32 %v175, %v179
      %v181 = vpack.c.bf16 %v180, %v180
      %182 = vrot.lane.b32.xlu0 %v119, 96
      %v183 = vpop.permute.xlu0 %182
      %v185 = vsel %vm169, %v181, 0
      %vm187 = vcmask 1043456
      %v189 = vsel %vm187, %v183, 0
      %191 = vmatprep.subr.bf16.mxu0 0
      %192 = vmatpush1.bf16.msra.mxu0 %v189
      %193 = vmatprep.subr.bf16.mxu0 0
      %194 = vmatpush1.bf16.msra.mxu0 0
      %195 = vmatprep.subr.bf16.mxu0 0
      %196 = vmatpush1.bf16.msra.mxu0 0
      %197 = vmatprep.subr.bf16.mxu0 0
      %198 = vmatpush1.bf16.msra.mxu0 0
      %199 = vmatprep.subr.bf16.mxu0 0
      %200 = vmatpush1.bf16.msra.mxu0 0
      %201 = vmatprep.subr.bf16.mxu0 0
      %202 = vmatpush1.bf16.msra.mxu0 0
      %203 = vmatprep.subr.bf16.mxu0 0
      %204 = vmatpush1.bf16.msra.mxu0 0
      %205 = vmatprep.subr.bf16.mxu0 0
      %206 = vmatpush1.bf16.msra.mxu0 0
      %207 = vmatprep.subr.bf16.mxu0 0
      %208 = vmatpush1.bf16.msra.mxu0 0
      %209 = vmatprep.subr.bf16.mxu0 0
      %210 = vmatpush1.bf16.msra.mxu0 0
      %211 = vmatprep.subr.bf16.mxu0 0
      %212 = vmatpush1.bf16.msra.mxu0 0
      %213 = vmatprep.subr.bf16.mxu0 0
      %214 = vmatpush1.bf16.msra.mxu0 0
      %215 = vmatprep.subr.bf16.mxu0 0
      %216 = vmatpush1.bf16.msra.mxu0 0
      %217 = vmatprep.subr.bf16.mxu0 0
      %218 = vmatpush1.bf16.msra.mxu0 0
      %219 = vmatprep.subr.bf16.mxu0 0
      %220 = vmatpush1.bf16.msra.mxu0 0
      %221 = vmatprep.subr.bf16.mxu0 0
      %222 = vmatpush1.bf16.msra.mxu0 0
      %223 = vmatprep.mubr.bf16.mxu0 0
      %224 = vmatmul.mubr.bf16.gmra.mrb[0].mxu0 %v185
      %v225 = vpop.f32.mrb[0].mxu0
      %v226 = vadd.f32 0.0, %v225
      %v227 = vpop.f32.mrb[0].mxu0
      %v228 = vpop.f32.mrb[0].mxu0
      %v229 = vpop.f32.mrb[0].mxu0
      %230 = vdwg.mxu0
      %232 = vrot.lane.b32.xlu0 %v116, 124
      %v233 = vpop.permute.xlu0 %232
      %234 = vrot.lane.b32.xlu0 %v119, 108
      %v235 = vpop.permute.xlu0 %234
      %v237 = vsel %vm122, %v233, 0
      %v240 = vsel %vm122, %v235, 0
      %242 = vmatprep.subr.bf16.mxu0 0
      %243 = vmatpush1.bf16.xpose.msra.mxu0 %v240
      %244 = vmatprep.subr.bf16.mxu0 0
      %245 = vmatpush1.bf16.xpose.msra.mxu0 0
      %246 = vmatprep.subr.bf16.mxu0 0
      %247 = vmatpush1.bf16.xpose.msra.mxu0 0
      %248 = vmatprep.subr.bf16.mxu0 0
      %249 = vmatpush1.bf16.xpose.msra.mxu0 0
      %250 = vmatprep.subr.bf16.mxu0 0
      %251 = vmatpush1.bf16.xpose.msra.mxu0 0
      %252 = vmatprep.subr.bf16.mxu0 0
      %253 = vmatpush1.bf16.xpose.msra.mxu0 0
      %254 = vmatprep.subr.bf16.mxu0 0
      %255 = vmatpush1.bf16.xpose.msra.mxu0 0
      %256 = vmatprep.subr.bf16.mxu0 0
      %257 = vmatpush1.bf16.xpose.msra.mxu0 0
      %258 = vmatprep.subr.bf16.mxu0 0
      %259 = vmatpush1.bf16.xpose.msra.mxu0 0
      %260 = vmatprep.subr.bf16.mxu0 0
      %261 = vmatpush1.bf16.xpose.msra.mxu0 0
      %262 = vmatprep.subr.bf16.mxu0 0
      %263 = vmatpush1.bf16.xpose.msra.mxu0 0
      %264 = vmatprep.subr.bf16.mxu0 0
      %265 = vmatpush1.bf16.xpose.msra.mxu0 0
      %266 = vmatprep.subr.bf16.mxu0 0
      %267 = vmatpush1.bf16.xpose.msra.mxu0 0
      %268 = vmatprep.subr.bf16.mxu0 0
      %269 = vmatpush1.bf16.xpose.msra.mxu0 0
      %270 = vmatprep.subr.bf16.mxu0 0
      %271 = vmatpush1.bf16.xpose.msra.mxu0 0
      %272 = vmatprep.subr.bf16.mxu0 0
      %273 = vmatpush1.bf16.xpose.msra.mxu0 0
      %274 = vmatprep.mubr.bf16.mxu0 0
      %275 = vmatmul.mubr.bf16.gmra.mrb[0].mxu0 %v237
      %v276 = vpop.f32.mrb[0].mxu0
      %v277 = vadd.f32 0.0, %v276
      %v278 = vpop.f32.mrb[0].mxu0
      %v279 = vpop.f32.mrb[0].mxu0
      %v280 = vpop.f32.mrb[0].mxu0
      %281 = vdwg.mxu0
      %v282 = vsel %vm169, %v277, -inf
      %283 = vmax.xlane.f32.xlu0 %v282
      %v284 = vpop.xlane.xlu0 %283
      %v285 = vsub.f32 %v277, %v284
      %v286 = vmul.f32 %v285, 1.442695
      %v287 = vpow.pop %v286
      %v288 = vsel %vm169, %v287, 0.0
      %289 = vadd.xlane.f32.xlu0 %v288
      %v290 = vpop.xlane.xlu0 %289
      %v291 = vrcp.pop %v290
      %v292 = vmul.f32 %v287, %v291
      %v293 = vpack.c.bf16 %v292, %v292
      %294 = vrot.lane.b32.xlu0 %v119, 92
      %v295 = vpop.permute.xlu0 %294
      %v297 = vsel %vm169, %v293, 0
      %v300 = vsel %vm187, %v295, 0
      %302 = vmatprep.subr.bf16.mxu0 0
      %303 = vmatpush1.bf16.msra.mxu0 %v300
      %304 = vmatprep.subr.bf16.mxu0 0
      %305 = vmatpush1.bf16.msra.mxu0 0
      %306 = vmatprep.subr.bf16.mxu0 0
      %307 = vmatpush1.bf16.msra.mxu0 0
      %308 = vmatprep.subr.bf16.mxu0 0
      %309 = vmatpush1.bf16.msra.mxu0 0
      %310 = vmatprep.subr.bf16.mxu0 0
      %311 = vmatpush1.bf16.msra.mxu0 0
      %312 = vmatprep.subr.bf16.mxu0 0
      %313 = vmatpush1.bf16.msra.mxu0 0
      %314 = vmatprep.subr.bf16.mxu0 0
      %315 = vmatpush1.bf16.msra.mxu0 0
      %316 = vmatprep.subr.bf16.mxu0 0
      %317 = vmatpush1.bf16.msra.mxu0 0
      %318 = vmatprep.subr.bf16.mxu0 0
      %319 = vmatpush1.bf16.msra.mxu0 0
      %320 = vmatprep.subr.bf16.mxu0 0
      %321 = vmatpush1.bf16.msra.mxu0 0
      %322 = vmatprep.subr.bf16.mxu0 0
      %323 = vmatpush1.bf16.msra.mxu0 0
      %324 = vmatprep.subr.bf16.mxu0 0
      %325 = vmatpush1.bf16.msra.mxu0 0
      %326 = vmatprep.subr.bf16.mxu0 0
      %327 = vmatpush1.bf16.msra.mxu0 0
      %328 = vmatprep.subr.bf16.mxu0 0
      %329 = vmatpush1.bf16.msra.mxu0 0
      %330 = vmatprep.subr.bf16.mxu0 0
      %331 = vmatpush1.bf16.msra.mxu0 0
      %332 = vmatprep.subr.bf16.mxu0 0
      %333 = vmatpush1.bf16.msra.mxu0 0
      %334 = vmatprep.mubr.bf16.mxu0 0
      %335 = vmatmul.mubr.bf16.gmra.mrb[0].mxu0 %v297
      %v336 = vpop.f32.mrb[0].mxu0
      %v337 = vadd.f32 0.0, %v336
      %v338 = vpop.f32.mrb[0].mxu0
      %v339 = vpop.f32.mrb[0].mxu0
      %v340 = vpop.f32.mrb[0].mxu0
      %341 = vdwg.mxu0
      %342 = vrot.lane.b32.xlu0 %v116, 120
      %v343 = vpop.permute.xlu0 %342
      %344 = vrot.lane.b32.xlu0 %v119, 104
      %v345 = vpop.permute.xlu0 %344
      %v347 = vsel %vm122, %v343, 0
      %v350 = vsel %vm122, %v345, 0
      %352 = vmatprep.subr.bf16.mxu0 0
      %353 = vmatpush1.bf16.xpose.msra.mxu0 %v350
      %354 = vmatprep.subr.bf16.mxu0 0
      %355 = vmatpush1.bf16.xpose.msra.mxu0 0
      %356 = vmatprep.subr.bf16.mxu0 0
      %357 = vmatpush1.bf16.xpose.msra.mxu0 0
      %358 = vmatprep.subr.bf16.mxu0 0
      %359 = vmatpush1.bf16.xpose.msra.mxu0 0
      %360 = vmatprep.subr.bf16.mxu0 0
      %361 = vmatpush1.bf16.xpose.msra.mxu0 0
      %362 = vmatprep.subr.bf16.mxu0 0
      %363 = vmatpush1.bf16.xpose.msra.mxu0 0
      %364 = vmatprep.subr.bf16.mxu0 0
      %365 = vmatpush1.bf16.xpose.msra.mxu0 0
      %366 = vmatprep.subr.bf16.mxu0 0
      %367 = vmatpush1.bf16.xpose.msra.mxu0 0
      %368 = vmatprep.subr.bf16.mxu0 0
      %369 = vmatpush1.bf16.xpose.msra.mxu0 0
      %370 = vmatprep.subr.bf16.mxu0 0
      %371 = vmatpush1.bf16.xpose.msra.mxu0 0
      %372 = vmatprep.subr.bf16.mxu0 0
      %373 = vmatpush1.bf16.xpose.msra.mxu0 0
      %374 = vmatprep.subr.bf16.mxu0 0
      %375 = vmatpush1.bf16.xpose.msra.mxu0 0
      %376 = vmatprep.subr.bf16.mxu0 0
      %377 = vmatpush1.bf16.xpose.msra.mxu0 0
      %378 = vmatprep.subr.bf16.mxu0 0
      %379 = vmatpush1.bf16.xpose.msra.mxu0 0
      %380 = vmatprep.subr.bf16.mxu0 0
      %381 = vmatpush1.bf16.xpose.msra.mxu0 0
      %382 = vmatprep.subr.bf16.mxu0 0
      %383 = vmatpush1.bf16.xpose.msra.mxu0 0
      %384 = vmatprep.mubr.bf16.mxu0 0
      %385 = vmatmul.mubr.bf16.gmra.mrb[0].mxu0 %v347
      %v386 = vpop.f32.mrb[0].mxu0
      %v387 = vadd.f32 0.0, %v386
      %v388 = vpop.f32.mrb[0].mxu0
      %v389 = vpop.f32.mrb[0].mxu0
      %v390 = vpop.f32.mrb[0].mxu0
      %391 = vdwg.mxu0
      %v392 = vsel %vm169, %v387, -inf
      %393 = vmax.xlane.f32.xlu0 %v392
      %v394 = vpop.xlane.xlu0 %393
      %v395 = vsub.f32 %v387, %v394
      %v396 = vmul.f32 %v395, 1.442695
      %v397 = vpow.pop %v396
      %v398 = vsel %vm169, %v397, 0.0
      %399 = vadd.xlane.f32.xlu0 %v398
      %v400 = vpop.xlane.xlu0 %399
      %v401 = vrcp.pop %v400
      %v402 = vmul.f32 %v397, %v401
      %v403 = vpack.c.bf16 %v402, %v402
      %404 = vrot.lane.b32.xlu0 %v119, 88
      %v405 = vpop.permute.xlu0 %404
      %v407 = vsel %vm169, %v403, 0
      %v410 = vsel %vm187, %v405, 0
      %412 = vmatprep.subr.bf16.mxu0 0
      %413 = vmatpush1.bf16.msra.mxu0 %v410
      %414 = vmatprep.subr.bf16.mxu0 0
      %415 = vmatpush1.bf16.msra.mxu0 0
      %416 = vmatprep.subr.bf16.mxu0 0
      %417 = vmatpush1.bf16.msra.mxu0 0
      %418 = vmatprep.subr.bf16.mxu0 0
      %419 = vmatpush1.bf16.msra.mxu0 0
      %420 = vmatprep.subr.bf16.mxu0 0
      %421 = vmatpush1.bf16.msra.mxu0 0
      %422 = vmatprep.subr.bf16.mxu0 0
      %423 = vmatpush1.bf16.msra.mxu0 0
      %424 = vmatprep.subr.bf16.mxu0 0
      %425 = vmatpush1.bf16.msra.mxu0 0
      %426 = vmatprep.subr.bf16.mxu0 0
      %427 = vmatpush1.bf16.msra.mxu0 0
      %428 = vmatprep.subr.bf16.mxu0 0
      %429 = vmatpush1.bf16.msra.mxu0 0
      %430 = vmatprep.subr.bf16.mxu0 0
      %431 = vmatpush1.bf16.msra.mxu0 0
      %432 = vmatprep.subr.bf16.mxu0 0
      %433 = vmatpush1.bf16.msra.mxu0 0
      %434 = vmatprep.subr.bf16.mxu0 0
      %435 = vmatpush1.bf16.msra.mxu0 0
      %436 = vmatprep.subr.bf16.mxu0 0
      %437 = vmatpush1.bf16.msra.mxu0 0
      %438 = vmatprep.subr.bf16.mxu0 0
      %439 = vmatpush1.bf16.msra.mxu0 0
      %440 = vmatprep.subr.bf16.mxu0 0
      %441 = vmatpush1.bf16.msra.mxu0 0
      %442 = vmatprep.subr.bf16.mxu0 0
      %443 = vmatpush1.bf16.msra.mxu0 0
      %444 = vmatprep.mubr.bf16.mxu0 0
      %445 = vmatmul.mubr.bf16.gmra.mrb[0].mxu0 %v407
      %v446 = vpop.f32.mrb[0].mxu0
      %v447 = vadd.f32 0.0, %v446
      %v448 = vpop.f32.mrb[0].mxu0
      %v449 = vpop.f32.mrb[0].mxu0
      %v450 = vpop.f32.mrb[0].mxu0
      %451 = vdwg.mxu0
      %452 = vrot.lane.b32.xlu0 %v116, 116
      %v453 = vpop.permute.xlu0 %452
      %454 = vrot.lane.b32.xlu0 %v119, 100
      %v455 = vpop.permute.xlu0 %454
      %v457 = vsel %vm122, %v453, 0
      %v460 = vsel %vm122, %v455, 0
      %462 = vmatprep.subr.bf16.mxu0 0
      %463 = vmatpush1.bf16.xpose.msra.mxu0 %v460
      %464 = vmatprep.subr.bf16.mxu0 0
      %465 = vmatpush1.bf16.xpose.msra.mxu0 0
      %466 = vmatprep.subr.bf16.mxu0 0
      %467 = vmatpush1.bf16.xpose.msra.mxu0 0
      %468 = vmatprep.subr.bf16.mxu0 0
      %469 = vmatpush1.bf16.xpose.msra.mxu0 0
      %470 = vmatprep.subr.bf16.mxu0 0
      %471 = vmatpush1.bf16.xpose.msra.mxu0 0
      %472 = vmatprep.subr.bf16.mxu0 0
      %473 = vmatpush1.bf16.xpose.msra.mxu0 0
      %474 = vmatprep.subr.bf16.mxu0 0
      %475 = vmatpush1.bf16.xpose.msra.mxu0 0
      %476 = vmatprep.subr.bf16.mxu0 0
      %477 = vmatpush1.bf16.xpose.msra.mxu0 0
      %478 = vmatprep.subr.bf16.mxu0 0
      %479 = vmatpush1.bf16.xpose.msra.mxu0 0
      %480 = vmatprep.subr.bf16.mxu0 0
      %481 = vmatpush1.bf16.xpose.msra.mxu0 0
      %482 = vmatprep.subr.bf16.mxu0 0
      %483 = vmatpush1.bf16.xpose.msra.mxu0 0
      %484 = vmatprep.subr.bf16.mxu0 0
      %485 = vmatpush1.bf16.xpose.msra.mxu0 0
      %486 = vmatprep.subr.bf16.mxu0 0
      %487 = vmatpush1.bf16.xpose.msra.mxu0 0
      %488 = vmatprep.subr.bf16.mxu0 0
      %489 = vmatpush1.bf16.xpose.msra.mxu0 0
      %490 = vmatprep.subr.bf16.mxu0 0
      %491 = vmatpush1.bf16.xpose.msra.mxu0 0
      %492 = vmatprep.subr.bf16.mxu0 0
      %493 = vmatpush1.bf16.xpose.msra.mxu0 0
      %494 = vmatprep.mubr.bf16.mxu0 0
      %495 = vmatmul.mubr.bf16.gmra.mrb[0].mxu0 %v457
      %v496 = vpop.f32.mrb[0].mxu0
      %v497 = vadd.f32 0.0, %v496
      %v498 = vpop.f32.mrb[0].mxu0
      %v499 = vpop.f32.mrb[0].mxu0
      %v500 = vpop.f32.mrb[0].mxu0
      %501 = vdwg.mxu0
      %v502 = vsel %vm169, %v497, -inf
      %503 = vmax.xlane.f32.xlu0 %v502
      %v504 = vpop.xlane.xlu0 %503
      %v505 = vsub.f32 %v497, %v504
      %v506 = vmul.f32 %v505, 1.442695
      %v507 = vpow.pop %v506
      %v508 = vsel %vm169, %v507, 0.0
      %509 = vadd.xlane.f32.xlu0 %v508
      %v510 = vpop.xlane.xlu0 %509
      %v511 = vrcp.pop %v510
      %v512 = vmul.f32 %v507, %v511
      %v513 = vpack.c.bf16 %v512, %v512
      %514 = vrot.lane.b32.xlu0 %v119, 84
      %v515 = vpop.permute.xlu0 %514
      %v517 = vsel %vm169, %v513, 0
      %v520 = vsel %vm187, %v515, 0
      %522 = vmatprep.subr.bf16.mxu0 0
      %523 = vmatpush1.bf16.msra.mxu0 %v520
      %524 = vmatprep.subr.bf16.mxu0 0
      %525 = vmatpush1.bf16.msra.mxu0 0
      %526 = vmatprep.subr.bf16.mxu0 0
      %527 = vmatpush1.bf16.msra.mxu0 0
      %528 = vmatprep.subr.bf16.mxu0 0
      %529 = vmatpush1.bf16.msra.mxu0 0
      %530 = vmatprep.subr.bf16.mxu0 0
      %531 = vmatpush1.bf16.msra.mxu0 0
      %532 = vmatprep.subr.bf16.mxu0 0
      %533 = vmatpush1.bf16.msra.mxu0 0
      %534 = vmatprep.subr.bf16.mxu0 0
      %535 = vmatpush1.bf16.msra.mxu0 0
      %536 = vmatprep.subr.bf16.mxu0 0
      %537 = vmatpush1.bf16.msra.mxu0 0
      %538 = vmatprep.subr.bf16.mxu0 0
      %539 = vmatpush1.bf16.msra.mxu0 0
      %540 = vmatprep.subr.bf16.mxu0 0
      %541 = vmatpush1.bf16.msra.mxu0 0
      %542 = vmatprep.subr.bf16.mxu0 0
      %543 = vmatpush1.bf16.msra.mxu0 0
      %544 = vmatprep.subr.bf16.mxu0 0
      %545 = vmatpush1.bf16.msra.mxu0 0
      %546 = vmatprep.subr.bf16.mxu0 0
      %547 = vmatpush1.bf16.msra.mxu0 0
      %548 = vmatprep.subr.bf16.mxu0 0
      %549 = vmatpush1.bf16.msra.mxu0 0
      %550 = vmatprep.subr.bf16.mxu0 0
      %551 = vmatpush1.bf16.msra.mxu0 0
      %552 = vmatprep.subr.bf16.mxu0 0
      %553 = vmatpush1.bf16.msra.mxu0 0
      %554 = vmatprep.mubr.bf16.mxu0 0
      %555 = vmatmul.mubr.bf16.gmra.mrb[0].mxu0 %v517
      %v556 = vpop.f32.mrb[0].mxu0
      %v557 = vadd.f32 0.0, %v556
      %v558 = vpop.f32.mrb[0].mxu0
      %v559 = vpop.f32.mrb[0].mxu0
      %v560 = vpop.f32.mrb[0].mxu0
      %561 = vdwg.mxu0
      %563 = vrot.lane.b32.xlu0 %v337, 4
      %v564 = vpop.permute.xlu0 %563
      %567 = vrot.lane.b32.xlu0 %v447, 8
      %v568 = vpop.permute.xlu0 %567
      %571 = vrot.lane.b32.xlu0 %v557, 12
      %v572 = vpop.permute.xlu0 %571
      %v574 = vsel %vm122, %v226, %v564
      %v575 = vsel %vm169, %v574, %v568
      %vm576 = vcmask 97280
      %v577 = vsel %vm576, %v575, %v572
      %v578 = vpack.c.bf16 %v577, %v577
      %vm579 = vcmask 125952
      %580 = vst.msk [vmem:[%s111] sm:$0xf] %vm579, %v578
      %p581 = scmp.lt.s32.totalorder %s12, 1
      %s582 = scalar_select %p581, %s12, 1
      %s583 = smul.addr %s582, 4
      %s584 = scalar_lea.vmem %s1, %s583
      // Predicated region
      $region25: #{conformer_separator_forward.26} parent=23 // pred_check
        %p585 = pneg %p56
      $region26: #{conformer_separator_forward.26} parent=23 // pred_check_branch
        %587 = sbr.rel (%p585) target = $region28
      $region27: #{conformer_separator_forward.26} parent=23 // pred_region
        _
      $region28: #{conformer_separator_forward.26} parent=23 // pred_fallthru
        _
    $region24: #{conformer_separator_forward.26} parent=5 // pred_fallthru
      _
    %p588 = scmp.le.s32.totalorder 2, %s7
    // Predicated region
    $region29: #{conformer_separator_forward.26} parent=5 // pred_check
      %p589 = pneg %p588
    $region30: #{conformer_separator_forward.26} parent=5 // pred_check_branch
      %591 = sbr.rel (%p589) target = $region32
    $region31: #{conformer_separator_forward.26} parent=5 // pred_region
      %s592 = ssub.s32 %s7, 2
      // Predicated region
      $region33: #{conformer_separator_forward.26} parent=31 // pred_check
        %p593 = pneg %p62
      $region34: #{conformer_separator_forward.26} parent=31 // pred_check_branch
        %595 = sbr.rel (%p593) target = $region36
      $region35: #{conformer_separator_forward.26} parent=31 // pred_region
        %p596 = scmp.lt.s32.totalorder %s13, 1
        %s597 = scalar_select %p596, %s13, 1
        %s598 = smul.addr %s597, 4
        %s599 = scalar_lea.vmem %s1, %s598
      $region36: #{conformer_separator_forward.26} parent=31 // pred_fallthru
        _
    $region32: #{conformer_separator_forward.26} parent=5 // pred_fallthru
      _
  $region6: #{conformer_separator_forward.26} parent=0 // loop_footer
    %s11 = sadd.s32 1, %s7
  $region7: #{conformer_separator_forward.26} parent=0 // loop_footer_branch
    %6 = sbr.rel target = $region3
  $region8: #{conformer_separator_forward.26} parent=0 // loop_exit
    _

// kernel: conformer_separator_forward.28
$region0: #{conformer_separator_forward.28}
  #allocation0 [shape = 'u32[]', space=smem, size = 0x4, offset = 0x4, fixed_abs, tag = 'smem constant byte address 0x4 - core index']
  #allocation1 [shape = 'u32[144,128]{1,0:T(1,128)}', space=vmem, size = 0x12000, scoped, tag = 'internal scratch']
  %s0 = inlined_call_operand.vmem [shape: bf16[16,16], index: 0, kind: input, shape index: {}]
  %s1 = inlined_call_operand.vmem [shape: bf16[16,16], index: 1, kind: input, shape index: {}]
  %s2 = inlined_call_operand.vmem [shape: f32[1,16], index: 2, kind: input, shape index: {}]
  %s3 = inlined_call_operand.vmem [shape: bf16[16,16], index: 3, kind: input, shape index: {}]
  %s4 = inlined_call_operand.vmem [shape: f32[1,16], index: 4, kind: input, shape index: {}]
  %s5 = inlined_call_operand.vmem [shape: f32[1,16], index: 5, kind: input, shape index: {}]
  %s6 = inlined_call_operand.vmem [shape: f32[1,16], index: 6, kind: input, shape index: {}]
  %s7 = inlined_call_operand.vmem [shape: bf16[16,16], index: 7, kind: output, shape index: {}]
  %s8 = sld [smem:[#allocation0]]
  $region38: #{conformer_separator_forward.28} parent=0
    _
  %s10 = ssub.s32 1, %s8
  %s11 = scalar_select 0, %s10, %s8
  // Predicated region
  $region2: #{conformer_separator_forward.28} parent=0 // pred_check
    _
  $region3: #{conformer_separator_forward.28} parent=0 // pred_check_branch
    %13 = sbr.rel (0) target = $region5
  $region4: #{conformer_separator_forward.28} parent=0 // pred_region
    _
  $region5: #{conformer_separator_forward.28} parent=0 // pred_fallthru
    _
  // Predicated region
  $region6: #{conformer_separator_forward.28} parent=0 // pred_check
    _
  $region7: #{conformer_separator_forward.28} parent=0 // pred_check_branch
    %15 = sbr.rel (0) target = $region9
  $region8: #{conformer_separator_forward.28} parent=0 // pred_region
    _
  $region9: #{conformer_separator_forward.28} parent=0 // pred_fallthru
    _
  // Predicated region
  $region10: #{conformer_separator_forward.28} parent=0 // pred_check
    _
  $region11: #{conformer_separator_forward.28} parent=0 // pred_check_branch
    %17 = sbr.rel (0) target = $region13
  $region12: #{conformer_separator_forward.28} parent=0 // pred_region
    _
  $region13: #{conformer_separator_forward.28} parent=0 // pred_fallthru
    _
  // Predicated region
  $region14: #{conformer_separator_forward.28} parent=0 // pred_check
    _
  $region15: #{conformer_separator_forward.28} parent=0 // pred_check_branch
    %19 = sbr.rel (0) target = $region17
  $region16: #{conformer_separator_forward.28} parent=0 // pred_region
    _
  $region17: #{conformer_separator_forward.28} parent=0 // pred_fallthru
    _
  // Predicated region
  $region18: #{conformer_separator_forward.28} parent=0 // pred_check
    _
  $region19: #{conformer_separator_forward.28} parent=0 // pred_check_branch
    %21 = sbr.rel (0) target = $region21
  $region20: #{conformer_separator_forward.28} parent=0 // pred_region
    _
  $region21: #{conformer_separator_forward.28} parent=0 // pred_fallthru
    _
  // Predicated region
  $region22: #{conformer_separator_forward.28} parent=0 // pred_check
    _
  $region23: #{conformer_separator_forward.28} parent=0 // pred_check_branch
    %23 = sbr.rel (0) target = $region25
  $region24: #{conformer_separator_forward.28} parent=0 // pred_region
    _
  $region25: #{conformer_separator_forward.28} parent=0 // pred_fallthru
    _
  // Predicated region
  $region26: #{conformer_separator_forward.28} parent=0 // pred_check
    _
  $region27: #{conformer_separator_forward.28} parent=0 // pred_check_branch
    %25 = sbr.rel (0) target = $region29
  $region28: #{conformer_separator_forward.28} parent=0 // pred_region
    _
  $region29: #{conformer_separator_forward.28} parent=0 // pred_fallthru
    _
  %v27 = vld [vmem:[%s0] sm:$0xf]
  %v28 = vld [vmem:[%s0 + $0x4] sm:$0xf]
  %v29 = vunpack.c.l.bf16 %v27
  %v30 = vunpack.c.l.bf16 %v28
  %vm31 = vcmask 130048
  %v32 = vsel %vm31, %v29, 0.0
  %33 = vadd.xlane.f32.xlu0 %v32
  %v34 = vpop.xlane.xlu0 %33
  %v35 = vsel %vm31, %v30, 0.0
  %36 = vadd.xlane.f32.xlu0 %v35
  %v37 = vpop.xlane.xlu0 %36
  %v38 = vrcp.pop 16.0
  %v39 = vmul.f32 %v34, %v38
  %v40 = vmul.f32 %v37, %v38
  %v41 = vsub.f32 %v29, %v39
  %v42 = vsub.f32 %v30, %v40
  %v43 = vmul.f32 %v41, %v41
  %v44 = vmul.f32 %v42, %v42
  %v45 = vsel %vm31, %v43, 0.0
  %46 = vadd.xlane.f32.xlu0 %v45
  %v47 = vpop.xlane.xlu0 %46
  %v48 = vsel %vm31, %v44, 0.0
  %49 = vadd.xlane.f32.xlu0 %v48
  %v50 = vpop.xlane.xlu0 %49
  %v51 = vmul.f32 %v47, %v38
  %v52 = vmul.f32 %v50, %v38
  %v53 = vadd.f32 %v51, 1e-05
  %v54 = vadd.f32 %v52, 1e-05
  %v55 = vrsqrt.pop %v53
  %v56 = vrsqrt.pop %v54
  %v57 = vmul.f32 %v41, %v55
  %v58 = vmul.f32 %v42, %v56
  %v59 = vld [vmem:[%s5] sm:$0x1]
  %v61 = vlaneseq
  %v62 = vshrl.u32 %v61, 7
  %v63 = vsub.s32 0, %v62
  %v64 = vrot.slane %v59, %v63
  %v66 = vmul.f32 %v57, %v64
  %v67 = vmul.f32 %v58, %v64
  %v68 = vld [vmem:[%s6] sm:$0x1]
  %v70 = vlaneseq
  %v71 = vshrl.u32 %v70, 7
  %v72 = vsub.s32 0, %v71
  %v73 = vrot.slane %v68, %v72
  %v75 = vadd.f32 %v66, %v73
  %v76 = vadd.f32 %v67, %v73
  %v77 = vpack.c.bf16 %v76, %v75
  %v78 = vld [vmem:[%s1] sm:$0xf]
  %v79 = vld [vmem:[%s1 + $0x4] sm:$0xf]
  %v80 = vld [vmem:[%s2] sm:$0x1]
  %v82 = vlaneseq
  %v83 = vshrl.u32 %v82, 7
  %v84 = vsub.s32 0, %v83
  %v85 = vrot.slane %v80, %v84
  %v89 = vunpack.c.l.b16 %v78
  %v90 = vunpack.c.l.b16 %v79
  %v91 = vpack.c.b16 %v90, %v89
  %v94 = vsel %vm31, %v77, 0
  %96 = vmatprep.subr.bf16.mxu0 0
  %97 = vmatpush1.bf16.msra.mxu0 %v91
  %98 = vmatprep.subr.bf16.mxu0 0
  %99 = vmatpush1.bf16.msra.mxu0 0
  %100 = vmatprep.subr.bf16.mxu0 0
  %101 = vmatpush1.bf16.msra.mxu0 0
  %102 = vmatprep.subr.bf16.mxu0 0
  %103 = vmatpush1.bf16.msra.mxu0 0
  %104 = vmatprep.subr.bf16.mxu0 0
  %105 = vmatpush1.bf16.msra.mxu0 0
  %106 = vmatprep.subr.bf16.mxu0 0
  %107 = vmatpush1.bf16.msra.mxu0 0
  %108 = vmatprep.subr.bf16.mxu0 0
  %109 = vmatpush1.bf16.msra.mxu0 0
  %110 = vmatprep.subr.bf16.mxu0 0
  %111 = vmatpush1.bf16.msra.mxu0 0
  %112 = vmatprep.subr.bf16.mxu0 0
  %113 = vmatpush1.bf16.msra.mxu0 0
  %114 = vmatprep.subr.bf16.mxu0 0
  %115 = vmatpush1.bf16.msra.mxu0 0
  %116 = vmatprep.subr.bf16.mxu0 0
  %117 = vmatpush1.bf16.msra.mxu0 0
  %118 = vmatprep.subr.bf16.mxu0 0
  %119 = vmatpush1.bf16.msra.mxu0 0
  %120 = vmatprep.subr.bf16.mxu0 0
  %121 = vmatpush1.bf16.msra.mxu0 0
  %122 = vmatprep.subr.bf16.mxu0 0
  %123 = vmatpush1.bf16.msra.mxu0 0
  %124 = vmatprep.subr.bf16.mxu0 0
  %125 = vmatpush1.bf16.msra.mxu0 0
  %126 = vmatprep.subr.bf16.mxu0 0
  %127 = vmatpush1.bf16.msra.mxu0 0
  %128 = vmatprep.mubr.bf16.mxu0 0
  %129 = vmatmul.mubr.bf16.gmra.mrb[0].mxu0 %v94
  %v130 = vpop.f32.mrb[0].mxu0
  %v131 = vadd.f32 %v85, %v130
  %v132 = vpop.f32.mrb[0].mxu0
  %v133 = vpop.f32.mrb[0].mxu0
  %v134 = vadd.f32 %v85, %v133
  %v135 = vpop.f32.mrb[0].mxu0
  %136 = vdwg.mxu0
  %v137 = vld [vmem:[%s3] sm:$0xf]
  %v138 = vld [vmem:[%s3 + $0x4] sm:$0xf]
  %v139 = vld [vmem:[%s4] sm:$0x1]
  %v141 = vlaneseq
  %v142 = vshrl.u32 %v141, 7
  %v143 = vsub.s32 0, %v142
  %v144 = vrot.slane %v139, %v143
  %v148 = vunpack.c.l.b16 %v137
  %v149 = vunpack.c.l.b16 %v138
  %v150 = vpack.c.b16 %v149, %v148
  %152 = vmatprep.subr.bf16.mxu0 0
  %153 = vmatpush1.bf16.msra.mxu0 %v150
  %154 = vmatprep.subr.bf16.mxu0 0
  %155 = vmatpush1.bf16.msra.mxu0 0
  %156 = vmatprep.subr.bf16.mxu0 0
  %157 = vmatpush1.bf16.msra.mxu0 0
  %158 = vmatprep.subr.bf16.mxu0 0
  %159 = vmatpush1.bf16.msra.mxu0 0
  %160 = vmatprep.subr.bf16.mxu0 0
  %161 = vmatpush1.bf16.msra.mxu0 0
  %162 = vmatprep.subr.bf16.mxu0 0
  %163 = vmatpush1.bf16.msra.mxu0 0
  %164 = vmatprep.subr.bf16.mxu0 0
  %165 = vmatpush1.bf16.msra.mxu0 0
  %166 = vmatprep.subr.bf16.mxu0 0
  %167 = vmatpush1.bf16.msra.mxu0 0
  %168 = vmatprep.subr.bf16.mxu0 0
  %169 = vmatpush1.bf16.msra.mxu0 0
  %170 = vmatprep.subr.bf16.mxu0 0
  %171 = vmatpush1.bf16.msra.mxu0 0
  %172 = vmatprep.subr.bf16.mxu0 0
  %173 = vmatpush1.bf16.msra.mxu0 0
  %174 = vmatprep.subr.bf16.mxu0 0
  %175 = vmatpush1.bf16.msra.mxu0 0
  %176 = vmatprep.subr.bf16.mxu0 0
  %177 = vmatpush1.bf16.msra.mxu0 0
  %178 = vmatprep.subr.bf16.mxu0 0
  %179 = vmatpush1.bf16.msra.mxu0 0
  %180 = vmatprep.subr.bf16.mxu0 0
  %181 = vmatpush1.bf16.msra.mxu0 0
  %182 = vmatprep.subr.bf16.mxu0 0
  %183 = vmatpush1.bf16.msra.mxu0 0
  %184 = vmatprep.mubr.bf16.mxu0 0
  %185 = vmatmul.mubr.bf16.gmra.mrb[0].mxu0 %v94
  %v186 = vpop.f32.mrb[0].mxu0
  %v187 = vadd.f32 %v144, %v186
  %v188 = vpop.f32.mrb[0].mxu0
  %v189 = vpop.f32.mrb[0].mxu0
  %v190 = vadd.f32 %v144, %v189
  %v191 = vpop.f32.mrb[0].mxu0
  %192 = vdwg.mxu0
  %v193 = vxor.u32 %v187, 2147483648
  %v194 = vxor.u32 %v190, 2147483648
  %v195 = vmul.f32 %v193, 1.442695
  %v196 = vpow.pop %v195
  %v197 = vmul.f32 %v194, 1.442695
  %v198 = vpow.pop %v197
  %v199 = vadd.f32 %v196, 1.0
  %v200 = vadd.f32 %v198, 1.0
  %v201 = vrcp.pop %v199
  %v202 = vmul.f32 1.0, %v201
  %v203 = vrcp.pop %v200
  %v204 = vmul.f32 1.0, %v203
  %v205 = vmul.f32 %v131, %v202
  %v206 = vmul.f32 %v134, %v204
  %v207 = vpack.c.bf16 %v206, %v205
  %v209 = vunpack.c.l.b16 %v207
  %v210 = vunpack.c.h.b16 %v207
  %v211 = vpack.c.b16 %v209, %v209
  %v212 = vpack.c.b16 %v210, %v210
  %vm215 = vcmask 125952
  %216 = vst.msk [vmem:[%s7] sm:$0xf] %vm215, %v211
  %217 = vst.msk [vmem:[%s7 + $0x4] sm:$0xf] %vm215, %v212
  // Predicated region
  $region30: #{conformer_separator_forward.28} parent=0 // pred_check
    _
  $region31: #{conformer_separator_forward.28} parent=0 // pred_check_branch
    %219 = sbr.rel (0) target = $region33
  $region32: #{conformer_separator_forward.28} parent=0 // pred_region
    _
  $region33: #{conformer_separator_forward.28} parent=0 // pred_fallthru
    _
  // Predicated region
  $region34: #{conformer_separator_forward.28} parent=0 // pred_check
    _
  $region35: #{conformer_separator_forward.28} parent=0 // pred_check_branch
    %221 = sbr.rel (0) target = $region37
  $region36: #{conformer_separator_forward.28} parent=0 // pred_region
    _
  $region37: #{conformer_separator_forward.28} parent=0 // pred_fallthru
    _

// kernel: conformer_separator_forward.29
$region0: #{conformer_separator_forward.29}
  #allocation0 [shape = 'u32[]', space=smem, size = 0x4, offset = 0x4, fixed_abs, tag = 'smem constant byte address 0x4 - core index']
  #allocation1 [shape = 'u32[144,128]{1,0:T(1,128)}', space=vmem, size = 0x12000, scoped, tag = 'internal scratch']
  #allocation2 [shape = 'f32[14,16]{1,0:T(8,128)}', space=vmem, size = 0x2000, scoped, tag = 'scratch operand']
  %s0 = inlined_call_operand.vmem [shape: bf16[2,8,16], index: 0, kind: input, shape index: {}]
  %s1 = inlined_call_operand.vmem [shape: f32[7,16], index: 1, kind: input, shape index: {}]
  %s2 = inlined_call_operand.vmem [shape: f32[1,16], index: 2, kind: input, shape index: {}]
  %s3 = inlined_call_operand.vmem [shape: bf16[2,8,16], index: 3, kind: output, shape index: {}]
  %s4 = sld [smem:[#allocation0]]
  $region45: #{conformer_separator_forward.29} parent=0
    _
  %s6 = ssub.s32 1, %s4
  %s7 = scalar_select 0, %s6, %s4
  loop: start=0, step=1, limit=4
  $region2: #{conformer_separator_forward.29} parent=0 // loop_pre_header
    _
  $region3: #{conformer_separator_forward.29} parent=0 // loop_header
    %s9 = sphi 0, %s13
    %p10 = scmp.ge.s32.totalorder %s9, 4
    %s19 = sphi 0, %s21
    %s22 = sphi 0, %s19
    %s23 = sphi 0, %s22
    %s39 = sphi 0, %s23
    %s43 = sphi 0, %s43
    %s45 = sphi 0, %s43
    %s46 = sphi 0, %s45
    %s60 = sphi 0, %s46
    %s64 = sphi 0, %s64
    %s66 = sphi 0, %s64
    %s67 = sphi 0, %s66
    %s81 = sphi 0, %s67
    %s87 = sphi 0, %s89
    %s90 = sphi 0, %s87
    %s91 = sphi 0, %s90
    %s107 = sphi 0, %s91
  $region4: #{conformer_separator_forward.29} parent=0 // loop_header_branch
    %12 = sbr.rel (%p10) target = $region8
  $region5: #{conformer_separator_forward.29} parent=0 // loop_body
    %s14 = ssub.s32 %s9, 1
    %s15 = ssub.s32 %s9, 2
    %s16 = sadd.s32 %s9, 1
    %s17 = ssub.s32 %s9, %s16
    %p18 = scmp.eq.s32.totalorder %s17, 0
    %s20 = sadd.s32 %s19, 1
    %s21 = scalar_select %p18, %s19, %s20
    %p24 = pneg %p18
    %p25 = scmp.eq.s32.totalorder %s9, 1
    %p26 = por %p24, %p25
    %p27 = scmp.ne.s32.totalorder %s19, %s22
    %p28 = scmp.eq.s32.totalorder %s9, 0
    %p29 = por %p27, %p28
    %p30 = scmp.ne.s32.totalorder %s19, %s22
    %p31 = scmp.eq.s32.totalorder %s14, 1
    %p32 = por %p30, %p31
    %p33 = scmp.ne.s32.totalorder %s22, %s23
    %p34 = scmp.eq.s32.totalorder %s14, 0
    %p35 = por %p33, %p34
    %p36 = scmp.ne.s32.totalorder %s22, %s23
    %p37 = scmp.eq.s32.totalorder %s15, 1
    %p38 = por %p36, %p37
    %p40 = scmp.ne.s32.totalorder %s23, %s39
    %p41 = scmp.eq.s32.totalorder %s15, 0
    %p42 = por %p40, %p41
    %s44 = sadd.s32 %s43, 1
    %p47 = scmp.eq.s32.totalorder %s9, 1
    %p48 = scmp.ne.s32.totalorder %s43, %s45
    %p49 = scmp.eq.s32.totalorder %s9, 0
    %p50 = por %p48, %p49
    %p51 = scmp.ne.s32.totalorder %s43, %s45
    %p52 = scmp.eq.s32.totalorder %s14, 1
    %p53 = por %p51, %p52
    %p54 = scmp.ne.s32.totalorder %s45, %s46
    %p55 = scmp.eq.s32.totalorder %s14, 0
    %p56 = por %p54, %p55
    %p57 = scmp.ne.s32.totalorder %s45, %s46
    %p58 = scmp.eq.s32.totalorder %s15, 1
    %p59 = por %p57, %p58
    %p61 = scmp.ne.s32.totalorder %s46, %s60
    %p62 = scmp.eq.s32.totalorder %s15, 0
    %p63 = por %p61, %p62
    %s65 = sadd.s32 %s64, 1
    %p68 = scmp.eq.s32.totalorder %s9, 1
    %p69 = scmp.ne.s32.totalorder %s64, %s66
    %p70 = scmp.eq.s32.totalorder %s9, 0
    %p71 = por %p69, %p70
    %p72 = scmp.ne.s32.totalorder %s64, %s66
    %p73 = scmp.eq.s32.totalorder %s14, 1
    %p74 = por %p72, %p73
    %p75 = scmp.ne.s32.totalorder %s66, %s67
    %p76 = scmp.eq.s32.totalorder %s14, 0
    %p77 = por %p75, %p76
    %p78 = scmp.ne.s32.totalorder %s66, %s67
    %p79 = scmp.eq.s32.totalorder %s15, 1
    %p80 = por %p78, %p79
    %p82 = scmp.ne.s32.totalorder %s67, %s81
    %p83 = scmp.eq.s32.totalorder %s15, 0
    %p84 = por %p82, %p83
    %s85 = ssub.s32 %s9, %s16
    %p86 = scmp.eq.s32.totalorder %s85, 0
    %s88 = sadd.s32 %s87, 1
    %s89 = scalar_select %p86, %s87, %s88
    %p92 = pneg %p86
    %p93 = scmp.eq.s32.totalorder %s9, 1
    %p94 = por %p92, %p93
    %p95 = scmp.ne.s32.totalorder %s87, %s90
    %p96 = scmp.eq.s32.totalorder %s9, 0
    %p97 = por %p95, %p96
    %p98 = scmp.ne.s32.totalorder %s87, %s90
    %p99 = scmp.eq.s32.totalorder %s14, 1
    %p100 = por %p98, %p99
    %p101 = scmp.ne.s32.totalorder %s90, %s91
    %p102 = scmp.eq.s32.totalorder %s14, 0
    %p103 = por %p101, %p102
    %p104 = scmp.ne.s32.totalorder %s90, %s91
    %p105 = scmp.eq.s32.totalorder %s15, 1
    %p106 = por %p104, %p105
    %p108 = scmp.ne.s32.totalorder %s91, %s107
    %p109 = scmp.eq.s32.totalorder %s15, 0
    %p110 = por %p108, %p109
    %p111 = scmp.le.s32.totalorder 1, %s9
    %p112 = scmp.lt.s32.totalorder %s9, 3
    %p113 = pnand %p111, %p112
    %p114 = pneg %p113
    // Predicated region
    $region9: #{conformer_separator_forward.29} parent=5 // pred_check
      _
    $region10: #{conformer_separator_forward.29} parent=5 // pred_check_branch
      %116 = sbr.rel (%p113) target = $region12
    $region11: #{conformer_separator_forward.29} parent=5 // pred_region
      %s117 = ssub.s32 %s9, 1
      // Predicated region
      $region13: #{conformer_separator_forward.29} parent=11 // pred_check
        %p118 = pneg %p56
      $region14: #{conformer_separator_forward.29} parent=11 // pred_check_branch
        %120 = sbr.rel (%p118) target = $region16
      $region15: #{conformer_separator_forward.29} parent=11 // pred_region
        _
      $region16: #{conformer_separator_forward.29} parent=11 // pred_fallthru
        _
      // Predicated region
      $region17: #{conformer_separator_forward.29} parent=11 // pred_check
        %p121 = pneg %p77
      $region18: #{conformer_separator_forward.29} parent=11 // pred_check_branch
        %123 = sbr.rel (%p121) target = $region20
      $region19: #{conformer_separator_forward.29} parent=11 // pred_region
        _
      $region20: #{conformer_separator_forward.29} parent=11 // pred_fallthru
        _
    $region12: #{conformer_separator_forward.29} parent=5 // pred_fallthru
      _
    %p124 = scmp.lt.s32.totalorder %s9, 2
    // Predicated region
    $region21: #{conformer_separator_forward.29} parent=5 // pred_check
      %p125 = pneg %p124
    $region22: #{conformer_separator_forward.29} parent=5 // pred_check_branch
      %127 = sbr.rel (%p125) target = $region24
    $region23: #{conformer_separator_forward.29} parent=5 // pred_region
      // Predicated region
      $region25: #{conformer_separator_forward.29} parent=23 // pred_check
        %p128 = pneg %p29
      $region26: #{conformer_separator_forward.29} parent=23 // pred_check_branch
        %130 = sbr.rel (%p128) target = $region28
      $region27: #{conformer_separator_forward.29} parent=23 // pred_region
        %p131 = scmp.lt.s32.totalorder %s9, 1
        %s132 = scalar_select %p131, %s9, 1
        %s133 = smul.addr %s132, 4
        %s134 = scalar_lea.vmem %s0, %s133
      $region28: #{conformer_separator_forward.29} parent=23 // pred_fallthru
        _
    $region24: #{conformer_separator_forward.29} parent=5 // pred_fallthru
      _
    %p135 = scmp.le.s32.totalorder 1, %s9
    %p136 = scmp.lt.s32.totalorder %s9, 3
    %p137 = pnand %p135, %p136
    %p138 = pneg %p137
    // Predicated region
    $region29: #{conformer_separator_forward.29} parent=5 // pred_check
      _
    $region30: #{conformer_separator_forward.29} parent=5 // pred_check_branch
      %140 = sbr.rel (%p137) target = $region32
    $region31: #{conformer_separator_forward.29} parent=5 // pred_region
      %s141 = ssub.s32 %s9, 1
      %p142 = scmp.lt.s32.totalorder %s14, 1
      %s143 = scalar_select %p142, %s14, 1
      %s144 = smul.addr %s143, 4
      %s145 = scalar_lea.vmem %s0, %s144
      %p146 = pneg %p35
      %p147 = pneg %p32
      %p148 = pneg %p56
      %p149 = pneg %p53
      %p150 = pneg %p77
      %p151 = pneg %p74
      %p152 = pneg %p103
      %p153 = pneg %p100
      %p154 = scmp.lt.s32.totalorder %s14, 1
      %s155 = scalar_select %p154, %s14, 1
      %s156 = smul.addr %s155, 4
      %s157 = scalar_lea.vmem %s3, %s156
      %p158 = scmp.lt.s32.totalorder %s14, 1
      %s159 = scalar_select %p158, %s14, 1
      %s160 = smul.addr %s159, 4
      %s161 = scalar_lea.vmem %s0, %s160
      %p162 = scmp.lt.s32.totalorder %s14, 1
      %s163 = scalar_select %p162, %s14, 1
      %s164 = smul.addr %s163, 4
      %s165 = scalar_lea.vmem %s3, %s164
      %vm166 = vcmask 130048
      %167 = vst.msk [vmem:[#allocation2] sm:$0xff] %vm166, 0.0
      %vm168 = vcmask 128000
      %169 = vst.msk [vmem:[#allocation2 + $0x8] sm:$0x3f] %vm168, 0.0
      %v170 = vld [vmem:[%s161] sm:$0xf]
      %v171 = vunpack.c.l.bf16 %v170
      %172 = vst.msk [vmem:[#allocation2 + $0x3] sm:$0xff] %vm166, %v171
      %v173 = vld [vmem:[%s1] sm:$0x7f]
      %v174 = vld [vmem:[%s2] sm:$0x1]
      %v176 = vlaneseq
      %v177 = vshrl.u32 %v176, 7
      %v178 = vsub.s32 0, %v177
      %v179 = vrot.slane %v174, %v178
      %v181 = vadd.f32 %v179, 0.0
      %v182 = vld [vmem:[#allocation2] sm:$0xff]
      %v183 = vlaneseq
      %v184 = vshrl.u32 %v183, 7
      %v185 = vsub.s32 0, %v184
      %v186 = vrot.slane %v173, %v185
      %v187 = vmul.f32 %v182, %v186
      %v188 = vadd.f32 %v181, %v187
      %v189 = vld [vmem:[#allocation2 + $0x1] sm:$0xff]
      %v190 = vlaneseq
      %v191 = vshrl.u32 %v190, 7
      %v192 = vsub.s32 1, %v191
      %v193 = vrot.slane %v173, %v192
      %v194 = vmul.f32 %v189, %v193
      %v195 = vadd.f32 %v188, %v194
      %v196 = vld [vmem:[#allocation2 + $0x2] sm:$0xff]
      %v197 = vlaneseq
      %v198 = vshrl.u32 %v197, 7
      %v199 = vsub.s32 2, %v198
      %v200 = vrot.slane %v173, %v199
      %v201 = vmul.f32 %v196, %v200
      %v202 = vadd.f32 %v195, %v201
      %v203 = vld [vmem:[#allocation2 + $0x3] sm:$0xff]
      %v204 = vlaneseq
      %v205 = vshrl.u32 %v204, 7
      %v206 = vsub.s32 3, %v205
      %v207 = vrot.slane %v173, %v206
      %v208 = vmul.f32 %v203, %v207
      %v209 = vadd.f32 %v202, %v208
      %v210 = vld [vmem:[#allocation2 + $0x4] sm:$0xff]
      %v211 = vlaneseq
      %v212 = vshrl.u32 %v211, 7
      %v213 = vsub.s32 4, %v212
      %v214 = vrot.slane %v173, %v213
      %v215 = vmul.f32 %v210, %v214
      %v216 = vadd.f32 %v209, %v215
      %v217 = vld [vmem:[#allocation2 + $0x5] sm:$0xff]
      %v218 = vlaneseq
      %v219 = vshrl.u32 %v218, 7
      %v220 = vsub.s32 5, %v219
      %v221 = vrot.slane %v173, %v220
      %v222 = vmul.f32 %v217, %v221
      %v223 = vadd.f32 %v216, %v222
      %v224 = vld [vmem:[#allocation2 + $0x6] sm:$0xff]
      %v225 = vlaneseq
      %v226 = vshrl.u32 %v225, 7
      %v227 = vsub.s32 6, %v226
      %v228 = vrot.slane %v173, %v227
      %v229 = vmul.f32 %v224, %v228
      %v230 = vadd.f32 %v223, %v229
      %v231 = vxor.u32 %v230, 2147483648
      %v232 = vmul.f32 %v231, 1.442695
      %v233 = vpow.pop %v232
      %v234 = vadd.f32 %v233, 1.0
      %v235 = vrcp.pop %v234
      %v236 = vmul.f32 1.0, %v235
      %v237 = vmul.f32 %v230, %v236
      %v238 = vpack.c.bf16 %v237, %v237
      %vm239 = vcmask 125952
      %240 = vst.msk [vmem:[%s165] sm:$0xf] %vm239, %v238
      %p241 = scmp.lt.s32.totalorder %s14, 1
      %s242 = scalar_select %p241, %s14, 1
      %s243 = smul.addr %s242, 4
      %s244 = scalar_lea.vmem %s3, %s243
      // Predicated region
      $region33: #{conformer_separator_forward.29} parent=31 // pred_check
        %p245 = pneg %p100
      $region34: #{conformer_separator_forward.29} parent=31 // pred_check_branch
        %247 = sbr.rel (%p245) target = $region36
      $region35: #{conformer_separator_forward.29} parent=31 // pred_region
        _
      $region36: #{conformer_separator_forward.29} parent=31 // pred_fallthru
        _
    $region32: #{conformer_separator_forward.29} parent=5 // pred_fallthru
      _
    %p248 = scmp.le.s32.totalorder 2, %s9
    // Predicated region
    $region37: #{conformer_separator_forward.29} parent=5 // pred_check
      %p249 = pneg %p248
    $region38: #{conformer_separator_forward.29} parent=5 // pred_check_branch
      %251 = sbr.rel (%p249) target = $region40
    $region39: #{conformer_separator_forward.29} parent=5 // pred_region
      %s252 = ssub.s32 %s9, 2
      // Predicated region
      $region41: #{conformer_separator_forward.29} parent=39 // pred_check
        %p253 = pneg %p106
      $region42: #{conformer_separator_forward.29} parent=39 // pred_check_branch
        %255 = sbr.rel (%p253) target = $region44
      $region43: #{conformer_separator_forward.29} parent=39 // pred_region
        %p256 = scmp.lt.s32.totalorder %s15, 1
        %s257 = scalar_select %p256, %s15, 1
        %s258 = smul.addr %s257, 4
        %s259 = scalar_lea.vmem %s3, %s258
      $region44: #{conformer_separator_forward.29} parent=39 // pred_fallthru
        _
    $region40: #{conformer_separator_forward.29} parent=5 // pred_fallthru
      _
  $region6: #{conformer_separator_forward.29} parent=0 // loop_footer
    %s13 = sadd.s32 1, %s9
  $region7: #{conformer_separator_forward.29} parent=0 // loop_footer_branch
    %8 = sbr.rel target = $region3
  $region8: #{conformer_separator_forward.29} parent=0 // loop_exit
    _

// kernel: conformer_separator_forward.43
$region0: #{conformer_separator_forward.43}
  #allocation0 [shape = 'u32[]', space=smem, size = 0x4, offset = 0x4, fixed_abs, tag = 'smem constant byte address 0x4 - core index']
  #allocation1 [shape = 'u32[144,128]{1,0:T(1,128)}', space=vmem, size = 0x12000, scoped, tag = 'internal scratch']
  #allocation2 [shape = 'f32[10,16]{1,0:T(8,128)}', space=vmem, size = 0x2000, scoped, tag = 'scratch operand']
  %s0 = inlined_call_operand.vmem [shape: bf16[2,8,16], index: 0, kind: input, shape index: {}]
  %s1 = inlined_call_operand.vmem [shape: bf16[16,48], index: 1, kind: input, shape index: {}]
  %s2 = inlined_call_operand.vmem [shape: bf16[16,48], index: 2, kind: input, shape index: {}]
  %s3 = inlined_call_operand.vmem [shape: f32[1,48], index: 3, kind: input, shape index: {}]
  %s4 = inlined_call_operand.vmem [shape: f32[1,48], index: 4, kind: input, shape index: {}]
  %s5 = inlined_call_operand.vmem [shape: f32[1,48], index: 5, kind: input, shape index: {}]
  %s6 = inlined_call_operand.vmem [shape: f32[2,9,48], index: 6, kind: output, shape index: {}]
  %s7 = sld [smem:[#allocation0]]
  $region57: #{conformer_separator_forward.43} parent=0
    _
  %s9 = ssub.s32 1, %s7
  %s10 = scalar_select 0, %s9, %s7
  loop: start=0, step=1, limit=4
  $region2: #{conformer_separator_forward.43} parent=0 // loop_pre_header
    _
  $region3: #{conformer_separator_forward.43} parent=0 // loop_header
    %s12 = sphi 0, %s16
    %p13 = scmp.ge.s32.totalorder %s12, 4
    %s22 = sphi 0, %s24
    %s25 = sphi 0, %s22
    %s26 = sphi 0, %s25
    %s42 = sphi 0, %s26
    %s46 = sphi 0, %s46
    %s48 = sphi 0, %s46
    %s49 = sphi 0, %s48
    %s63 = sphi 0, %s49
    %s67 = sphi 0, %s67
    %s69 = sphi 0, %s67
    %s70 = sphi 0, %s69
    %s84 = sphi 0, %s70
    %s88 = sphi 0, %s88
    %s90 = sphi 0, %s88
    %s91 = sphi 0, %s90
    %s105 = sphi 0, %s91
    %s109 = sphi 0, %s109
    %s111 = sphi 0, %s109
    %s112 = sphi 0, %s111
    %s126 = sphi 0, %s112
    %s130 = sphi 0, %s130
    %s132 = sphi 0, %s130
    %s133 = sphi 0, %s132
    %s147 = sphi 0, %s133
    %s153 = sphi 0, %s155
    %s156 = sphi 0, %s153
    %s157 = sphi 0, %s156
    %s173 = sphi 0, %s157
  $region4: #{conformer_separator_forward.43} parent=0 // loop_header_branch
    %15 = sbr.rel (%p13) target = $region8
  $region5: #{conformer_separator_forward.43} parent=0 // loop_body
    %s17 = ssub.s32 %s12, 1
    %s18 = ssub.s32 %s12, 2
    %s19 = sadd.s32 %s12, 1
    %s20 = ssub.s32 %s12, %s19
    %p21 = scmp.eq.s32.totalorder %s20, 0
    %s23 = sadd.s32 %s22, 1
    %s24 = scalar_select %p21, %s22, %s23
    %p27 = pneg %p21
    %p28 = scmp.eq.s32.totalorder %s12, 1
    %p29 = por %p27, %p28
    %p30 = scmp.ne.s32.totalorder %s22, %s25
    %p31 = scmp.eq.s32.totalorder %s12, 0
    %p32 = por %p30, %p31
    %p33 = scmp.ne.s32.totalorder %s22, %s25
    %p34 = scmp.eq.s32.totalorder %s17, 1
    %p35 = por %p33, %p34
    %p36 = scmp.ne.s32.totalorder %s25, %s26
    %p37 = scmp.eq.s32.totalorder %s17, 0
    %p38 = por %p36, %p37
    %p39 = scmp.ne.s32.totalorder %s25, %s26
    %p40 = scmp.eq.s32.totalorder %s18, 1
    %p41 = por %p39, %p40
    %p43 = scmp.ne.s32.totalorder %s26, %s42
    %p44 = scmp.eq.s32.totalorder %s18, 0
    %p45 = por %p43, %p44
    %s47 = sadd.s32 %s46, 1
    %p50 = scmp.eq.s32.totalorder %s12, 1
    %p51 = scmp.ne.s32.totalorder %s46, %s48
    %p52 = scmp.eq.s32.totalorder %s12, 0
    %p53 = por %p51, %p52
    %p54 = scmp.ne.s32.totalorder %s46, %s48
    %p55 = scmp.eq.s32.totalorder %s17, 1
    %p56 = por %p54, %p55
    %p57 = scmp.ne.s32.totalorder %s48, %s49
    %p58 = scmp.eq.s32.totalorder %s17, 0
    %p59 = por %p57, %p58
    %p60 = scmp.ne.s32.totalorder %s48, %s49
    %p61 = scmp.eq.s32.totalorder %s18, 1
    %p62 = por %p60, %p61
    %p64 = scmp.ne.s32.totalorder %s49, %s63
    %p65 = scmp.eq.s32.totalorder %s18, 0
    %p66 = por %p64, %p65
    %s68 = sadd.s32 %s67, 1
    %p71 = scmp.eq.s32.totalorder %s12, 1
    %p72 = scmp.ne.s32.totalorder %s67, %s69
    %p73 = scmp.eq.s32.totalorder %s12, 0
    %p74 = por %p72, %p73
    %p75 = scmp.ne.s32.totalorder %s67, %s69
    %p76 = scmp.eq.s32.totalorder %s17, 1
    %p77 = por %p75, %p76
    %p78 = scmp.ne.s32.totalorder %s69, %s70
    %p79 = scmp.eq.s32.totalorder %s17, 0
    %p80 = por %p78, %p79
    %p81 = scmp.ne.s32.totalorder %s69, %s70
    %p82 = scmp.eq.s32.totalorder %s18, 1
    %p83 = por %p81, %p82
    %p85 = scmp.ne.s32.totalorder %s70, %s84
    %p86 = scmp.eq.s32.totalorder %s18, 0
    %p87 = por %p85, %p86
    %s89 = sadd.s32 %s88, 1
    %p92 = scmp.eq.s32.totalorder %s12, 1
    %p93 = scmp.ne.s32.totalorder %s88, %s90
    %p94 = scmp.eq.s32.totalorder %s12, 0
    %p95 = por %p93, %p94
    %p96 = scmp.ne.s32.totalorder %s88, %s90
    %p97 = scmp.eq.s32.totalorder %s17, 1
    %p98 = por %p96, %p97
    %p99 = scmp.ne.s32.totalorder %s90, %s91
    %p100 = scmp.eq.s32.totalorder %s17, 0
    %p101 = por %p99, %p100
    %p102 = scmp.ne.s32.totalorder %s90, %s91
    %p103 = scmp.eq.s32.totalorder %s18, 1
    %p104 = por %p102, %p103
    %p106 = scmp.ne.s32.totalorder %s91, %s105
    %p107 = scmp.eq.s32.totalorder %s18, 0
    %p108 = por %p106, %p107
    %s110 = sadd.s32 %s109, 1
    %p113 = scmp.eq.s32.totalorder %s12, 1
    %p114 = scmp.ne.s32.totalorder %s109, %s111
    %p115 = scmp.eq.s32.totalorder %s12, 0
    %p116 = por %p114, %p115
    %p117 = scmp.ne.s32.totalorder %s109, %s111
    %p118 = scmp.eq.s32.totalorder %s17, 1
    %p119 = por %p117, %p118
    %p120 = scmp.ne.s32.totalorder %s111, %s112
    %p121 = scmp.eq.s32.totalorder %s17, 0
    %p122 = por %p120, %p121
    %p123 = scmp.ne.s32.totalorder %s111, %s112
    %p124 = scmp.eq.s32.totalorder %s18, 1
    %p125 = por %p123, %p124
    %p127 = scmp.ne.s32.totalorder %s112, %s126
    %p128 = scmp.eq.s32.totalorder %s18, 0
    %p129 = por %p127, %p128
    %s131 = sadd.s32 %s130, 1
    %p134 = scmp.eq.s32.totalorder %s12, 1
    %p135 = scmp.ne.s32.totalorder %s130, %s132
    %p136 = scmp.eq.s32.totalorder %s12, 0
    %p137 = por %p135, %p136
    %p138 = scmp.ne.s32.totalorder %s130, %s132
    %p139 = scmp.eq.s32.totalorder %s17, 1
    %p140 = por %p138, %p139
    %p141 = scmp.ne.s32.totalorder %s132, %s133
    %p142 = scmp.eq.s32.totalorder %s17, 0
    %p143 = por %p141, %p142
    %p144 = scmp.ne.s32.totalorder %s132, %s133
    %p145 = scmp.eq.s32.totalorder %s18, 1
    %p146 = por %p144, %p145
    %p148 = scmp.ne.s32.totalorder %s133, %s147
    %p149 = scmp.eq.s32.totalorder %s18, 0
    %p150 = por %p148, %p149
    %s151 = ssub.s32 %s12, %s19
    %p152 = scmp.eq.s32.totalorder %s151, 0
    %s154 = sadd.s32 %s153, 1
    %s155 = scalar_select %p152, %s153, %s154
    %p158 = pneg %p152
    %p159 = scmp.eq.s32.totalorder %s12, 1
    %p160 = por %p158, %p159
    %p161 = scmp.ne.s32.totalorder %s153, %s156
    %p162 = scmp.eq.s32.totalorder %s12, 0
    %p163 = por %p161, %p162
    %p164 = scmp.ne.s32.totalorder %s153, %s156
    %p165 = scmp.eq.s32.totalorder %s17, 1
    %p166 = por %p164, %p165
    %p167 = scmp.ne.s32.totalorder %s156, %s157
    %p168 = scmp.eq.s32.totalorder %s17, 0
    %p169 = por %p167, %p168
    %p170 = scmp.ne.s32.totalorder %s156, %s157
    %p171 = scmp.eq.s32.totalorder %s18, 1
    %p172 = por %p170, %p171
    %p174 = scmp.ne.s32.totalorder %s157, %s173
    %p175 = scmp.eq.s32.totalorder %s18, 0
    %p176 = por %p174, %p175
    %p177 = scmp.le.s32.totalorder 1, %s12
    %p178 = scmp.lt.s32.totalorder %s12, 3
    %p179 = pnand %p177, %p178
    %p180 = pneg %p179
    // Predicated region
    $region9: #{conformer_separator_forward.43} parent=5 // pred_check
      _
    $region10: #{conformer_separator_forward.43} parent=5 // pred_check_branch
      %182 = sbr.rel (%p179) target = $region12
    $region11: #{conformer_separator_forward.43} parent=5 // pred_region
      %s183 = ssub.s32 %s12, 1
      // Predicated region
      $region13: #{conformer_separator_forward.43} parent=11 // pred_check
        %p184 = pneg %p59
      $region14: #{conformer_separator_forward.43} parent=11 // pred_check_branch
        %186 = sbr.rel (%p184) target = $region16
      $region15: #{conformer_separator_forward.43} parent=11 // pred_region
        _
      $region16: #{conformer_separator_forward.43} parent=11 // pred_fallthru
        _
      // Predicated region
      $region17: #{conformer_separator_forward.43} parent=11 // pred_check
        %p187 = pneg %p80
      $region18: #{conformer_separator_forward.43} parent=11 // pred_check_branch
        %189 = sbr.rel (%p187) target = $region20
      $region19: #{conformer_separator_forward.43} parent=11 // pred_region
        _
      $region20: #{conformer_separator_forward.43} parent=11 // pred_fallthru
        _
      // Predicated region
      $region21: #{conformer_separator_forward.43} parent=11 // pred_check
        %p190 = pneg %p101
      $region22: #{conformer_separator_forward.43} parent=11 // pred_check_branch
        %192 = sbr.rel (%p190) target = $region24
      $region23: #{conformer_separator_forward.43} parent=11 // pred_region
        _
      $region24: #{conformer_separator_forward.43} parent=11 // pred_fallthru
        _
      // Predicated region
      $region25: #{conformer_separator_forward.43} parent=11 // pred_check
        %p193 = pneg %p122
      $region26: #{conformer_separator_forward.43} parent=11 // pred_check_branch
        %195 = sbr.rel (%p193) target = $region28
      $region27: #{conformer_separator_forward.43} parent=11 // pred_region
        _
      $region28: #{conformer_separator_forward.43} parent=11 // pred_fallthru
        _
      // Predicated region
      $region29: #{conformer_separator_forward.43} parent=11 // pred_check
        %p196 = pneg %p143
      $region30: #{conformer_separator_forward.43} parent=11 // pred_check_branch
        %198 = sbr.rel (%p196) target = $region32
      $region31: #{conformer_separator_forward.43} parent=11 // pred_region
        _
      $region32: #{conformer_separator_forward.43} parent=11 // pred_fallthru
        _
    $region12: #{conformer_separator_forward.43} parent=5 // pred_fallthru
      _
    %p199 = scmp.lt.s32.totalorder %s12, 2
    // Predicated region
    $region33: #{conformer_separator_forward.43} parent=5 // pred_check
      %p200 = pneg %p199
    $region34: #{conformer_separator_forward.43} parent=5 // pred_check_branch
      %202 = sbr.rel (%p200) target = $region36
    $region35: #{conformer_separator_forward.43} parent=5 // pred_region
      // Predicated region
      $region37: #{conformer_separator_forward.43} parent=35 // pred_check
        %p203 = pneg %p32
      $region38: #{conformer_separator_forward.43} parent=35 // pred_check_branch
        %205 = sbr.rel (%p203) target = $region40
      $region39: #{conformer_separator_forward.43} parent=35 // pred_region
        %p206 = scmp.lt.s32.totalorder %s12, 1
        %s207 = scalar_select %p206, %s12, 1
        %s208 = smul.addr %s207, 4
        %s209 = scalar_lea.vmem %s0, %s208
      $region40: #{conformer_separator_forward.43} parent=35 // pred_fallthru
        _
    $region36: #{conformer_separator_forward.43} parent=5 // pred_fallthru
      _
    %p210 = scmp.le.s32.totalorder 1, %s12
    %p211 = scmp.lt.s32.totalorder %s12, 3
    %p212 = pnand %p210, %p211
    %p213 = pneg %p212
    // Predicated region
    $region41: #{conformer_separator_forward.43} parent=5 // pred_check
      _
    $region42: #{conformer_separator_forward.43} parent=5 // pred_check_branch
      %215 = sbr.rel (%p212) target = $region44
    $region43: #{conformer_separator_forward.43} parent=5 // pred_region
      %s216 = ssub.s32 %s12, 1
      %p217 = scmp.lt.s32.totalorder %s17, 1
      %s218 = scalar_select %p217, %s17, 1
      %s219 = smul.addr %s218, 4
      %s220 = scalar_lea.vmem %s0, %s219
      %p221 = pneg %p38
      %p222 = pneg %p35
      %p223 = pneg %p59
      %p224 = pneg %p56
      %p225 = pneg %p80
      %p226 = pneg %p77
      %p227 = pneg %p101
      %p228 = pneg %p98
      %p229 = pneg %p122
      %p230 = pneg %p119
      %p231 = pneg %p143
      %p232 = pneg %p140
      %p233 = pneg %p169
      %p234 = pneg %p166
      %p235 = scmp.lt.s32.totalorder %s17, 1
      %s236 = scalar_select %p235, %s17, 1
      %s237 = smul.addr %s236, 2
      %s238 = smul.addr %s237, 8
      %s239 = scalar_lea.vmem %s6, %s238
      %p240 = scmp.lt.s32.totalorder %s17, 1
      %s241 = scalar_select %p240, %s17, 1
      %s242 = smul.addr %s241, 4
      %s243 = scalar_lea.vmem %s0, %s242
      %p244 = scmp.lt.s32.totalorder %s17, 1
      %s245 = scalar_select %p244, %s17, 1
      %s246 = smul.addr %s245, 2
      %s247 = smul.addr %s246, 8
      %s248 = scalar_lea.vmem %s6, %s247
      %vm250 = vcmask 130048
      %251 = vst.msk [vmem:[#allocation2] sm:$0xff] %vm250, 0.0
      %vm252 = vcmask 123904
      %253 = vst.msk [vmem:[#allocation2 + $0x8] sm:$0x3] %vm252, 0.0
      %v254 = vld [vmem:[%s243] sm:$0xf]
      %v255 = vunpack.c.l.bf16 %v254
      %256 = vst.msk [vmem:[#allocation2 + $0x1] sm:$0xff] %vm250, %v255
      %v257 = vld [vmem:[#allocation2] sm:$0xff]
      %v258 = vld [vmem:[#allocation2 + $0x8] sm:$0x1]
      %v259 = vpack.c.bf16 %v258, %v257
      %v260 = vld [vmem:[#allocation2 + $0x1] sm:$0xff]
      %v261 = vld [vmem:[#allocation2 + $0x9] sm:$0x1]
      %v262 = vpack.c.bf16 %v261, %v260
      %v263 = vld [vmem:[%s1] sm:$0xf]
      %v264 = vld [vmem:[%s1 + $0x4] sm:$0xf]
      %v265 = vld [vmem:[%s2] sm:$0xf]
      %v266 = vld [vmem:[%s2 + $0x4] sm:$0xf]
      %v269 = vunpack.c.l.b16 %v265
      %v270 = vunpack.c.l.b16 %v266
      %v271 = vpack.c.b16 %v270, %v269
      %v274 = vsel %vm250, %v262, 0
      %276 = vmatprep.subr.bf16.mxu0 0
      %277 = vmatpush1.bf16.msra.mxu0 %v271
      %278 = vmatprep.subr.bf16.mxu0 0
      %279 = vmatpush1.bf16.msra.mxu0 0
      %280 = vmatprep.subr.bf16.mxu0 0
      %281 = vmatpush1.bf16.msra.mxu0 0
      %282 = vmatprep.subr.bf16.mxu0 0
      %283 = vmatpush1.bf16.msra.mxu0 0
      %284 = vmatprep.subr.bf16.mxu0 0
      %285 = vmatpush1.bf16.msra.mxu0 0
      %286 = vmatprep.subr.bf16.mxu0 0
      %287 = vmatpush1.bf16.msra.mxu0 0
      %288 = vmatprep.subr.bf16.mxu0 0
      %289 = vmatpush1.bf16.msra.mxu0 0
      %290 = vmatprep.subr.bf16.mxu0 0
      %291 = vmatpush1.bf16.msra.mxu0 0
      %292 = vmatprep.subr.bf16.mxu0 0
      %293 = vmatpush1.bf16.msra.mxu0 0
      %294 = vmatprep.subr.bf16.mxu0 0
      %295 = vmatpush1.bf16.msra.mxu0 0
      %296 = vmatprep.subr.bf16.mxu0 0
      %297 = vmatpush1.bf16.msra.mxu0 0
      %298 = vmatprep.subr.bf16.mxu0 0
      %299 = vmatpush1.bf16.msra.mxu0 0
      %300 = vmatprep.subr.bf16.mxu0 0
      %301 = vmatpush1.bf16.msra.mxu0 0
      %302 = vmatprep.subr.bf16.mxu0 0
      %303 = vmatpush1.bf16.msra.mxu0 0
      %304 = vmatprep.subr.bf16.mxu0 0
      %305 = vmatpush1.bf16.msra.mxu0 0
      %306 = vmatprep.subr.bf16.mxu0 0
      %307 = vmatpush1.bf16.msra.mxu0 0
      %308 = vmatprep.mubr.bf16.mxu0 0
      %309 = vmatmul.mubr.bf16.gmra.mrb[0].mxu0 %v274
      %v310 = vpop.f32.mrb[0].mxu0
      %v311 = vadd.f32 0.0, %v310
      %v312 = vpop.f32.mrb[0].mxu0
      %v313 = vpop.f32.mrb[0].mxu0
      %v314 = vadd.f32 0.0, %v313
      %v315 = vpop.f32.mrb[0].mxu0
      %316 = vdwg.mxu0
      %v319 = vunpack.c.l.b16 %v263
      %v320 = vunpack.c.l.b16 %v264
      %v321 = vpack.c.b16 %v320, %v319
      %v324 = vsel %vm250, %v259, 0
      %326 = vmatprep.subr.bf16.mxu0 0
      %327 = vmatpush1.bf16.msra.mxu0 %v321
      %328 = vmatprep.subr.bf16.mxu0 0
      %329 = vmatpush1.bf16.msra.mxu0 0
      %330 = vmatprep.subr.bf16.mxu0 0
      %331 = vmatpush1.bf16.msra.mxu0 0
      %332 = vmatprep.subr.bf16.mxu0 0
      %333 = vmatpush1.bf16.msra.mxu0 0
      %334 = vmatprep.subr.bf16.mxu0 0
      %335 = vmatpush1.bf16.msra.mxu0 0
      %336 = vmatprep.subr.bf16.mxu0 0
      %337 = vmatpush1.bf16.msra.mxu0 0
      %338 = vmatprep.subr.bf16.mxu0 0
      %339 = vmatpush1.bf16.msra.mxu0 0
      %340 = vmatprep.subr.bf16.mxu0 0
      %341 = vmatpush1.bf16.msra.mxu0 0
      %342 = vmatprep.subr.bf16.mxu0 0
      %343 = vmatpush1.bf16.msra.mxu0 0
      %344 = vmatprep.subr.bf16.mxu0 0
      %345 = vmatpush1.bf16.msra.mxu0 0
      %346 = vmatprep.subr.bf16.mxu0 0
      %347 = vmatpush1.bf16.msra.mxu0 0
      %348 = vmatprep.subr.bf16.mxu0 0
      %349 = vmatpush1.bf16.msra.mxu0 0
      %350 = vmatprep.subr.bf16.mxu0 0
      %351 = vmatpush1.bf16.msra.mxu0 0
      %352 = vmatprep.subr.bf16.mxu0 0
      %353 = vmatpush1.bf16.msra.mxu0 0
      %354 = vmatprep.subr.bf16.mxu0 0
      %355 = vmatpush1.bf16.msra.mxu0 0
      %356 = vmatprep.subr.bf16.mxu0 0
      %357 = vmatpush1.bf16.msra.mxu0 0
      %358 = vmatprep.mubr.bf16.mxu0 0
      %359 = vmatmul.mubr.bf16.gmra.mrb[0].mxu0 %v324
      %v360 = vpop.f32.mrb[0].mxu0
      %v361 = vadd.f32 %v311, %v360
      %v362 = vpop.f32.mrb[0].mxu0
      %v363 = vpop.f32.mrb[0].mxu0
      %v364 = vadd.f32 %v314, %v363
      %v365 = vpop.f32.mrb[0].mxu0
      %366 = vdwg.mxu0
      %v367 = vld [vmem:[%s3] sm:$0x1]
      %v369 = vlaneseq
      %v370 = vshrl.u32 %v369, 7
      %v371 = vsub.s32 0, %v370
      %v372 = vrot.slane %v367, %v371
      %v374 = vadd.f32 %v361, %v372
      %v375 = vadd.f32 %v364, %v372
      %vm376 = vcmask 392192
      %v377 = vsel %vm376, %v374, 0.0
      %378 = vadd.xlane.f32.xlu0 %v377
      %v379 = vpop.xlane.xlu0 %378
      %vm380 = vcmask 385024
      %v381 = vsel %vm380, %v375, 0.0
      %382 = vadd.xlane.f32.xlu0 %v381
      %v383 = vpop.xlane.xlu0 %382
      %v384 = vrcp.pop 48.0
      %v385 = vmul.f32 %v379, %v384
      %v386 = vmul.f32 %v383, %v384
      %v387 = vsub.f32 %v374, %v385
      %v388 = vsub.f32 %v375, %v386
      %v389 = vmul.f32 %v387, %v387
      %v390 = vmul.f32 %v388, %v388
      %v391 = vsel %vm376, %v389, 0.0
      %392 = vadd.xlane.f32.xlu0 %v391
      %v393 = vpop.xlane.xlu0 %392
      %v394 = vsel %vm380, %v390, 0.0
      %395 = vadd.xlane.f32.xlu0 %v394
      %v396 = vpop.xlane.xlu0 %395
      %v397 = vmul.f32 %v393, %v384
      %v398 = vmul.f32 %v396, %v384
      %v399 = vadd.f32 %v397, 1e-05
      %v400 = vadd.f32 %v398, 1e-05
      %v401 = vrsqrt.pop %v399
      %v402 = vrsqrt.pop %v400
      %v403 = vmul.f32 %v387, %v401
      %v404 = vmul.f32 %v388, %v402
      %v405 = vld [vmem:[%s4] sm:$0x1]
      %v407 = vlaneseq
      %v408 = vshrl.u32 %v407, 7
      %v409 = vsub.s32 0, %v408
      %v410 = vrot.slane %v405, %v409
      %v412 = vmul.f32 %v403, %v410
      %v413 = vmul.f32 %v404, %v410
      %v414 = vld [vmem:[%s5] sm:$0x1]
      %v416 = vlaneseq
      %v417 = vshrl.u32 %v416, 7
      %v418 = vsub.s32 0, %v417
      %v419 = vrot.slane %v414, %v418
      %v421 = vadd.f32 %v412, %v419
      %v422 = vadd.f32 %v413, %v419
      %v423 = vmax.f32 %v421, 0.0
      %v424 = vmax.f32 %v422, 0.0
      %425 = vst.msk [vmem:[%s248] sm:$0xff] %vm376, %v423
      %426 = vst.msk [vmem:[%s248 + $0x8] sm:$0x1] %vm380, %v424
      %p427 = scmp.lt.s32.totalorder %s17, 1
      %s428 = scalar_select %p427, %s17, 1
      %s429 = smul.addr %s428, 2
      %s430 = smul.addr %s429, 8
      %s431 = scalar_lea.vmem %s6, %s430
      // Predicated region
      $region45: #{conformer_separator_forward.43} parent=43 // pred_check
        %p432 = pneg %p166
      $region46: #{conformer_separator_forward.43} parent=43 // pred_check_branch
        %434 = sbr.rel (%p432) target = $region48
      $region47: #{conformer_separator_forward.43} parent=43 // pred_region
        _
      $region48: #{conformer_separator_forward.43} parent=43 // pred_fallthru
        _
    $region44: #{conformer_separator_forward.43} parent=5 // pred_fallthru
      _
    %p435 = scmp.le.s32.totalorder 2, %s12
    // Predicated region
    $region49: #{conformer_separator_forward.43} parent=5 // pred_check
      %p436 = pneg %p435
    $region50: #{conformer_separator_forward.43} parent=5 // pred_check_branch
      %438 = sbr.rel (%p436) target = $region52
    $region51: #{conformer_separator_forward.43} parent=5 // pred_region
      %s439 = ssub.s32 %s12, 2
      // Predicated region
      $region53: #{conformer_separator_forward.43} parent=51 // pred_check
        %p440 = pneg %p172
      $region54: #{conformer_separator_forward.43} parent=51 // pred_check_branch
        %442 = sbr.rel (%p440) target = $region56
      $region55: #{conformer_separator_forward.43} parent=51 // pred_region
        %p443 = scmp.lt.s32.totalorder %s18, 1
        %s444 = scalar_select %p443, %s18, 1
        %s445 = smul.addr %s444, 2
        %s446 = smul.addr %s445, 8
        %s447 = scalar_lea.vmem %s6, %s446
      $region56: #{conformer_separator_forward.43} parent=51 // pred_fallthru
        _
    $region52: #{conformer_separator_forward.43} parent=5 // pred_fallthru
      _
  $region6: #{conformer_separator_forward.43} parent=0 // loop_footer
    %s16 = sadd.s32 1, %s12
  $region7: #{conformer_separator_forward.43} parent=0 // loop_footer_branch
    %11 = sbr.rel target = $region3
  $region8: #{conformer_separator_forward.43} parent=0 // loop_exit
    _

// kernel: conformer_separator_forward.32
$region0: #{conformer_separator_forward.32}
  #allocation0 [shape = 'u32[]', space=smem, size = 0x4, offset = 0x4, fixed_abs, tag = 'smem constant byte address 0x4 - core index']
  #allocation1 [shape = 'u32[144,128]{1,0:T(1,128)}', space=vmem, size = 0x12000, scoped, tag = 'internal scratch']
  %s0 = inlined_call_operand.vmem [shape: bf16[16,32], index: 0, kind: input, shape index: {}]
  %s1 = inlined_call_operand.vmem [shape: bf16[32,16], index: 1, kind: input, shape index: {}]
  %s2 = inlined_call_operand.vmem [shape: f32[1,16], index: 2, kind: input, shape index: {}]
  %s3 = inlined_call_operand.vmem [shape: bf16[16,16], index: 3, kind: input, shape index: {}]
  %s4 = inlined_call_operand.vmem [shape: f32[1,16], index: 4, kind: input, shape index: {}]
  %s5 = inlined_call_operand.vmem [shape: f32[1,16], index: 5, kind: input, shape index: {}]
  %s6 = inlined_call_operand.vmem [shape: bf16[16,16], index: 6, kind: output, shape index: {}]
  %s7 = sld [smem:[#allocation0]]
  $region34: #{conformer_separator_forward.32} parent=0
    _
  %s9 = ssub.s32 1, %s7
  %s10 = scalar_select 0, %s9, %s7
  // Predicated region
  $region2: #{conformer_separator_forward.32} parent=0 // pred_check
    _
  $region3: #{conformer_separator_forward.32} parent=0 // pred_check_branch
    %12 = sbr.rel (0) target = $region5
  $region4: #{conformer_separator_forward.32} parent=0 // pred_region
    _
  $region5: #{conformer_separator_forward.32} parent=0 // pred_fallthru
    _
  // Predicated region
  $region6: #{conformer_separator_forward.32} parent=0 // pred_check
    _
  $region7: #{conformer_separator_forward.32} parent=0 // pred_check_branch
    %14 = sbr.rel (0) target = $region9
  $region8: #{conformer_separator_forward.32} parent=0 // pred_region
    _
  $region9: #{conformer_separator_forward.32} parent=0 // pred_fallthru
    _
  // Predicated region
  $region10: #{conformer_separator_forward.32} parent=0 // pred_check
    _
  $region11: #{conformer_separator_forward.32} parent=0 // pred_check_branch
    %16 = sbr.rel (0) target = $region13
  $region12: #{conformer_separator_forward.32} parent=0 // pred_region
    _
  $region13: #{conformer_separator_forward.32} parent=0 // pred_fallthru
    _
  // Predicated region
  $region14: #{conformer_separator_forward.32} parent=0 // pred_check
    _
  $region15: #{conformer_separator_forward.32} parent=0 // pred_check_branch
    %18 = sbr.rel (0) target = $region17
  $region16: #{conformer_separator_forward.32} parent=0 // pred_region
    _
  $region17: #{conformer_separator_forward.32} parent=0 // pred_fallthru
    _
  // Predicated region
  $region18: #{conformer_separator_forward.32} parent=0 // pred_check
    _
  $region19: #{conformer_separator_forward.32} parent=0 // pred_check_branch
    %20 = sbr.rel (0) target = $region21
  $region20: #{conformer_separator_forward.32} parent=0 // pred_region
    _
  $region21: #{conformer_separator_forward.32} parent=0 // pred_fallthru
    _
  // Predicated region
  $region22: #{conformer_separator_forward.32} parent=0 // pred_check
    _
  $region23: #{conformer_separator_forward.32} parent=0 // pred_check_branch
    %22 = sbr.rel (0) target = $region25
  $region24: #{conformer_separator_forward.32} parent=0 // pred_region
    _
  $region25: #{conformer_separator_forward.32} parent=0 // pred_fallthru
    _
  %v24 = vld [vmem:[%s0] sm:$0xf]
  %v25 = vld [vmem:[%s0 + $0x4] sm:$0xf]
  %v26 = vld [vmem:[%s1] sm:$0xf]
  %v27 = vld [vmem:[%s1 + $0x4] sm:$0xf]
  %v28 = vld [vmem:[%s1 + $0x8] sm:$0xf]
  %v29 = vld [vmem:[%s1 + $0xc] sm:$0xf]
  %v30 = vld [vmem:[%s2] sm:$0x1]
  %v32 = vlaneseq
  %v33 = vshrl.u32 %v32, 7
  %v34 = vsub.s32 0, %v33
  %v35 = vrot.slane %v30, %v34
  %v39 = vunpack.c.l.b16 %v24
  %v40 = vunpack.c.l.b16 %v25
  %v41 = vpack.c.b16 %v40, %v39
  %v46 = vunpack.c.l.b16 %v26
  %v47 = vunpack.c.l.b16 %v27
  %v48 = vunpack.c.l.b16 %v28
  %v49 = vunpack.c.l.b16 %v29
  %v50 = vpack.c.b16 %v47, %v46
  %v51 = vpack.c.b16 %v49, %v48
  %vm54 = vcmask 261120
  %v56 = vsel %vm54, %v41, 0
  %58 = vmatprep.subr.bf16.mxu0 0
  %59 = vmatpush1.bf16.msra.mxu0 %v50
  %60 = vmatprep.subr.bf16.mxu0 0
  %61 = vmatpush1.bf16.msra.mxu0 %v51
  %62 = vmatprep.subr.bf16.mxu0 0
  %63 = vmatpush1.bf16.msra.mxu0 0
  %64 = vmatprep.subr.bf16.mxu0 0
  %65 = vmatpush1.bf16.msra.mxu0 0
  %66 = vmatprep.subr.bf16.mxu0 0
  %67 = vmatpush1.bf16.msra.mxu0 0
  %68 = vmatprep.subr.bf16.mxu0 0
  %69 = vmatpush1.bf16.msra.mxu0 0
  %70 = vmatprep.subr.bf16.mxu0 0
  %71 = vmatpush1.bf16.msra.mxu0 0
  %72 = vmatprep.subr.bf16.mxu0 0
  %73 = vmatpush1.bf16.msra.mxu0 0
  %74 = vmatprep.subr.bf16.mxu0 0
  %75 = vmatpush1.bf16.msra.mxu0 0
  %76 = vmatprep.subr.bf16.mxu0 0
  %77 = vmatpush1.bf16.msra.mxu0 0
  %78 = vmatprep.subr.bf16.mxu0 0
  %79 = vmatpush1.bf16.msra.mxu0 0
  %80 = vmatprep.subr.bf16.mxu0 0
  %81 = vmatpush1.bf16.msra.mxu0 0
  %82 = vmatprep.subr.bf16.mxu0 0
  %83 = vmatpush1.bf16.msra.mxu0 0
  %84 = vmatprep.subr.bf16.mxu0 0
  %85 = vmatpush1.bf16.msra.mxu0 0
  %86 = vmatprep.subr.bf16.mxu0 0
  %87 = vmatpush1.bf16.msra.mxu0 0
  %88 = vmatprep.subr.bf16.mxu0 0
  %89 = vmatpush1.bf16.msra.mxu0 0
  %90 = vmatprep.mubr.bf16.mxu0 0
  %91 = vmatmul.mubr.bf16.gmra.mrb[0].mxu0 %v56
  %v92 = vpop.f32.mrb[0].mxu0
  %v93 = vadd.f32 %v35, %v92
  %v94 = vpop.f32.mrb[0].mxu0
  %v95 = vpop.f32.mrb[0].mxu0
  %v96 = vadd.f32 %v35, %v95
  %v97 = vpop.f32.mrb[0].mxu0
  %98 = vdwg.mxu0
  %v99 = vmul.f32 %v93, 0.5
  %v100 = vmul.f32 %v96, 0.5
  %v101 = vld [vmem:[%s3] sm:$0xf]
  %v102 = vld [vmem:[%s3 + $0x4] sm:$0xf]
  %v103 = vunpack.c.l.bf16 %v101
  %v104 = vunpack.c.l.bf16 %v102
  %v105 = vadd.f32 %v99, %v103
  %v106 = vadd.f32 %v100, %v104
  %vm107 = vcmask 130048
  %v108 = vsel %vm107, %v105, 0.0
  %109 = vadd.xlane.f32.xlu0 %v108
  %v110 = vpop.xlane.xlu0 %109
  %v111 = vsel %vm107, %v106, 0.0
  %112 = vadd.xlane.f32.xlu0 %v111
  %v113 = vpop.xlane.xlu0 %112
  %v114 = vrcp.pop 16.0
  %v115 = vmul.f32 %v110, %v114
  %v116 = vmul.f32 %v113, %v114
  %v117 = vsub.f32 %v105, %v115
  %v118 = vsub.f32 %v106, %v116
  %v119 = vmul.f32 %v117, %v117
  %v120 = vmul.f32 %v118, %v118
  %v121 = vsel %vm107, %v119, 0.0
  %122 = vadd.xlane.f32.xlu0 %v121
  %v123 = vpop.xlane.xlu0 %122
  %v124 = vsel %vm107, %v120, 0.0
  %125 = vadd.xlane.f32.xlu0 %v124
  %v126 = vpop.xlane.xlu0 %125
  %v127 = vmul.f32 %v123, %v114
  %v128 = vmul.f32 %v126, %v114
  %v129 = vadd.f32 %v127, 1e-05
  %v130 = vadd.f32 %v128, 1e-05
  %v131 = vrsqrt.pop %v129
  %v132 = vrsqrt.pop %v130
  %v133 = vmul.f32 %v117, %v131
  %v134 = vmul.f32 %v118, %v132
  %v135 = vld [vmem:[%s4] sm:$0x1]
  %v137 = vlaneseq
  %v138 = vshrl.u32 %v137, 7
  %v139 = vsub.s32 0, %v138
  %v140 = vrot.slane %v135, %v139
  %v142 = vmul.f32 %v133, %v140
  %v143 = vmul.f32 %v134, %v140
  %v144 = vld [vmem:[%s5] sm:$0x1]
  %v146 = vlaneseq
  %v147 = vshrl.u32 %v146, 7
  %v148 = vsub.s32 0, %v147
  %v149 = vrot.slane %v144, %v148
  %v151 = vadd.f32 %v142, %v149
  %v152 = vadd.f32 %v143, %v149
  %v153 = vpack.c.bf16 %v152, %v151
  %v155 = vunpack.c.l.b16 %v153
  %v156 = vunpack.c.h.b16 %v153
  %v157 = vpack.c.b16 %v155, %v155
  %v158 = vpack.c.b16 %v156, %v156
  %vm161 = vcmask 125952
  %162 = vst.msk [vmem:[%s6] sm:$0xf] %vm161, %v157
  %163 = vst.msk [vmem:[%s6 + $0x4] sm:$0xf] %vm161, %v158
  // Predicated region
  $region26: #{conformer_separator_forward.32} parent=0 // pred_check
    _
  $region27: #{conformer_separator_forward.32} parent=0 // pred_check_branch
    %165 = sbr.rel (0) target = $region29
  $region28: #{conformer_separator_forward.32} parent=0 // pred_region
    _
  $region29: #{conformer_separator_forward.32} parent=0 // pred_fallthru
    _
  // Predicated region
  $region30: #{conformer_separator_forward.32} parent=0 // pred_check
    _
  $region31: #{conformer_separator_forward.32} parent=0 // pred_check_branch
    %167 = sbr.rel (0) target = $region33
  $region32: #{conformer_separator_forward.32} parent=0 // pred_region
    _
  $region33: #{conformer_separator_forward.32} parent=0 // pred_fallthru
    _

</llo_original>
